<compile_context>
chip_gen: v7x
topology: tpu7x:2x2x1
jax: 0.10.0
libtpu: 0.0.40
codegen_flags: <defaults>
</compile_context>

<pallas_src>
import jax
import jax.numpy as jnp
from jax.experimental import pallas as pl
from jax.experimental.pallas import tpu as pltpu

LANE = 128
_EPS = 1e-5


def _round_up(x, m):
    return (x + m - 1) // m * m


def _vmem_limit_bytes():
    """Generation-aware scoped-VMEM limit (v7x 64 MiB phys -> 44 MiB;
    v5e/v6e 128 MiB phys -> 64 MiB)."""
    phys = 128 << 20
    try:
        phys = int(getattr(pltpu.get_tpu_info(), "vmem_capacity_bytes", phys))
    except Exception:
        pass
    return (44 << 20) if phys <= (64 << 20) else (64 << 20)


def _pick_rows(H, W, per_row_bytes, fixed_bytes, budget, target_m, max_rows):
    """Largest even divisor of H whose working set fits the budget; stop once
    the matmul M dimension (rows * W) reaches `target_m`."""
    limit = H if max_rows is None else max(2, int(max_rows))
    avail = max(budget - fixed_bytes, 2 * per_row_bytes)
    best = None
    d = 2
    while d <= H:
        if H % d == 0:
            if best is not None and (d > limit or d * per_row_bytes > avail):
                break
            best = d
            if d * W >= target_m or d >= limit:
                break
        d += 2
    return best if best is not None else 2


# ------------------------------- kernels -------------------------------------

def _write_stats(stats_ref, acc):
    """Per-tile BN partial stats: rows 0/1 = sum / sum-of-squares, padded to
    8 sublane rows so the store is unmasked."""
    co = acc.shape[-1]
    psum = jnp.sum(acc, axis=0, keepdims=True)
    psq = jnp.sum(acc * acc, axis=0, keepdims=True)
    pad = jnp.zeros((6, co), jnp.float32)
    stats_ref[...] = jnp.concatenate([psum, psq, pad], axis=0).reshape(
        1, 1, 8, co)


def _matmul_stats_kernel(p_ref, w_ref, y_ref, stats_ref):
    """Conv as a plain matmul over wrapper-built im2col patches (tiny cin)."""
    th, W, K = p_ref.shape[1], p_ref.shape[2], p_ref.shape[3]
    Co = y_ref.shape[3]
    acc = jnp.dot(p_ref[...].reshape(th * W, K), w_ref[...],
                  preferred_element_type=jnp.float32)
    y_ref[...] = acc.reshape(1, th, W, Co).astype(y_ref.dtype)
    _write_stats(stats_ref, acc)


def _make_conv3x3_kernel(apply_act):
    """3x3 'same' conv over one (image, row-tile) of an (N, H, W, C) array.

    Row halo comes from two extra 2-row views of the same input; the 1-col
    spatial zero padding is built in-register.  If `apply_act`, the previous
    layer's folded BN (scale/shift) + ReLU is applied to the loaded rows
    before im2col (no separate elementwise pass over HBM).
    """
    def kernel(*refs):
        if apply_act:
            (body_ref, top_ref, bot_ref, w_ref, scale_ref, shift_ref,
             y_ref, stats_ref) = refs
        else:
            body_ref, top_ref, bot_ref, w_ref, y_ref, stats_ref = refs

        th = body_ref.shape[1]
        W = body_ref.shape[2]
        C = body_ref.shape[3]
        Co = y_ref.shape[3]
        h = pl.program_id(1)
        hb = pl.num_programs(1)

        if apply_act:
            scale = scale_ref[...].reshape(1, 1, C)
            shift = shift_ref[...].reshape(1, 1, C)

        def prep(rows):
            # rows: (r, W, C) bf16 -> activated + 1-col zero-padded (r, W+2, C)
            if apply_act:
                rows = jnp.maximum(
                    rows.astype(jnp.float32) * scale + shift, 0.0
                ).astype(jnp.bfloat16)
            z = jnp.zeros((rows.shape[0], 1, C), jnp.bfloat16)
            return jnp.concatenate([z, rows, z], axis=1)

        body = prep(body_ref[0])        # rows h*th .. h*th+th-1
        top = prep(top_ref[0, 1:2])     # row  h*th-1     (valid iff h > 0)
        bot = prep(bot_ref[0, 0:1])     # row  (h+1)*th   (valid iff h < hb-1)
        top = jnp.where(h > 0, top, jnp.zeros_like(top))
        bot = jnp.where(h < hb - 1, bot, jnp.zeros_like(bot))

        # im2col grouped by ky: 3 matmuls with K = 3*C accumulating in f32.
        acc = None
        for ky in range(3):
            if ky == 0:
                rows = jnp.concatenate([top, body[:th - 1]], axis=0)
            elif ky == 1:
                rows = body
            else:
                rows = jnp.concatenate([body[1:], bot], axis=0)
            patches = jnp.concatenate(
                [rows[:, kx:kx + W, :].reshape(th * W, C) for kx in range(3)],
                axis=-1)                                        # (th*W, 3*C)
            d = jnp.dot(patches, w_ref[ky],
                        preferred_element_type=jnp.float32)
            acc = d if acc is None else acc + d

        y_ref[...] = acc.reshape(1, th, W, Co).astype(y_ref.dtype)
        _write_stats(stats_ref, acc)

    return kernel


def _bn_relu_kernel(y_ref, scale_ref, shift_ref, o_ref):
    """Folded BatchNorm (per-channel affine) + ReLU, bf16 in / bf16 out."""
    scale = scale_ref[...].reshape(1, 1, 1, -1)
    shift = shift_ref[...].reshape(1, 1, 1, -1)
    y = y_ref[...].astype(jnp.float32)
    o_ref[...] = jnp.maximum(y * scale + shift, 0.0).astype(o_ref.dtype)


# ------------------------------ pallas wrappers -------------------------------

def _conv_via_patches(patches, w_mat, *, budget, vmem_limit, max_rows):
    N, H, W, K = patches.shape
    Co = w_mat.shape[1]
    per_row = W * (K * 4 + Co * 12)
    fixed = 2 * K * Co * 2 + 2 * 8 * Co * 4
    th = _pick_rows(H, W, per_row, fixed, budget, 512, max_rows)
    hb = H // th
    return pl.pallas_call(
        _matmul_stats_kernel,
        out_shape=(jax.ShapeDtypeStruct((N, H, W, Co), jnp.bfloat16),
                   jax.ShapeDtypeStruct((N, hb, 8, Co), jnp.float32)),
        grid=(N, hb),
        in_specs=[pl.BlockSpec((1, th, W, K), lambda n, h: (n, h, 0, 0)),
                  pl.BlockSpec((K, Co), lambda n, h: (0, 0))],
        out_specs=(pl.BlockSpec((1, th, W, Co), lambda n, h: (n, h, 0, 0)),
                   pl.BlockSpec((1, 1, 8, Co), lambda n, h: (n, h, 0, 0))),
        compiler_params=pltpu.CompilerParams(
            dimension_semantics=("parallel", "parallel"),
            vmem_limit_bytes=vmem_limit),
    )(patches, w_mat)


def _conv3x3(x, w_ky, scale=None, shift=None, *, budget, vmem_limit, max_rows):
    """3x3 'same' conv over NHWC `x` (+ optional fused pre-BN/ReLU)."""
    N, H, W, C = x.shape
    Co = w_ky.shape[2]
    apply_act = scale is not None

    per_row = (2 * W * C * 2 + (W + 2) * C * 2
               + (W * C * 4 if apply_act else 0)
               + 2 * 3 * W * C * 2 + W * Co * 8 + 2 * W * Co * 2)
    fixed = 2 * 9 * C * Co * 2 + 8 * W * C * 2 + 2 * 8 * Co * 4 + 8 * C * 4
    th = _pick_rows(H, W, per_row, fixed, budget, 512, max_rows)
    hb = H // th
    assert th % 2 == 0 and H % th == 0
    half = th // 2

    in_specs = [
        pl.BlockSpec((1, th, W, C), lambda n, h: (n, h, 0, 0)),
        # 2-row views supplying the +-1 row halo; indices are clamped and the
        # out-of-image rows are zeroed inside the kernel.
        pl.BlockSpec((1, 2, W, C),
                     lambda n, h: (n, jnp.maximum(h * half - 1, 0), 0, 0)),
        pl.BlockSpec((1, 2, W, C),
                     lambda n, h: (n, jnp.minimum((h + 1) * half, H // 2 - 1),
                                   0, 0)),
        pl.BlockSpec((3, 3 * C, Co), lambda n, h: (0, 0, 0)),
    ]
    args = [x, x, x, w_ky]
    if apply_act:
        in_specs += [pl.BlockSpec((1, C), lambda n, h: (0, 0)),
                     pl.BlockSpec((1, C), lambda n, h: (0, 0))]
        args += [scale.reshape(1, C).astype(jnp.float32),
                 shift.reshape(1, C).astype(jnp.float32)]

    return pl.pallas_call(
        _make_conv3x3_kernel(apply_act),
        out_shape=(jax.ShapeDtypeStruct((N, H, W, Co), jnp.bfloat16),
                   jax.ShapeDtypeStruct((N, hb, 8, Co), jnp.float32)),
        grid=(N, hb),
        in_specs=in_specs,
        out_specs=(pl.BlockSpec((1, th, W, Co), lambda n, h: (n, h, 0, 0)),
                   pl.BlockSpec((1, 1, 8, Co), lambda n, h: (n, h, 0, 0))),
        compiler_params=pltpu.CompilerParams(
            dimension_semantics=("parallel", "parallel"),
            vmem_limit_bytes=vmem_limit),
    )(*args)


def _bn_relu(y, scale, shift, *, budget, vmem_limit, max_rows):
    N, H, W, C = y.shape
    th = _pick_rows(H, W, W * C * 12, 0, budget, 2048, max_rows)
    hb = H // th
    return pl.pallas_call(
        _bn_relu_kernel,
        out_shape=jax.ShapeDtypeStruct((N, H, W, C), jnp.bfloat16),
        grid=(N, hb),
        in_specs=[pl.BlockSpec((1, th, W, C), lambda n, h: (n, h, 0, 0)),
                  pl.BlockSpec((1, C), lambda n, h: (0, 0)),
                  pl.BlockSpec((1, C), lambda n, h: (0, 0))],
        out_specs=pl.BlockSpec((1, th, W, C), lambda n, h: (n, h, 0, 0)),
        compiler_params=pltpu.CompilerParams(
            dimension_semantics=("parallel", "parallel"),
            vmem_limit_bytes=vmem_limit),
    )(y, scale.reshape(1, C).astype(jnp.float32),
      shift.reshape(1, C).astype(jnp.float32))


# ------------------------------ param prep / BN -------------------------------

def _bn_affine(stats, gamma, beta, count):
    """Fold training-mode BatchNorm into per-channel scale/shift from the
    per-tile partial sums (tiny JAX reduction)."""
    tot = jnp.sum(stats[:, :, 0, :], axis=(0, 1))
    totsq = jnp.sum(stats[:, :, 1, :], axis=(0, 1))
    mean = tot / count
    var = jnp.maximum(totsq / count - mean * mean, 0.0)   # biased variance
    scale = gamma * jax.lax.rsqrt(var + _EPS)
    shift = beta - mean * scale
    return scale, shift


def _im2col_weight_flat(w_oihw, coutp):
    """OIHW -> (9*Cin, Coutp), K ordered (ky, kx, cin)."""
    cout, cin = w_oihw.shape[0], w_oihw.shape[1]
    wk = jnp.transpose(w_oihw, (2, 3, 1, 0))                # (ky, kx, cin, cout)
    wk = jnp.pad(wk, ((0, 0), (0, 0), (0, 0), (0, coutp - cout)))
    return wk.reshape(9 * cin, coutp).astype(jnp.bfloat16)


def _im2col_weight_ky(w_oihw, cinp, coutp):
    """OIHW -> (3, 3*Cinp, Coutp): one K = 3*Cinp matrix per ky tap."""
    cout, cin = w_oihw.shape[0], w_oihw.shape[1]
    wk = jnp.transpose(w_oihw, (2, 3, 1, 0))
    wk = jnp.pad(wk, ((0, 0), (0, 0), (0, cinp - cin), (0, coutp - cout)))
    return wk.reshape(3, 3 * cinp, coutp).astype(jnp.bfloat16)


# --------------------------------- forward -----------------------------------

def double_conv(x_nchw, params, max_tile_rows=None):
    """Forward pass of Double_conv.  Input/output: NCHW (PyTorch layout)."""
    N, cin, H, W = x_nchw.shape
    cout = params["w1"].shape[0]
    coutp = _round_up(cout, LANE)
    assert H % 2 == 0, "H must be even"

    vmem_limit = _vmem_limit_bytes()
    budget = int(vmem_limit * 0.6)

    x = jnp.transpose(x_nchw, (0, 2, 3, 1)).astype(jnp.float32)      # NHWC

    def pad_c(v):
        return jnp.pad(v.astype(jnp.float32), (0, coutp - cout))

    g1p, be1p = pad_c(params["g1"]), pad_c(params["be1"])
    g2p, be2p = pad_c(params["g2"]), pad_c(params["be2"])
    # Conv biases params["b1"]/["b2"] are skipped: training-mode BatchNorm
    # subtracts the batch mean, which cancels a per-channel constant exactly.

    m = N * H * W

    # --------------------------- conv1 ---------------------------
    if 9 * cin < LANE:
        # Tiny cin (UNet stem): im2col in the wrapper, so the kernel never
        # DMAs a 128-channel-padded input.
        xsp = jnp.pad(x, ((0, 0), (1, 1), (1, 1), (0, 0)))
        patches1 = jnp.concatenate(
            [xsp[:, ky:ky + H, kx:kx + W, :]
             for ky in range(3) for kx in range(3)],
            axis=-1).astype(jnp.bfloat16)                    # (N, H, W, 9*cin)
        w1 = _im2col_weight_flat(params["w1"], coutp)
        y1_raw, stats1 = _conv_via_patches(
            patches1, w1, budget=budget, vmem_limit=vmem_limit,
            max_rows=max_tile_rows)
    else:
        cinp = _round_up(cin, LANE)
        xcp = jnp.pad(x, ((0, 0), (0, 0), (0, 0), (0, cinp - cin))
                      ).astype(jnp.bfloat16)
        w1 = _im2col_weight_ky(params["w1"], cinp, coutp)
        y1_raw, stats1 = _conv3x3(
            xcp, w1, budget=budget, vmem_limit=vmem_limit,
            max_rows=max_tile_rows)

    scale1, shift1 = _bn_affine(stats1, g1p, be1p, m)

    # -------------- conv2 with BN1 + ReLU1 fused into its loads --------------
    w2 = _im2col_weight_ky(params["w2"], coutp, coutp)
    y2_raw, stats2 = _conv3x3(
        y1_raw, w2, scale1, shift1, budget=budget, vmem_limit=vmem_limit,
        max_rows=max_tile_rows)
    scale2, shift2 = _bn_affine(stats2, g2p, be2p, m)

    # --------------------------- BN2 + ReLU2 ---------------------------
    y_act = _bn_relu(y2_raw, scale2, shift2, budget=budget,
                     vmem_limit=vmem_limit, max_rows=max_tile_rows)

    out = y_act[..., :cout].astype(jnp.float32)
    return jnp.transpose(out, (0, 3, 1, 2))                  # -> NCHW


# ---------------- pure-JAX reference (for correctness check) ----------------

def _ref_double_conv(x, p):
    def conv(x, w, b):
        y = jax.lax.conv_general_dilated(
            x, w, window_strides=(1, 1), padding=((1, 1), (1, 1)),
            dimension_numbers=("NCHW", "OIHW", "NCHW"))
        return y + b.reshape(1, -1, 1, 1)

    def bn(x, g, be):
        mean = jnp.mean(x, axis=(0, 2, 3), keepdims=True)
        var = jnp.mean(jnp.square(x - mean), axis=(0, 2, 3), keepdims=True)
        xn = (x - mean) * jax.lax.rsqrt(var + _EPS)
        return xn * g.reshape(1, -1, 1, 1) + be.reshape(1, -1, 1, 1)

    y = jnp.maximum(bn(conv(x, p["w1"], p["b1"]), p["g1"], p["be1"]), 0.0)
    y = jnp.maximum(bn(conv(y, p["w2"], p["b2"]), p["g2"], p["be2"]), 0.0)
    return y


if __name__ == "__main__":
    def make_params(key, in_ch, out_ch):
        ks = jax.random.split(key, 8)
        return {
            "w1": 0.1 * jax.random.normal(ks[0], (out_ch, in_ch, 3, 3)),
            "b1": 0.1 * jax.random.normal(ks[1], (out_ch,)),
            "g1": 1.0 + 0.1 * jax.random.normal(ks[2], (out_ch,)),
            "be1": 0.1 * jax.random.normal(ks[3], (out_ch,)),
            "w2": 0.1 * jax.random.normal(ks[4], (out_ch, out_ch, 3, 3)),
            "b2": 0.1 * jax.random.normal(ks[5], (out_ch,)),
            "g2": 1.0 + 0.1 * jax.random.normal(ks[6], (out_ch,)),
            "be2": 0.1 * jax.random.normal(ks[7], (out_ch,)),
        }

    key = jax.random.PRNGKey(0)
    k1, k2, k3, k4 = jax.random.split(key, 4)

    def check(out, ref, name):
        err = float(jnp.max(jnp.abs(out - ref)))
        if not jnp.allclose(out, ref, rtol=5e-2, atol=5e-2):
            raise AssertionError(f"{name} mismatch: max abs err {err}")

    # Config A: tiny cin (wrapper-im2col path) + forced multi-row-tile grid
    # (exercises the halo / clamped-index logic of the fused conv2 kernel).
    xA = jax.random.normal(k1, (2, 4, 16, 16), jnp.float32)
    pA = make_params(k2, 4, 8)
    fwdA = jax.jit(lambda x, p: double_conv(x, p, max_tile_rows=4))
    outA = jax.block_until_ready(fwdA(xA, pA))
    assert outA.shape == (2, 8, 16, 16), outA.shape
    check(outA, _ref_double_conv(xA, pA), "config A")

    # Config B: larger cin (in-kernel im2col path), automatic tile heuristic.
    xB = jax.random.normal(k3, (1, 16, 16, 16), jnp.float32)
    pB = make_params(k4, 16, 8)
    outB = jax.block_until_ready(jax.jit(double_conv)(xB, pB))
    assert outB.shape == (1, 8, 16, 16), outB.shape
    check(outB, _ref_double_conv(xB, pB), "config B")

    print("KERNEL_OK")
</pallas_src>

<mosaic_0001>
module attributes {stable_mosaic.version = 11 : i64} {
  func.func @_matmul_stats_kernel(%arg0: i32, %arg1: i32, %arg2: memref<1x4x16x36xbf16, #tpu.memory_space<vmem>>, %arg3: memref<36x128xbf16, #tpu.memory_space<vmem>>, %arg4: memref<1x4x16x128xbf16, #tpu.memory_space<vmem>>, %arg5: memref<1x1x8x128xf32, #tpu.memory_space<vmem>>) attributes {dimension_semantics = [#tpu.dimension_semantics<parallel>, #tpu.dimension_semantics<parallel>], iteration_bounds = array<i64: 2, 4>, scalar_prefetch = 0 : i64, scratch_operands = 0 : i64, tpu.core_type = #tpu.core_type<tc>, window_params = [{transform_indices = @transform_0, window_bounds = array<i64: 1, 4, 16, 36>}, {pipeline_mode = #tpu.pipeline_mode<synchronous>, transform_indices = @transform_1, window_bounds = array<i64: 36, 128>}, {transform_indices = @transform_2, window_bounds = array<i64: 1, 4, 16, 128>}, {transform_indices = @transform_3, window_bounds = array<i64: 1, 1, 8, 128>}]} {
    %c0 = arith.constant 0 : index
    %c0_0 = arith.constant 0 : index
    %c0_1 = arith.constant 0 : index
    %c0_2 = arith.constant 0 : index
    %0 = vector.load %arg2[%c0, %c0_0, %c0_1, %c0_2] : memref<1x4x16x36xbf16, #tpu.memory_space<vmem>>, vector<1x4x16x36xbf16>
    %1 = vector.shape_cast %0 : vector<1x4x16x36xbf16> to vector<64x36xbf16>
    %c0_3 = arith.constant 0 : index
    %c0_4 = arith.constant 0 : index
    %2 = vector.load %arg3[%c0_3, %c0_4] : memref<36x128xbf16, #tpu.memory_space<vmem>>, vector<36x128xbf16>
    %cst = arith.constant dense<0.000000e+00> : vector<64x128xf32>
    %3 = tpu.matmul %1, %2, %cst {dimension_numbers = #tpu.dot_dimension_numbers<[1], [0], [0], [1], [0, 0, 1, 1], [], []>} : vector<64x36xbf16>, vector<36x128xbf16>, vector<64x128xf32> -> vector<64x128xf32>
    %4 = vector.shape_cast %3 : vector<64x128xf32> to vector<1x4x16x128xf32>
    %5 = arith.truncf %4 : vector<1x4x16x128xf32> to vector<1x4x16x128xbf16>
    %c0_5 = arith.constant 0 : index
    %c0_6 = arith.constant 0 : index
    %c0_7 = arith.constant 0 : index
    %c0_8 = arith.constant 0 : index
    %6 = vector.load %arg4[%c0_5, %c0_6, %c0_7, %c0_8] : memref<1x4x16x128xbf16, #tpu.memory_space<vmem>>, vector<1x4x16x128xbf16>
    tpu.vector_store %arg4[%c0_5, %c0_6, %c0_7, %c0_8], %5 {strides = array<i32>} : memref<1x4x16x128xbf16, #tpu.memory_space<vmem>>, vector<1x4x16x128xbf16>,
    %cst_9 = arith.constant dense<0.000000e+00> : vector<128xf32>
    %7 = vector.multi_reduction <add>, %3, %cst_9 [0] : vector<64x128xf32> to vector<128xf32>
    %8 = vector.shape_cast %7 : vector<128xf32> to vector<1x128xf32>
    %9 = arith.mulf %3, %3 : vector<64x128xf32>
    %cst_10 = arith.constant dense<0.000000e+00> : vector<128xf32>
    %10 = vector.multi_reduction <add>, %9, %cst_10 [0] : vector<64x128xf32> to vector<128xf32>
    %11 = vector.shape_cast %10 : vector<128xf32> to vector<1x128xf32>
    %cst_11 = arith.constant 0.000000e+00 : f32
    %12 = vector.broadcast %cst_11 : f32 to vector<6x128xf32>
    %13 = tpu.concatenate %8, %11, %12 in 0 : vector<1x128xf32>, vector<1x128xf32>, vector<6x128xf32> -> vector<8x128xf32>
    %14 = vector.shape_cast %13 : vector<8x128xf32> to vector<1x1x8x128xf32>
    %c0_12 = arith.constant 0 : index
    %c0_13 = arith.constant 0 : index
    %c0_14 = arith.constant 0 : index
    %c0_15 = arith.constant 0 : index
    %15 = vector.load %arg5[%c0_12, %c0_13, %c0_14, %c0_15] : memref<1x1x8x128xf32, #tpu.memory_space<vmem>>, vector<1x1x8x128xf32>
    tpu.vector_store %arg5[%c0_12, %c0_13, %c0_14, %c0_15], %14 {strides = array<i32>} : memref<1x1x8x128xf32, #tpu.memory_space<vmem>>, vector<1x1x8x128xf32>,
    return
  }
  func.func @transform_0(%arg0: i32, %arg1: i32) -> (i32, i32, i32, i32) {
    %c0_i32 = arith.constant 0 : i32
    %c0_i32_0 = arith.constant 0 : i32
    %c0_i32_1 = arith.constant 0 : i32
    return %arg0, %arg1, %c0_i32, %c0_i32_0 : i32, i32, i32, i32
  }
  func.func @transform_1(%arg0: i32, %arg1: i32) -> (i32, i32) {
    %c0_i32 = arith.constant 0 : i32
    %c0_i32_0 = arith.constant 0 : i32
    %c0_i32_1 = arith.constant 0 : i32
    return %c0_i32, %c0_i32_0 : i32, i32
  }
  func.func @transform_2(%arg0: i32, %arg1: i32) -> (i32, i32, i32, i32) {
    %c0_i32 = arith.constant 0 : i32
    %c0_i32_0 = arith.constant 0 : i32
    %c0_i32_1 = arith.constant 0 : i32
    return %arg0, %arg1, %c0_i32, %c0_i32_0 : i32, i32, i32, i32
  }
  func.func @transform_3(%arg0: i32, %arg1: i32) -> (i32, i32, i32, i32) {
    %c0_i32 = arith.constant 0 : i32
    %c0_i32_0 = arith.constant 0 : i32
    %c0_i32_1 = arith.constant 0 : i32
    return %arg0, %arg1, %c0_i32, %c0_i32_0 : i32, i32, i32, i32
  }
}

module attributes {stable_mosaic.version = 11 : i64} {
  func.func @_bn_relu_kernel(%arg0: i32, %arg1: i32, %arg2: memref<1x4x16x128xbf16, #tpu.memory_space<vmem>>, %arg3: memref<1x128xf32, #tpu.memory_space<vmem>>, %arg4: memref<1x128xf32, #tpu.memory_space<vmem>>, %arg5: memref<1x4x16x128xbf16, #tpu.memory_space<vmem>>) attributes {dimension_semantics = [#tpu.dimension_semantics<parallel>, #tpu.dimension_semantics<parallel>], iteration_bounds = array<i64: 2, 4>, scalar_prefetch = 0 : i64, scratch_operands = 0 : i64, tpu.core_type = #tpu.core_type<tc>, window_params = [{transform_indices = @transform_0, window_bounds = array<i64: 1, 4, 16, 128>}, {pipeline_mode = #tpu.pipeline_mode<synchronous>, transform_indices = @transform_1, window_bounds = array<i64: 1, 128>}, {pipeline_mode = #tpu.pipeline_mode<synchronous>, transform_indices = @transform_2, window_bounds = array<i64: 1, 128>}, {transform_indices = @transform_3, window_bounds = array<i64: 1, 4, 16, 128>}]} {
    %c0 = arith.constant 0 : index
    %c0_0 = arith.constant 0 : index
    %0 = vector.load %arg3[%c0, %c0_0] : memref<1x128xf32, #tpu.memory_space<vmem>>, vector<1x128xf32>
    %1 = vector.shape_cast %0 : vector<1x128xf32> to vector<1x1x1x128xf32>
    %c0_1 = arith.constant 0 : index
    %c0_2 = arith.constant 0 : index
    %2 = vector.load %arg4[%c0_1, %c0_2] : memref<1x128xf32, #tpu.memory_space<vmem>>, vector<1x128xf32>
    %3 = vector.shape_cast %2 : vector<1x128xf32> to vector<1x1x1x128xf32>
    %c0_3 = arith.constant 0 : index
    %c0_4 = arith.constant 0 : index
    %c0_5 = arith.constant 0 : index
    %c0_6 = arith.constant 0 : index
    %4 = vector.load %arg2[%c0_3, %c0_4, %c0_5, %c0_6] : memref<1x4x16x128xbf16, #tpu.memory_space<vmem>>, vector<1x4x16x128xbf16>
    %5 = arith.extf %4 : vector<1x4x16x128xbf16> to vector<1x4x16x128xf32>
    %6 = vector.broadcast %1 : vector<1x1x1x128xf32> to vector<1x4x16x128xf32>
    %7 = arith.mulf %5, %6 : vector<1x4x16x128xf32>
    %8 = vector.broadcast %3 : vector<1x1x1x128xf32> to vector<1x4x16x128xf32>
    %9 = arith.addf %7, %8 : vector<1x4x16x128xf32>
    %cst = arith.constant 0.000000e+00 : f32
    %10 = vector.broadcast %cst : f32 to vector<1x4x16x128xf32>
    %11 = arith.maximumf %9, %10 : vector<1x4x16x128xf32>
    %12 = arith.truncf %11 : vector<1x4x16x128xf32> to vector<1x4x16x128xbf16>
    %c0_7 = arith.constant 0 : index
    %c0_8 = arith.constant 0 : index
    %c0_9 = arith.constant 0 : index
    %c0_10 = arith.constant 0 : index
    %13 = vector.load %arg5[%c0_7, %c0_8, %c0_9, %c0_10] : memref<1x4x16x128xbf16, #tpu.memory_space<vmem>>, vector<1x4x16x128xbf16>
    tpu.vector_store %arg5[%c0_7, %c0_8, %c0_9, %c0_10], %12 {strides = array<i32>} : memref<1x4x16x128xbf16, #tpu.memory_space<vmem>>, vector<1x4x16x128xbf16>,
    return
  }
  func.func @transform_0(%arg0: i32, %arg1: i32) -> (i32, i32, i32, i32) {
    %c0_i32 = arith.constant 0 : i32
    %c0_i32_0 = arith.constant 0 : i32
    %c0_i32_1 = arith.constant 0 : i32
    return %arg0, %arg1, %c0_i32, %c0_i32_0 : i32, i32, i32, i32
  }
  func.func @transform_1(%arg0: i32, %arg1: i32) -> (i32, i32) {
    %c0_i32 = arith.constant 0 : i32
    %c0_i32_0 = arith.constant 0 : i32
    %c0_i32_1 = arith.constant 0 : i32
    return %c0_i32, %c0_i32_0 : i32, i32
  }
  func.func @transform_2(%arg0: i32, %arg1: i32) -> (i32, i32) {
    %c0_i32 = arith.constant 0 : i32
    %c0_i32_0 = arith.constant 0 : i32
    %c0_i32_1 = arith.constant 0 : i32
    return %c0_i32, %c0_i32_0 : i32, i32
  }
  func.func @transform_3(%arg0: i32, %arg1: i32) -> (i32, i32, i32, i32) {
    %c0_i32 = arith.constant 0 : i32
    %c0_i32_0 = arith.constant 0 : i32
    %c0_i32_1 = arith.constant 0 : i32
    return %arg0, %arg1, %c0_i32, %c0_i32_0 : i32, i32, i32, i32
  }
}

module attributes {stable_mosaic.version = 11 : i64} {
  func.func @kernel(%arg0: i32, %arg1: i32, %arg2: memref<1x4x16x128xbf16, #tpu.memory_space<vmem>>, %arg3: memref<1x2x16x128xbf16, #tpu.memory_space<vmem>>, %arg4: memref<1x2x16x128xbf16, #tpu.memory_space<vmem>>, %arg5: memref<3x384x128xbf16, #tpu.memory_space<vmem>>, %arg6: memref<1x128xf32, #tpu.memory_space<vmem>>, %arg7: memref<1x128xf32, #tpu.memory_space<vmem>>, %arg8: memref<1x4x16x128xbf16, #tpu.memory_space<vmem>>, %arg9: memref<1x1x8x128xf32, #tpu.memory_space<vmem>>) attributes {dimension_semantics = [#tpu.dimension_semantics<parallel>, #tpu.dimension_semantics<parallel>], iteration_bounds = array<i64: 2, 4>, scalar_prefetch = 0 : i64, scratch_operands = 0 : i64, tpu.core_type = #tpu.core_type<tc>, window_params = [{transform_indices = @transform_0, window_bounds = array<i64: 1, 4, 16, 128>}, {transform_indices = @transform_1, window_bounds = array<i64: 1, 2, 16, 128>}, {transform_indices = @transform_2, window_bounds = array<i64: 1, 2, 16, 128>}, {pipeline_mode = #tpu.pipeline_mode<synchronous>, transform_indices = @transform_3, window_bounds = array<i64: 3, 384, 128>}, {pipeline_mode = #tpu.pipeline_mode<synchronous>, transform_indices = @transform_4, window_bounds = array<i64: 1, 128>}, {pipeline_mode = #tpu.pipeline_mode<synchronous>, transform_indices = @transform_5, window_bounds = array<i64: 1, 128>}, {transform_indices = @transform_6, window_bounds = array<i64: 1, 4, 16, 128>}, {transform_indices = @transform_7, window_bounds = array<i64: 1, 1, 8, 128>}]} {
    %c0 = arith.constant 0 : index
    %c0_0 = arith.constant 0 : index
    %0 = vector.load %arg6[%c0, %c0_0] : memref<1x128xf32, #tpu.memory_space<vmem>>, vector<1x128xf32>
    %1 = vector.shape_cast %0 : vector<1x128xf32> to vector<1x1x128xf32>
    %c0_1 = arith.constant 0 : index
    %c0_2 = arith.constant 0 : index
    %2 = vector.load %arg7[%c0_1, %c0_2] : memref<1x128xf32, #tpu.memory_space<vmem>>, vector<1x128xf32>
    %3 = vector.shape_cast %2 : vector<1x128xf32> to vector<1x1x128xf32>
    %c0_3 = arith.constant 0 : index
    %c0_4 = arith.constant 0 : index
    %c0_5 = arith.constant 0 : index
    %c0_6 = arith.constant 0 : index
    %4 = vector.load %arg2[%c0_3, %c0_4, %c0_5, %c0_6] : memref<1x4x16x128xbf16, #tpu.memory_space<vmem>>, vector<1x4x16x128xbf16>
    %5 = vector.shape_cast %4 : vector<1x4x16x128xbf16> to vector<4x16x128xbf16>
    %6 = arith.extf %5 : vector<4x16x128xbf16> to vector<4x16x128xf32>
    %7 = vector.broadcast %1 : vector<1x1x128xf32> to vector<4x16x128xf32>
    %8 = arith.mulf %6, %7 : vector<4x16x128xf32>
    %9 = vector.broadcast %3 : vector<1x1x128xf32> to vector<4x16x128xf32>
    %10 = arith.addf %8, %9 : vector<4x16x128xf32>
    %cst = arith.constant 0.000000e+00 : f32
    %11 = vector.broadcast %cst : f32 to vector<4x16x128xf32>
    %12 = arith.maximumf %10, %11 : vector<4x16x128xf32>
    %13 = arith.truncf %12 : vector<4x16x128xf32> to vector<4x16x128xbf16>
    %cst_7 = arith.constant 0.000000e+00 : bf16
    %14 = vector.broadcast %cst_7 : bf16 to vector<4x1x128xbf16>
    %15 = tpu.concatenate %14, %13, %14 in 1 : vector<4x1x128xbf16>, vector<4x16x128xbf16>, vector<4x1x128xbf16> -> vector<4x18x128xbf16>
    %c0_8 = arith.constant 0 : index
    %c1 = arith.constant 1 : index
    %c0_9 = arith.constant 0 : index
    %c0_10 = arith.constant 0 : index
    %16 = vector.load %arg3[%c0_8, %c1, %c0_9, %c0_10] : memref<1x2x16x128xbf16, #tpu.memory_space<vmem>>, vector<1x1x16x128xbf16>
    %17 = vector.shape_cast %16 : vector<1x1x16x128xbf16> to vector<1x16x128xbf16>
    %18 = arith.extf %17 : vector<1x16x128xbf16> to vector<1x16x128xf32>
    %19 = vector.broadcast %1 : vector<1x1x128xf32> to vector<1x16x128xf32>
    %20 = arith.mulf %18, %19 : vector<1x16x128xf32>
    %21 = vector.broadcast %3 : vector<1x1x128xf32> to vector<1x16x128xf32>
    %22 = arith.addf %20, %21 : vector<1x16x128xf32>
    %cst_11 = arith.constant 0.000000e+00 : f32
    %23 = vector.broadcast %cst_11 : f32 to vector<1x16x128xf32>
    %24 = arith.maximumf %22, %23 : vector<1x16x128xf32>
    %25 = arith.truncf %24 : vector<1x16x128xf32> to vector<1x16x128xbf16>
    %cst_12 = arith.constant 0.000000e+00 : bf16
    %26 = vector.broadcast %cst_12 : bf16 to vector<1x1x128xbf16>
    %27 = tpu.concatenate %26, %25, %26 in 1 : vector<1x1x128xbf16>, vector<1x16x128xbf16>, vector<1x1x128xbf16> -> vector<1x18x128xbf16>
    %c0_13 = arith.constant 0 : index
    %c0_14 = arith.constant 0 : index
    %c0_15 = arith.constant 0 : index
    %c0_16 = arith.constant 0 : index
    %28 = vector.load %arg4[%c0_13, %c0_14, %c0_15, %c0_16] : memref<1x2x16x128xbf16, #tpu.memory_space<vmem>>, vector<1x1x16x128xbf16>
    %29 = vector.shape_cast %28 : vector<1x1x16x128xbf16> to vector<1x16x128xbf16>
    %30 = arith.extf %29 : vector<1x16x128xbf16> to vector<1x16x128xf32>
    %31 = vector.broadcast %1 : vector<1x1x128xf32> to vector<1x16x128xf32>
    %32 = arith.mulf %30, %31 : vector<1x16x128xf32>
    %33 = vector.broadcast %3 : vector<1x1x128xf32> to vector<1x16x128xf32>
    %34 = arith.addf %32, %33 : vector<1x16x128xf32>
    %cst_17 = arith.constant 0.000000e+00 : f32
    %35 = vector.broadcast %cst_17 : f32 to vector<1x16x128xf32>
    %36 = arith.maximumf %34, %35 : vector<1x16x128xf32>
    %37 = arith.truncf %36 : vector<1x16x128xf32> to vector<1x16x128xbf16>
    %cst_18 = arith.constant 0.000000e+00 : bf16
    %38 = vector.broadcast %cst_18 : bf16 to vector<1x1x128xbf16>
    %39 = tpu.concatenate %38, %37, %38 in 1 : vector<1x1x128xbf16>, vector<1x16x128xbf16>, vector<1x1x128xbf16> -> vector<1x18x128xbf16>
    %c0_i32 = arith.constant 0 : i32
    %40 = arith.cmpi sgt, %arg1, %c0_i32 : i32
    %cst_19 = arith.constant 0.000000e+00 : bf16
    %41 = vector.broadcast %cst_19 : bf16 to vector<1x18x128xbf16>
    %42 = arith.select %40, %27, %41 : vector<1x18x128xbf16>
    %c3_i32 = arith.constant 3 : i32
    %43 = arith.cmpi slt, %arg1, %c3_i32 : i32
    %cst_20 = arith.constant 0.000000e+00 : bf16
    %44 = vector.broadcast %cst_20 : bf16 to vector<1x18x128xbf16>
    %45 = arith.select %43, %39, %44 : vector<1x18x128xbf16>
    %46 = vector.extract_strided_slice %15 {offsets = [0, 0, 0], sizes = [3, 18, 128], strides = [1, 1, 1]} : vector<4x18x128xbf16> to vector<3x18x128xbf16>
    %47 = tpu.concatenate %42, %46 in 0 : vector<1x18x128xbf16>, vector<3x18x128xbf16> -> vector<4x18x128xbf16>
    %48 = vector.extract_strided_slice %47 {offsets = [0, 0, 0], sizes = [4, 16, 128], strides = [1, 1, 1]} : vector<4x18x128xbf16> to vector<4x16x128xbf16>
    %49 = vector.shape_cast %48 : vector<4x16x128xbf16> to vector<64x128xbf16>
    %50 = vector.extract_strided_slice %47 {offsets = [0, 1, 0], sizes = [4, 16, 128], strides = [1, 1, 1]} : vector<4x18x128xbf16> to vector<4x16x128xbf16>
    %51 = vector.shape_cast %50 : vector<4x16x128xbf16> to vector<64x128xbf16>
    %52 = vector.extract_strided_slice %47 {offsets = [0, 2, 0], sizes = [4, 16, 128], strides = [1, 1, 1]} : vector<4x18x128xbf16> to vector<4x16x128xbf16>
    %53 = vector.shape_cast %52 : vector<4x16x128xbf16> to vector<64x128xbf16>
    %54 = tpu.concatenate %49, %51, %53 in 1 : vector<64x128xbf16>, vector<64x128xbf16>, vector<64x128xbf16> -> vector<64x384xbf16>
    %c0_21 = arith.constant 0 : index
    %c0_22 = arith.constant 0 : index
    %c0_23 = arith.constant 0 : index
    %55 = vector.load %arg5[%c0_21, %c0_22, %c0_23] : memref<3x384x128xbf16, #tpu.memory_space<vmem>>, vector<1x384x128xbf16>
    %56 = vector.shape_cast %55 : vector<1x384x128xbf16> to vector<384x128xbf16>
    %cst_24 = arith.constant dense<0.000000e+00> : vector<64x128xf32>
    %57 = tpu.matmul %54, %56, %cst_24 {dimension_numbers = #tpu.dot_dimension_numbers<[1], [0], [0], [1], [0, 0, 1, 1], [], []>} : vector<64x384xbf16>, vector<384x128xbf16>, vector<64x128xf32> -> vector<64x128xf32>
    %58 = vector.extract_strided_slice %15 {offsets = [0, 0, 0], sizes = [4, 16, 128], strides = [1, 1, 1]} : vector<4x18x128xbf16> to vector<4x16x128xbf16>
    %59 = vector.shape_cast %58 : vector<4x16x128xbf16> to vector<64x128xbf16>
    %60 = vector.extract_strided_slice %15 {offsets = [0, 1, 0], sizes = [4, 16, 128], strides = [1, 1, 1]} : vector<4x18x128xbf16> to vector<4x16x128xbf16>
    %61 = vector.shape_cast %60 : vector<4x16x128xbf16> to vector<64x128xbf16>
    %62 = vector.extract_strided_slice %15 {offsets = [0, 2, 0], sizes = [4, 16, 128], strides = [1, 1, 1]} : vector<4x18x128xbf16> to vector<4x16x128xbf16>
    %63 = vector.shape_cast %62 : vector<4x16x128xbf16> to vector<64x128xbf16>
    %64 = tpu.concatenate %59, %61, %63 in 1 : vector<64x128xbf16>, vector<64x128xbf16>, vector<64x128xbf16> -> vector<64x384xbf16>
    %c1_25 = arith.constant 1 : index
    %c0_26 = arith.constant 0 : index
    %c0_27 = arith.constant 0 : index
    %65 = vector.load %arg5[%c1_25, %c0_26, %c0_27] : memref<3x384x128xbf16, #tpu.memory_space<vmem>>, vector<1x384x128xbf16>
    %66 = vector.shape_cast %65 : vector<1x384x128xbf16> to vector<384x128xbf16>
    %cst_28 = arith.constant dense<0.000000e+00> : vector<64x128xf32>
    %67 = tpu.matmul %64, %66, %cst_28 {dimension_numbers = #tpu.dot_dimension_numbers<[1], [0], [0], [1], [0, 0, 1, 1], [], []>} : vector<64x384xbf16>, vector<384x128xbf16>, vector<64x128xf32> -> vector<64x128xf32>
    %68 = arith.addf %57, %67 : vector<64x128xf32>
    %69 = vector.extract_strided_slice %15 {offsets = [1, 0, 0], sizes = [3, 18, 128], strides = [1, 1, 1]} : vector<4x18x128xbf16> to vector<3x18x128xbf16>
    %70 = tpu.concatenate %69, %45 in 0 : vector<3x18x128xbf16>, vector<1x18x128xbf16> -> vector<4x18x128xbf16>
    %71 = vector.extract_strided_slice %70 {offsets = [0, 0, 0], sizes = [4, 16, 128], strides = [1, 1, 1]} : vector<4x18x128xbf16> to vector<4x16x128xbf16>
    %72 = vector.shape_cast %71 : vector<4x16x128xbf16> to vector<64x128xbf16>
    %73 = vector.extract_strided_slice %70 {offsets = [0, 1, 0], sizes = [4, 16, 128], strides = [1, 1, 1]} : vector<4x18x128xbf16> to vector<4x16x128xbf16>
    %74 = vector.shape_cast %73 : vector<4x16x128xbf16> to vector<64x128xbf16>
    %75 = vector.extract_strided_slice %70 {offsets = [0, 2, 0], sizes = [4, 16, 128], strides = [1, 1, 1]} : vector<4x18x128xbf16> to vector<4x16x128xbf16>
    %76 = vector.shape_cast %75 : vector<4x16x128xbf16> to vector<64x128xbf16>
    %77 = tpu.concatenate %72, %74, %76 in 1 : vector<64x128xbf16>, vector<64x128xbf16>, vector<64x128xbf16> -> vector<64x384xbf16>
    %c2 = arith.constant 2 : index
    %c0_29 = arith.constant 0 : index
    %c0_30 = arith.constant 0 : index
    %78 = vector.load %arg5[%c2, %c0_29, %c0_30] : memref<3x384x128xbf16, #tpu.memory_space<vmem>>, vector<1x384x128xbf16>
    %79 = vector.shape_cast %78 : vector<1x384x128xbf16> to vector<384x128xbf16>
    %cst_31 = arith.constant dense<0.000000e+00> : vector<64x128xf32>
    %80 = tpu.matmul %77, %79, %cst_31 {dimension_numbers = #tpu.dot_dimension_numbers<[1], [0], [0], [1], [0, 0, 1, 1], [], []>} : vector<64x384xbf16>, vector<384x128xbf16>, vector<64x128xf32> -> vector<64x128xf32>
    %81 = arith.addf %68, %80 : vector<64x128xf32>
    %82 = vector.shape_cast %81 : vector<64x128xf32> to vector<1x4x16x128xf32>
    %83 = arith.truncf %82 : vector<1x4x16x128xf32> to vector<1x4x16x128xbf16>
    %c0_32 = arith.constant 0 : index
    %c0_33 = arith.constant 0 : index
    %c0_34 = arith.constant 0 : index
    %c0_35 = arith.constant 0 : index
    %84 = vector.load %arg8[%c0_32, %c0_33, %c0_34, %c0_35] : memref<1x4x16x128xbf16, #tpu.memory_space<vmem>>, vector<1x4x16x128xbf16>
    tpu.vector_store %arg8[%c0_32, %c0_33, %c0_34, %c0_35], %83 {strides = array<i32>} : memref<1x4x16x128xbf16, #tpu.memory_space<vmem>>, vector<1x4x16x128xbf16>,
    %cst_36 = arith.constant dense<0.000000e+00> : vector<128xf32>
    %85 = vector.multi_reduction <add>, %81, %cst_36 [0] : vector<64x128xf32> to vector<128xf32>
    %86 = vector.shape_cast %85 : vector<128xf32> to vector<1x128xf32>
    %87 = arith.mulf %81, %81 : vector<64x128xf32>
    %cst_37 = arith.constant dense<0.000000e+00> : vector<128xf32>
    %88 = vector.multi_reduction <add>, %87, %cst_37 [0] : vector<64x128xf32> to vector<128xf32>
    %89 = vector.shape_cast %88 : vector<128xf32> to vector<1x128xf32>
    %cst_38 = arith.constant 0.000000e+00 : f32
    %90 = vector.broadcast %cst_38 : f32 to vector<6x128xf32>
    %91 = tpu.concatenate %86, %89, %90 in 0 : vector<1x128xf32>, vector<1x128xf32>, vector<6x128xf32> -> vector<8x128xf32>
    %92 = vector.shape_cast %91 : vector<8x128xf32> to vector<1x1x8x128xf32>
    %c0_39 = arith.constant 0 : index
    %c0_40 = arith.constant 0 : index
    %c0_41 = arith.constant 0 : index
    %c0_42 = arith.constant 0 : index
    %93 = vector.load %arg9[%c0_39, %c0_40, %c0_41, %c0_42] : memref<1x1x8x128xf32, #tpu.memory_space<vmem>>, vector<1x1x8x128xf32>
    tpu.vector_store %arg9[%c0_39, %c0_40, %c0_41, %c0_42], %92 {strides = array<i32>} : memref<1x1x8x128xf32, #tpu.memory_space<vmem>>, vector<1x1x8x128xf32>,
    return
  }
  func.func @transform_0(%arg0: i32, %arg1: i32) -> (i32, i32, i32, i32) {
    %c0_i32 = arith.constant 0 : i32
    %c0_i32_0 = arith.constant 0 : i32
    %c0_i32_1 = arith.constant 0 : i32
    return %arg0, %arg1, %c0_i32, %c0_i32_0 : i32, i32, i32, i32
  }
  func.func @transform_1(%arg0: i32, %arg1: i32) -> (i32, i32, i32, i32) {
    %c2_i32 = arith.constant 2 : i32
    %0 = arith.muli %arg1, %c2_i32 : i32
    %c1_i32 = arith.constant 1 : i32
    %1 = arith.subi %0, %c1_i32 : i32
    %c0_i32 = arith.constant 0 : i32
    %2 = arith.maxsi %1, %c0_i32 : i32
    %c0_i32_0 = arith.constant 0 : i32
    %c0_i32_1 = arith.constant 0 : i32
    %c0_i32_2 = arith.constant 0 : i32
    return %arg0, %2, %c0_i32_0, %c0_i32_1 : i32, i32, i32, i32
  }
  func.func @transform_2(%arg0: i32, %arg1: i32) -> (i32, i32, i32, i32) {
    %c1_i32 = arith.constant 1 : i32
    %0 = arith.addi %arg1, %c1_i32 : i32
    %c2_i32 = arith.constant 2 : i32
    %1 = arith.muli %0, %c2_i32 : i32
    %c7_i32 = arith.constant 7 : i32
    %2 = arith.minsi %1, %c7_i32 : i32
    %c0_i32 = arith.constant 0 : i32
    %c0_i32_0 = arith.constant 0 : i32
    %c0_i32_1 = arith.constant 0 : i32
    return %arg0, %2, %c0_i32, %c0_i32_0 : i32, i32, i32, i32
  }
  func.func @transform_3(%arg0: i32, %arg1: i32) -> (i32, i32, i32) {
    %c0_i32 = arith.constant 0 : i32
    %c0_i32_0 = arith.constant 0 : i32
    %c0_i32_1 = arith.constant 0 : i32
    %c0_i32_2 = arith.constant 0 : i32
    return %c0_i32, %c0_i32_0, %c0_i32_1 : i32, i32, i32
  }
  func.func @transform_4(%arg0: i32, %arg1: i32) -> (i32, i32) {
    %c0_i32 = arith.constant 0 : i32
    %c0_i32_0 = arith.constant 0 : i32
    %c0_i32_1 = arith.constant 0 : i32
    return %c0_i32, %c0_i32_0 : i32, i32
  }
  func.func @transform_5(%arg0: i32, %arg1: i32) -> (i32, i32) {
    %c0_i32 = arith.constant 0 : i32
    %c0_i32_0 = arith.constant 0 : i32
    %c0_i32_1 = arith.constant 0 : i32
    return %c0_i32, %c0_i32_0 : i32, i32
  }
  func.func @transform_6(%arg0: i32, %arg1: i32) -> (i32, i32, i32, i32) {
    %c0_i32 = arith.constant 0 : i32
    %c0_i32_0 = arith.constant 0 : i32
    %c0_i32_1 = arith.constant 0 : i32
    return %arg0, %arg1, %c0_i32, %c0_i32_0 : i32, i32, i32, i32
  }
  func.func @transform_7(%arg0: i32, %arg1: i32) -> (i32, i32, i32, i32) {
    %c0_i32 = arith.constant 0 : i32
    %c0_i32_0 = arith.constant 0 : i32
    %c0_i32_1 = arith.constant 0 : i32
    return %arg0, %arg1, %c0_i32, %c0_i32_0 : i32, i32, i32, i32
  }
}

</mosaic_0001>

<llo_original>
// kernel: _lambda_.3
$region0: #{_lambda_.3}
  #allocation0 [shape = 'u32[]', space=smem, size = 0x4, offset = 0x4, fixed_abs, tag = 'smem constant byte address 0x4 - core index']
  #allocation1 [shape = 'u32[144,128]{1,0:T(1,128)}', space=vmem, size = 0x12000, scoped, tag = 'internal scratch']
  %s0 = inlined_call_operand.hbm [shape: bf16[2,16,16,36], index: 0, kind: input, shape index: {}]
  %s1 = inlined_call_operand.hbm [shape: bf16[36,128], index: 1, kind: input, shape index: {}]
  %s2 = inlined_call_operand.hbm [shape: bf16[2,16,16,128], index: 2, kind: output, shape index: {0}]
  %s3 = inlined_call_operand.hbm [shape: f32[2,4,8,128], index: 3, kind: output, shape index: {1}]
  %4 = xla_tuple %s2, %s3
  %s5 = sld [smem:[#allocation0]]
  $region57: #{_lambda_.3} parent=0
    _
  %s7 = ssub.s32 1, %s5
  %s8 = scalar_select 0, %s7, %s5
  $region1: #{_lambda_.3} parent=0
    #allocation2 [shape = 'u8[32768]{0}', space=vmem, size = 0x8000, scoped, tag = 'input window, operand 0']
    #allocation3 [shape = 's32[2]{0}', space=sflag, size = 0x8, scoped, tag = 'scoped memory for _lambda_.3']
    #allocation4 [shape = 's32[2]{0}', space=sflag, size = 0x8, scoped, tag = 'scoped memory for _lambda_.3']
    #allocation5 [shape = 'u8[10240]{0}', space=vmem, size = 0x2800, scoped, tag = 'input window, operand 1, single buffered']
    #allocation6 [shape = 's32[1]{0}', space=sflag, size = 0x4, scoped, tag = 'scoped memory for _lambda_.3']
    #allocation7 [shape = 'u8[32768]{0}', space=vmem, size = 0x8000, scoped, tag = 'output window, operand 0']
    #allocation8 [shape = 'u8[8192]{0}', space=vmem, size = 0x2000, scoped, tag = 'output window, operand 1']
    #allocation9 [shape = 's32[2]{0}', space=sflag, size = 0x8, scoped, tag = 'scoped memory for _lambda_.3']
    %9 = vsyncpa [#allocation3], 0
    %s10 = scalar_lea.sflag [#allocation3], 1
    %11 = vsyncpa %s10, 0
    %12 = vsyncpa [#allocation6], 0
    %13 = vsyncpa [#allocation4], 0
    %s14 = scalar_lea.sflag [#allocation4], 1
    %15 = vsyncpa %s14, 0
    %16 = vsyncpa [#allocation9], 0
    %s17 = scalar_lea.sflag [#allocation9], 1
    %18 = vsyncpa %s17, 0
    loop: start=0, step=1, limit=10
    $region2: #{_lambda_.3} parent=1 // loop_pre_header
      _
    $region3: #{_lambda_.3} parent=1 // loop_header
      %s20 = sphi 0, %s24
      %p21 = scmp.ge.s32.totalorder %s20, 10
      %s27 = sphi 0, %s39
      %s28 = sphi 0, %s35
      %s29 = sphi 0, %s27
      %s30 = sphi 0, %s28
      %s31 = sphi 0, %s29
      %s32 = sphi 0, %s30
      %s44 = sphi 0, %s46
      %s47 = sphi 0, %s44
      %s48 = sphi 0, %s47
      %s64 = sphi 0, %s48
      %s68 = sphi 0, %s68
      %s70 = sphi 0, %s68
      %s71 = sphi 0, %s70
      %s85 = sphi 0, %s71
      %s93 = sphi 0, %s95
      %s96 = sphi 0, %s93
      %s97 = sphi 0, %s96
      %s113 = sphi 0, %s97
      %s121 = sphi 0, %s123
      %s124 = sphi 0, %s121
      %s125 = sphi 0, %s124
      %s141 = sphi 0, %s125
    $region4: #{_lambda_.3} parent=1 // loop_header_branch
      %23 = sbr.rel (%p21) target = $region8
    $region5: #{_lambda_.3} parent=1 // loop_body
      %s25 = ssub.s32 %s20, 1
      %s26 = ssub.s32 %s20, 2
      %s33 = sadd.s32 1, %s28
      %p34 = scmp.ge.s32.totalorder %s33, 4
      %s35 = scalar_select %p34, 0, %s33
      %s36 = sadd.s32 1, %s27
      %s37 = scalar_select %p34, %s36, %s27
      %p38 = scmp.ge.s32.totalorder %s37, 2
      %s39 = scalar_select %p38, 0, %s37
      %s40 = ssub.s32 %s27, %s39
      %s41 = ssub.s32 %s28, %s35
      %s42 = sor.u32 %s40, %s41
      %p43 = scmp.eq.s32.totalorder %s42, 0
      %s45 = sadd.s32 %s44, 1
      %s46 = scalar_select %p43, %s44, %s45
      %p49 = pneg %p43
      %p50 = scmp.eq.s32.totalorder %s20, 7
      %p51 = por %p49, %p50
      %p52 = scmp.ne.s32.totalorder %s44, %s47
      %p53 = scmp.eq.s32.totalorder %s20, 0
      %p54 = por %p52, %p53
      %p55 = scmp.ne.s32.totalorder %s44, %s47
      %p56 = scmp.eq.s32.totalorder %s25, 7
      %p57 = por %p55, %p56
      %p58 = scmp.ne.s32.totalorder %s47, %s48
      %p59 = scmp.eq.s32.totalorder %s25, 0
      %p60 = por %p58, %p59
      %p61 = scmp.ne.s32.totalorder %s47, %s48
      %p62 = scmp.eq.s32.totalorder %s26, 7
      %p63 = por %p61, %p62
      %p65 = scmp.ne.s32.totalorder %s48, %s64
      %p66 = scmp.eq.s32.totalorder %s26, 0
      %p67 = por %p65, %p66
      %s69 = sadd.s32 %s68, 1
      %p72 = scmp.eq.s32.totalorder %s20, 7
      %p73 = scmp.ne.s32.totalorder %s68, %s70
      %p74 = scmp.eq.s32.totalorder %s20, 0
      %p75 = por %p73, %p74
      %p76 = scmp.ne.s32.totalorder %s68, %s70
      %p77 = scmp.eq.s32.totalorder %s25, 7
      %p78 = por %p76, %p77
      %p79 = scmp.ne.s32.totalorder %s70, %s71
      %p80 = scmp.eq.s32.totalorder %s25, 0
      %p81 = por %p79, %p80
      %p82 = scmp.ne.s32.totalorder %s70, %s71
      %p83 = scmp.eq.s32.totalorder %s26, 7
      %p84 = por %p82, %p83
      %p86 = scmp.ne.s32.totalorder %s71, %s85
      %p87 = scmp.eq.s32.totalorder %s26, 0
      %p88 = por %p86, %p87
      %s89 = ssub.s32 %s27, %s39
      %s90 = ssub.s32 %s28, %s35
      %s91 = sor.u32 %s89, %s90
      %p92 = scmp.eq.s32.totalorder %s91, 0
      %s94 = sadd.s32 %s93, 1
      %s95 = scalar_select %p92, %s93, %s94
      %p98 = pneg %p92
      %p99 = scmp.eq.s32.totalorder %s20, 7
      %p100 = por %p98, %p99
      %p101 = scmp.ne.s32.totalorder %s93, %s96
      %p102 = scmp.eq.s32.totalorder %s20, 0
      %p103 = por %p101, %p102
      %p104 = scmp.ne.s32.totalorder %s93, %s96
      %p105 = scmp.eq.s32.totalorder %s25, 7
      %p106 = por %p104, %p105
      %p107 = scmp.ne.s32.totalorder %s96, %s97
      %p108 = scmp.eq.s32.totalorder %s25, 0
      %p109 = por %p107, %p108
      %p110 = scmp.ne.s32.totalorder %s96, %s97
      %p111 = scmp.eq.s32.totalorder %s26, 7
      %p112 = por %p110, %p111
      %p114 = scmp.ne.s32.totalorder %s97, %s113
      %p115 = scmp.eq.s32.totalorder %s26, 0
      %p116 = por %p114, %p115
      %s117 = ssub.s32 %s27, %s39
      %s118 = ssub.s32 %s28, %s35
      %s119 = sor.u32 %s117, %s118
      %p120 = scmp.eq.s32.totalorder %s119, 0
      %s122 = sadd.s32 %s121, 1
      %s123 = scalar_select %p120, %s121, %s122
      %p126 = pneg %p120
      %p127 = scmp.eq.s32.totalorder %s20, 7
      %p128 = por %p126, %p127
      %p129 = scmp.ne.s32.totalorder %s121, %s124
      %p130 = scmp.eq.s32.totalorder %s20, 0
      %p131 = por %p129, %p130
      %p132 = scmp.ne.s32.totalorder %s121, %s124
      %p133 = scmp.eq.s32.totalorder %s25, 7
      %p134 = por %p132, %p133
      %p135 = scmp.ne.s32.totalorder %s124, %s125
      %p136 = scmp.eq.s32.totalorder %s25, 0
      %p137 = por %p135, %p136
      %p138 = scmp.ne.s32.totalorder %s124, %s125
      %p139 = scmp.eq.s32.totalorder %s26, 7
      %p140 = por %p138, %p139
      %p142 = scmp.ne.s32.totalorder %s125, %s141
      %p143 = scmp.eq.s32.totalorder %s26, 0
      %p144 = por %p142, %p143
      %p145 = scmp.le.s32.totalorder 1, %s20
      %p146 = scmp.lt.s32.totalorder %s20, 9
      %p147 = pnand %p145, %p146
      %p148 = pneg %p147
      // Predicated region
      $region9: #{_lambda_.3} parent=5 // pred_check
        _
      $region10: #{_lambda_.3} parent=5 // pred_check_branch
        %150 = sbr.rel (%p147) target = $region12
      $region11: #{_lambda_.3} parent=5 // pred_region
        %s151 = ssub.s32 %s20, 1
        // Predicated region
        $region13: #{_lambda_.3} parent=11 // pred_check
          %p152 = pneg %p81
        $region14: #{_lambda_.3} parent=11 // pred_check_branch
          %154 = sbr.rel (%p152) target = $region16
        $region15: #{_lambda_.3} parent=11 // pred_region
          %s156 = ssub.s32 320, 320
          %157 = vsyncadd [#allocation6], %s156
          %s158 = sshll.u32 [#allocation5], 4
          %s159 = int_to_ptr.vmem [resolvable:$true] %s158
          %164 = dma.hbm_to_vmem [thread:$0]  %s1, 320, %s159, [#allocation6], 64, 64, 4
        $region16: #{_lambda_.3} parent=11 // pred_fallthru
          _
      $region12: #{_lambda_.3} parent=5 // pred_fallthru
        _
      %p165 = scmp.lt.s32.totalorder %s20, 8
      // Predicated region
      $region17: #{_lambda_.3} parent=5 // pred_check
        %p166 = pneg %p165
      $region18: #{_lambda_.3} parent=5 // pred_check_branch
        %168 = sbr.rel (%p166) target = $region20
      $region19: #{_lambda_.3} parent=5 // pred_region
        // Predicated region
        $region21: #{_lambda_.3} parent=19 // pred_check
          %p169 = pneg %p54
        $region22: #{_lambda_.3} parent=19 // pred_check_branch
          %171 = sbr.rel (%p169) target = $region24
        $region23: #{_lambda_.3} parent=19 // pred_region
          %s172 = sand.u32 %s44, 1
          %s173 = scalar_lea.sflag [#allocation3], %s172
          %s174 = sand.u32 %s44, 1
          %s175 = smul.addr %s174, 32
          %s176 = scalar_lea.vmem [#allocation2], %s175
          %s177 = smul.u32 4, %s28
          %s179 = ssub.s32 512, 512
          %180 = vsyncadd %s173, %s179
          %s181 = smul.addr %s177, 2
          %s182 = smul.addr %s27, 32
          %s183 = sadd.s32 %s181, %s182
          %s184 = smul.addr %s183, 64
          %s185 = scalar_lea.hbm %s0, %s184
          %s186 = sshll.u32 %s176, 4
          %s187 = int_to_ptr.vmem [resolvable:$true] %s186
          %192 = dma.hbm_to_vmem [thread:$0]  %s185, 512, %s187, %s173, 64, 64, 4
        $region24: #{_lambda_.3} parent=19 // pred_fallthru
          _
      $region20: #{_lambda_.3} parent=5 // pred_fallthru
        _
      %p193 = scmp.le.s32.totalorder 1, %s20
      %p194 = scmp.lt.s32.totalorder %s20, 9
      %p195 = pnand %p193, %p194
      %p196 = pneg %p195
      // Predicated region
      $region25: #{_lambda_.3} parent=5 // pred_check
        _
      $region26: #{_lambda_.3} parent=5 // pred_check_branch
        %198 = sbr.rel (%p195) target = $region28
      $region27: #{_lambda_.3} parent=5 // pred_region
        %s199 = ssub.s32 %s20, 1
        %s200 = sand.u32 %s47, 1
        %s201 = scalar_lea.sflag [#allocation3], %s200
        %s202 = sand.u32 %s47, 1
        %s203 = smul.addr %s202, 32
        %s204 = scalar_lea.vmem [#allocation2], %s203
        // Predicated region
        $region29: #{_lambda_.3} parent=27 // pred_check
          %p205 = pneg %p60
        $region30: #{_lambda_.3} parent=27 // pred_check_branch
          %207 = sbr.rel (%p205) target = $region32
        $region31: #{_lambda_.3} parent=27 // pred_region
          %208 = dma.done %s201, 512
        $region32: #{_lambda_.3} parent=27 // pred_fallthru
          _
        // Predicated region
        $region33: #{_lambda_.3} parent=27 // pred_check
          %p209 = pneg %p81
        $region34: #{_lambda_.3} parent=27 // pred_check_branch
          %211 = sbr.rel (%p209) target = $region36
        $region35: #{_lambda_.3} parent=27 // pred_region
          %212 = dma.done [#allocation6], 320
        $region36: #{_lambda_.3} parent=27 // pred_fallthru
          _
        %s213 = sand.u32 %s47, 1
        %s214 = scalar_lea.sflag [#allocation3], %s213
        %s215 = sand.u32 %s47, 1
        %s216 = smul.addr %s215, 32
        %s217 = scalar_lea.vmem [#allocation2], %s216
        %p218 = pneg %p60
        %p219 = pneg %p57
        %p220 = pneg %p81
        %p221 = pneg %p78
        %p222 = pneg %p109
        %p223 = pneg %p106
        %s224 = sand.u32 %s96, 1
        %s225 = scalar_lea.sflag [#allocation4], %s224
        %s226 = sand.u32 %s96, 1
        %s227 = smul.addr %s226, 32
        %s228 = scalar_lea.vmem [#allocation7], %s227
        %p229 = pneg %p137
        %p230 = pneg %p134
        %s231 = sand.u32 %s124, 1
        %s232 = scalar_lea.sflag [#allocation9], %s231
        %s233 = sand.u32 %s124, 1
        %s234 = smul.addr %s233, 8
        %s235 = scalar_lea.vmem [#allocation8], %s234
        %s236 = smul.u32 4, %s30
        %s237 = smul.u32 4, %s30
        %v239 = vld [vmem:[%s204] sm:$0xf]
        %v240 = vld [vmem:[%s204 + $0x4] sm:$0xf]
        %v241 = vld [vmem:[%s204 + $0x8] sm:$0xf]
        %v242 = vld [vmem:[%s204 + $0xc] sm:$0xf]
        %v243 = vld [vmem:[%s204 + $0x10] sm:$0xf]
        %v244 = vld [vmem:[%s204 + $0x14] sm:$0xf]
        %v245 = vld [vmem:[%s204 + $0x18] sm:$0xf]
        %v246 = vld [vmem:[%s204 + $0x1c] sm:$0xf]
        %v247 = vld [vmem:[#allocation5] sm:$0xf]
        %v248 = vld [vmem:[#allocation5 + $0x4] sm:$0xf]
        %v249 = vld [vmem:[#allocation5 + $0x8] sm:$0xf]
        %v250 = vld [vmem:[#allocation5 + $0xc] sm:$0xf]
        %v251 = vld [vmem:[#allocation5 + $0x10] sm:$0x3]
        %v260 = vunpack.c.l.b16 %v239
        %v261 = vunpack.c.l.b16 %v240
        %v262 = vunpack.c.l.b16 %v241
        %v263 = vunpack.c.l.b16 %v242
        %v264 = vunpack.c.l.b16 %v243
        %v265 = vunpack.c.l.b16 %v244
        %v266 = vunpack.c.l.b16 %v245
        %v267 = vunpack.c.l.b16 %v246
        %v268 = vpack.c.b16 %v261, %v260
        %v269 = vpack.c.b16 %v263, %v262
        %v270 = vpack.c.b16 %v265, %v264
        %v271 = vpack.c.b16 %v267, %v266
        %v277 = vunpack.c.l.b16 %v247
        %v278 = vunpack.c.l.b16 %v248
        %v279 = vunpack.c.l.b16 %v249
        %v280 = vunpack.c.l.b16 %v250
        %v281 = vunpack.c.l.b16 %v251
        %v282 = vpack.c.b16 %v278, %v277
        %v283 = vpack.c.b16 %v280, %v279
        %v284 = vpack.c.b16 %v281, %v281
        %vm287 = vcmask 293888
        %v289 = vsel %vm287, %v268, 0
        %v292 = vsel %vm287, %v269, 0
        %v295 = vsel %vm287, %v270, 0
        %v298 = vsel %vm287, %v271, 0
        %vm300 = vcmask 1041408
        %v302 = vsel %vm300, %v284, 0
        %304 = vmatprep.subr.bf16.mxu0 0
        %305 = vmatpush1.bf16.msra.mxu0 %v282
        %306 = vmatprep.subr.bf16.mxu0 0
        %307 = vmatpush1.bf16.msra.mxu0 %v283
        %308 = vmatprep.subr.bf16.mxu0 0
        %309 = vmatpush1.bf16.msra.mxu0 %v302
        %310 = vmatprep.subr.bf16.mxu0 0
        %311 = vmatpush1.bf16.msra.mxu0 0
        %312 = vmatprep.subr.bf16.mxu0 0
        %313 = vmatpush1.bf16.msra.mxu0 0
        %314 = vmatprep.subr.bf16.mxu0 0
        %315 = vmatpush1.bf16.msra.mxu0 0
        %316 = vmatprep.subr.bf16.mxu0 0
        %317 = vmatpush1.bf16.msra.mxu0 0
        %318 = vmatprep.subr.bf16.mxu0 0
        %319 = vmatpush1.bf16.msra.mxu0 0
        %320 = vmatprep.subr.bf16.mxu0 0
        %321 = vmatpush1.bf16.msra.mxu0 0
        %322 = vmatprep.subr.bf16.mxu0 0
        %323 = vmatpush1.bf16.msra.mxu0 0
        %324 = vmatprep.subr.bf16.mxu0 0
        %325 = vmatpush1.bf16.msra.mxu0 0
        %326 = vmatprep.subr.bf16.mxu0 0
        %327 = vmatpush1.bf16.msra.mxu0 0
        %328 = vmatprep.subr.bf16.mxu0 0
        %329 = vmatpush1.bf16.msra.mxu0 0
        %330 = vmatprep.subr.bf16.mxu0 0
        %331 = vmatpush1.bf16.msra.mxu0 0
        %332 = vmatprep.subr.bf16.mxu0 0
        %333 = vmatpush1.bf16.msra.mxu0 0
        %334 = vmatprep.subr.bf16.mxu0 0
        %335 = vmatpush1.bf16.msra.mxu0 0
        %336 = vmatprep.mubr.bf16.mxu0 0
        %337 = vmatmul.mubr.bf16.gmra.mrb[0].mxu0 %v289
        %v338 = vpop.f32.mrb[0].mxu0
        %v339 = vadd.f32 0.0, %v338
        %v340 = vpop.f32.mrb[0].mxu0
        %v341 = vpop.f32.mrb[0].mxu0
        %v342 = vadd.f32 0.0, %v341
        %v343 = vpop.f32.mrb[0].mxu0
        %344 = vmatprep.mubr.bf16.mxu0 0
        %345 = vmatmul.mubr.bf16.gmra.mrb[0].mxu0 %v292
        %v346 = vpop.f32.mrb[0].mxu0
        %v347 = vadd.f32 0.0, %v346
        %v348 = vpop.f32.mrb[0].mxu0
        %v349 = vpop.f32.mrb[0].mxu0
        %v350 = vadd.f32 0.0, %v349
        %v351 = vpop.f32.mrb[0].mxu0
        %352 = vmatprep.mubr.bf16.mxu0 0
        %353 = vmatmul.mubr.bf16.gmra.mrb[0].mxu0 %v295
        %v354 = vpop.f32.mrb[0].mxu0
        %v355 = vadd.f32 0.0, %v354
        %v356 = vpop.f32.mrb[0].mxu0
        %v357 = vpop.f32.mrb[0].mxu0
        %v358 = vadd.f32 0.0, %v357
        %v359 = vpop.f32.mrb[0].mxu0
        %360 = vmatprep.mubr.bf16.mxu0 0
        %361 = vmatmul.mubr.bf16.gmra.mrb[0].mxu0 %v298
        %v362 = vpop.f32.mrb[0].mxu0
        %v363 = vadd.f32 0.0, %v362
        %v364 = vpop.f32.mrb[0].mxu0
        %v365 = vpop.f32.mrb[0].mxu0
        %v366 = vadd.f32 0.0, %v365
        %v367 = vpop.f32.mrb[0].mxu0
        %368 = vdwg.mxu0
        %v369 = vpack.c.bf16 %v342, %v339
        %v370 = vpack.c.bf16 %v350, %v347
        %v371 = vpack.c.bf16 %v358, %v355
        %v372 = vpack.c.bf16 %v366, %v363
        %v377 = vunpack.c.l.b16 %v369
        %v378 = vunpack.c.h.b16 %v369
        %v379 = vunpack.c.l.b16 %v370
        %v380 = vunpack.c.h.b16 %v370
        %v381 = vunpack.c.l.b16 %v371
        %v382 = vunpack.c.h.b16 %v371
        %v383 = vunpack.c.l.b16 %v372
        %v384 = vunpack.c.h.b16 %v372
        %v385 = vpack.c.b16 %v377, %v377
        %v386 = vpack.c.b16 %v378, %v378
        %v387 = vpack.c.b16 %v379, %v379
        %v388 = vpack.c.b16 %v380, %v380
        %v389 = vpack.c.b16 %v381, %v381
        %v390 = vpack.c.b16 %v382, %v382
        %v391 = vpack.c.b16 %v383, %v383
        %v392 = vpack.c.b16 %v384, %v384
        %401 = vst [vmem:[%s228] sm:$0xf] %v385
        %402 = vst [vmem:[%s228 + $0x4] sm:$0xf] %v386
        %403 = vst [vmem:[%s228 + $0x8] sm:$0xf] %v387
        %404 = vst [vmem:[%s228 + $0xc] sm:$0xf] %v388
        %405 = vst [vmem:[%s228 + $0x10] sm:$0xf] %v389
        %406 = vst [vmem:[%s228 + $0x14] sm:$0xf] %v390
        %407 = vst [vmem:[%s228 + $0x18] sm:$0xf] %v391
        %408 = vst [vmem:[%s228 + $0x1c] sm:$0xf] %v392
        %v409 = vadd.f32 %v339, %v342
        %v410 = vadd.f32 %v409, %v347
        %v411 = vadd.f32 %v410, %v350
        %v412 = vadd.f32 %v411, %v355
        %v413 = vadd.f32 %v412, %v358
        %v414 = vadd.f32 %v413, %v363
        %v415 = vadd.f32 %v414, %v366
        %v416 = vrot.slane %v415, 4
        %v417 = vadd.f32 %v415, %v416
        %v418 = vrot.slane %v417, 2
        %v419 = vadd.f32 %v417, %v418
        %v420 = vrot.slane %v419, 1
        %v421 = vadd.f32 %v419, %v420
        %v422 = vmul.f32 %v339, %v339
        %v423 = vmul.f32 %v342, %v342
        %v424 = vmul.f32 %v347, %v347
        %v425 = vmul.f32 %v350, %v350
        %v426 = vmul.f32 %v355, %v355
        %v427 = vmul.f32 %v358, %v358
        %v428 = vmul.f32 %v363, %v363
        %v429 = vmul.f32 %v366, %v366
        %v430 = vadd.f32 %v422, %v423
        %v431 = vadd.f32 %v430, %v424
        %v432 = vadd.f32 %v431, %v425
        %v433 = vadd.f32 %v432, %v426
        %v434 = vadd.f32 %v433, %v427
        %v435 = vadd.f32 %v434, %v428
        %v436 = vadd.f32 %v435, %v429
        %v437 = vrot.slane %v436, 4
        %v438 = vadd.f32 %v436, %v437
        %v439 = vrot.slane %v438, 2
        %v440 = vadd.f32 %v438, %v439
        %v441 = vrot.slane %v440, 1
        %v442 = vadd.f32 %v440, %v441
        %vm443 = vcmask 1040384
        %v444 = vsel %vm443, %v421, %v442
        %v445 = vsel %vm300, %v444, 0.0
        %446 = vst [vmem:[%s235] sm:$0xff] %v445
        %s447 = sand.u32 %s96, 1
        %s448 = scalar_lea.sflag [#allocation4], %s447
        %s449 = sand.u32 %s96, 1
        %s450 = smul.addr %s449, 32
        %s451 = scalar_lea.vmem [#allocation7], %s450
        %s452 = sand.u32 %s124, 1
        %s453 = scalar_lea.sflag [#allocation9], %s452
        %s454 = sand.u32 %s124, 1
        %s455 = smul.addr %s454, 8
        %s456 = scalar_lea.vmem [#allocation8], %s455
        // Predicated region
        $region37: #{_lambda_.3} parent=27 // pred_check
          %p457 = pneg %p106
        $region38: #{_lambda_.3} parent=27 // pred_check_branch
          %459 = sbr.rel (%p457) target = $region40
        $region39: #{_lambda_.3} parent=27 // pred_region
          %s460 = smul.u32 4, %s30
          %s462 = ssub.s32 512, 512
          %463 = vsyncadd %s448, %s462
          %s464 = smul.addr %s460, 2
          %s465 = smul.addr %s29, 32
          %s466 = sadd.s32 %s464, %s465
          %s467 = smul.addr %s466, 64
          %s468 = scalar_lea.hbm %s2, %s467
          %s469 = sshll.u32 %s451, 4
          %s470 = int_to_ptr.vmem [resolvable:$true] %s469
          %475 = dma.vmem_to_hbm [thread:$0]  %s470, 512, %s468, %s448, 64, 64, 4
        $region40: #{_lambda_.3} parent=27 // pred_fallthru
          _
        // Predicated region
        $region41: #{_lambda_.3} parent=27 // pred_check
          %p476 = pneg %p134
        $region42: #{_lambda_.3} parent=27 // pred_check_branch
          %478 = sbr.rel (%p476) target = $region44
        $region43: #{_lambda_.3} parent=27 // pred_region
          %s480 = ssub.s32 128, 128
          %481 = vsyncadd %s453, %s480
          %s482 = smul.addr %s29, 4
          %s483 = sadd.s32 %s30, %s482
          %s484 = smul.addr %s483, 128
          %s485 = scalar_lea.hbm %s3, %s484
          %s487 = sshll.u32 %s456, 4
          %s488 = int_to_ptr.vmem [resolvable:$true] %s487
          %490 = dma.vmem_to_hbm [thread:$0]  %s488, 128, %s485, %s453
        $region44: #{_lambda_.3} parent=27 // pred_fallthru
          _
      $region28: #{_lambda_.3} parent=5 // pred_fallthru
        _
      %p491 = scmp.le.s32.totalorder 2, %s20
      // Predicated region
      $region45: #{_lambda_.3} parent=5 // pred_check
        %p492 = pneg %p491
      $region46: #{_lambda_.3} parent=5 // pred_check_branch
        %494 = sbr.rel (%p492) target = $region48
      $region47: #{_lambda_.3} parent=5 // pred_region
        %s495 = ssub.s32 %s20, 2
        // Predicated region
        $region49: #{_lambda_.3} parent=47 // pred_check
          %p496 = pneg %p112
        $region50: #{_lambda_.3} parent=47 // pred_check_branch
          %498 = sbr.rel (%p496) target = $region52
        $region51: #{_lambda_.3} parent=47 // pred_region
          %s499 = sand.u32 %s97, 1
          %s500 = scalar_lea.sflag [#allocation4], %s499
          %s501 = sand.u32 %s97, 1
          %s502 = smul.addr %s501, 32
          %s503 = scalar_lea.vmem [#allocation7], %s502
          %504 = dma.done %s500, 512
        $region52: #{_lambda_.3} parent=47 // pred_fallthru
          _
        // Predicated region
        $region53: #{_lambda_.3} parent=47 // pred_check
          %p505 = pneg %p140
        $region54: #{_lambda_.3} parent=47 // pred_check_branch
          %507 = sbr.rel (%p505) target = $region56
        $region55: #{_lambda_.3} parent=47 // pred_region
          %s508 = sand.u32 %s125, 1
          %s509 = scalar_lea.sflag [#allocation9], %s508
          %s510 = sand.u32 %s125, 1
          %s511 = smul.addr %s510, 8
          %s512 = scalar_lea.vmem [#allocation8], %s511
          %513 = dma.done %s509, 128
        $region56: #{_lambda_.3} parent=47 // pred_fallthru
          _
      $region48: #{_lambda_.3} parent=5 // pred_fallthru
        _
    $region6: #{_lambda_.3} parent=1 // loop_footer
      %s24 = sadd.s32 1, %s20
    $region7: #{_lambda_.3} parent=1 // loop_footer_branch
      %19 = sbr.rel target = $region3
    $region8: #{_lambda_.3} parent=1 // loop_exit
      _
    %514 = vsyncpa [#allocation3], 1
    %s515 = scalar_lea.sflag [#allocation3], 1
    %516 = vsyncpa %s515, 1
    %517 = vsyncpa [#allocation6], 1
    %518 = vsyncpa [#allocation4], 1
    %s519 = scalar_lea.sflag [#allocation4], 1
    %520 = vsyncpa %s519, 1
    %521 = vsyncpa [#allocation9], 1
    %s522 = scalar_lea.sflag [#allocation9], 1
    %523 = vsyncpa %s522, 1

// kernel: _lambda_.5
$region0: #{_lambda_.5}
  #allocation0 [shape = 'u32[]', space=smem, size = 0x4, offset = 0x4, fixed_abs, tag = 'smem constant byte address 0x4 - core index']
  #allocation1 [shape = 'u32[144,128]{1,0:T(1,128)}', space=vmem, size = 0x12000, scoped, tag = 'internal scratch']
  %s0 = inlined_call_operand.hbm [shape: bf16[2,16,16,128], index: 0, kind: input, shape index: {}]
  %s1 = inlined_call_operand.hbm [shape: f32[1,128], index: 1, kind: input, shape index: {}]
  %s2 = inlined_call_operand.hbm [shape: f32[1,128], index: 2, kind: input, shape index: {}]
  %s3 = inlined_call_operand.hbm [shape: bf16[2,16,16,128], index: 3, kind: output, shape index: {}]
  %s4 = sld [smem:[#allocation0]]
  $region57: #{_lambda_.5} parent=0
    _
  %s6 = ssub.s32 1, %s4
  %s7 = scalar_select 0, %s6, %s4
  $region1: #{_lambda_.5} parent=0
    #allocation2 [shape = 'u8[32768]{0}', space=vmem, size = 0x8000, scoped, tag = 'input window, operand 0']
    #allocation3 [shape = 's32[2]{0}', space=sflag, size = 0x8, scoped, tag = 'scoped memory for _lambda_.5']
    #allocation4 [shape = 's32[2]{0}', space=sflag, size = 0x8, scoped, tag = 'scoped memory for _lambda_.5']
    #allocation5 [shape = 'u8[512]{0}', space=vmem, size = 0x400, scoped, tag = 'input window, operand 1, single buffered']
    #allocation6 [shape = 's32[1]{0}', space=sflag, size = 0x4, scoped, tag = 'scoped memory for _lambda_.5']
    #allocation7 [shape = 'u8[512]{0}', space=vmem, size = 0x400, scoped, tag = 'input window, operand 2, single buffered']
    #allocation8 [shape = 'u8[32768]{0}', space=vmem, size = 0x8000, scoped, tag = 'output window, operand 0']
    %8 = vsyncpa [#allocation3], 0
    %s9 = scalar_lea.sflag [#allocation3], 1
    %10 = vsyncpa %s9, 0
    %11 = vsyncpa [#allocation6], 0
    %12 = vsyncpa [#allocation4], 0
    %s13 = scalar_lea.sflag [#allocation4], 1
    %14 = vsyncpa %s13, 0
    loop: start=0, step=1, limit=10
    $region2: #{_lambda_.5} parent=1 // loop_pre_header
      _
    $region3: #{_lambda_.5} parent=1 // loop_header
      %s16 = sphi 0, %s20
      %p17 = scmp.ge.s32.totalorder %s16, 10
      %s23 = sphi 0, %s35
      %s24 = sphi 0, %s31
      %s25 = sphi 0, %s23
      %s26 = sphi 0, %s24
      %s27 = sphi 0, %s25
      %s28 = sphi 0, %s26
      %s40 = sphi 0, %s42
      %s43 = sphi 0, %s40
      %s44 = sphi 0, %s43
      %s60 = sphi 0, %s44
      %s64 = sphi 0, %s64
      %s66 = sphi 0, %s64
      %s67 = sphi 0, %s66
      %s81 = sphi 0, %s67
      %s85 = sphi 0, %s85
      %s87 = sphi 0, %s85
      %s88 = sphi 0, %s87
      %s102 = sphi 0, %s88
      %s110 = sphi 0, %s112
      %s113 = sphi 0, %s110
      %s114 = sphi 0, %s113
      %s130 = sphi 0, %s114
    $region4: #{_lambda_.5} parent=1 // loop_header_branch
      %19 = sbr.rel (%p17) target = $region8
    $region5: #{_lambda_.5} parent=1 // loop_body
      %s21 = ssub.s32 %s16, 1
      %s22 = ssub.s32 %s16, 2
      %s29 = sadd.s32 1, %s24
      %p30 = scmp.ge.s32.totalorder %s29, 4
      %s31 = scalar_select %p30, 0, %s29
      %s32 = sadd.s32 1, %s23
      %s33 = scalar_select %p30, %s32, %s23
      %p34 = scmp.ge.s32.totalorder %s33, 2
      %s35 = scalar_select %p34, 0, %s33
      %s36 = ssub.s32 %s23, %s35
      %s37 = ssub.s32 %s24, %s31
      %s38 = sor.u32 %s36, %s37
      %p39 = scmp.eq.s32.totalorder %s38, 0
      %s41 = sadd.s32 %s40, 1
      %s42 = scalar_select %p39, %s40, %s41
      %p45 = pneg %p39
      %p46 = scmp.eq.s32.totalorder %s16, 7
      %p47 = por %p45, %p46
      %p48 = scmp.ne.s32.totalorder %s40, %s43
      %p49 = scmp.eq.s32.totalorder %s16, 0
      %p50 = por %p48, %p49
      %p51 = scmp.ne.s32.totalorder %s40, %s43
      %p52 = scmp.eq.s32.totalorder %s21, 7
      %p53 = por %p51, %p52
      %p54 = scmp.ne.s32.totalorder %s43, %s44
      %p55 = scmp.eq.s32.totalorder %s21, 0
      %p56 = por %p54, %p55
      %p57 = scmp.ne.s32.totalorder %s43, %s44
      %p58 = scmp.eq.s32.totalorder %s22, 7
      %p59 = por %p57, %p58
      %p61 = scmp.ne.s32.totalorder %s44, %s60
      %p62 = scmp.eq.s32.totalorder %s22, 0
      %p63 = por %p61, %p62
      %s65 = sadd.s32 %s64, 1
      %p68 = scmp.eq.s32.totalorder %s16, 7
      %p69 = scmp.ne.s32.totalorder %s64, %s66
      %p70 = scmp.eq.s32.totalorder %s16, 0
      %p71 = por %p69, %p70
      %p72 = scmp.ne.s32.totalorder %s64, %s66
      %p73 = scmp.eq.s32.totalorder %s21, 7
      %p74 = por %p72, %p73
      %p75 = scmp.ne.s32.totalorder %s66, %s67
      %p76 = scmp.eq.s32.totalorder %s21, 0
      %p77 = por %p75, %p76
      %p78 = scmp.ne.s32.totalorder %s66, %s67
      %p79 = scmp.eq.s32.totalorder %s22, 7
      %p80 = por %p78, %p79
      %p82 = scmp.ne.s32.totalorder %s67, %s81
      %p83 = scmp.eq.s32.totalorder %s22, 0
      %p84 = por %p82, %p83
      %s86 = sadd.s32 %s85, 1
      %p89 = scmp.eq.s32.totalorder %s16, 7
      %p90 = scmp.ne.s32.totalorder %s85, %s87
      %p91 = scmp.eq.s32.totalorder %s16, 0
      %p92 = por %p90, %p91
      %p93 = scmp.ne.s32.totalorder %s85, %s87
      %p94 = scmp.eq.s32.totalorder %s21, 7
      %p95 = por %p93, %p94
      %p96 = scmp.ne.s32.totalorder %s87, %s88
      %p97 = scmp.eq.s32.totalorder %s21, 0
      %p98 = por %p96, %p97
      %p99 = scmp.ne.s32.totalorder %s87, %s88
      %p100 = scmp.eq.s32.totalorder %s22, 7
      %p101 = por %p99, %p100
      %p103 = scmp.ne.s32.totalorder %s88, %s102
      %p104 = scmp.eq.s32.totalorder %s22, 0
      %p105 = por %p103, %p104
      %s106 = ssub.s32 %s23, %s35
      %s107 = ssub.s32 %s24, %s31
      %s108 = sor.u32 %s106, %s107
      %p109 = scmp.eq.s32.totalorder %s108, 0
      %s111 = sadd.s32 %s110, 1
      %s112 = scalar_select %p109, %s110, %s111
      %p115 = pneg %p109
      %p116 = scmp.eq.s32.totalorder %s16, 7
      %p117 = por %p115, %p116
      %p118 = scmp.ne.s32.totalorder %s110, %s113
      %p119 = scmp.eq.s32.totalorder %s16, 0
      %p120 = por %p118, %p119
      %p121 = scmp.ne.s32.totalorder %s110, %s113
      %p122 = scmp.eq.s32.totalorder %s21, 7
      %p123 = por %p121, %p122
      %p124 = scmp.ne.s32.totalorder %s113, %s114
      %p125 = scmp.eq.s32.totalorder %s21, 0
      %p126 = por %p124, %p125
      %p127 = scmp.ne.s32.totalorder %s113, %s114
      %p128 = scmp.eq.s32.totalorder %s22, 7
      %p129 = por %p127, %p128
      %p131 = scmp.ne.s32.totalorder %s114, %s130
      %p132 = scmp.eq.s32.totalorder %s22, 0
      %p133 = por %p131, %p132
      %p134 = scmp.le.s32.totalorder 1, %s16
      %p135 = scmp.lt.s32.totalorder %s16, 9
      %p136 = pnand %p134, %p135
      %p137 = pneg %p136
      // Predicated region
      $region9: #{_lambda_.5} parent=5 // pred_check
        _
      $region10: #{_lambda_.5} parent=5 // pred_check_branch
        %139 = sbr.rel (%p136) target = $region12
      $region11: #{_lambda_.5} parent=5 // pred_region
        %s140 = ssub.s32 %s16, 1
        // Predicated region
        $region13: #{_lambda_.5} parent=11 // pred_check
          %p141 = pneg %p77
        $region14: #{_lambda_.5} parent=11 // pred_check_branch
          %143 = sbr.rel (%p141) target = $region16
        $region15: #{_lambda_.5} parent=11 // pred_region
          %s145 = ssub.s32 16, 16
          %146 = vsyncadd [#allocation6], %s145
          %s148 = sshll.u32 [#allocation5], 4
          %s149 = int_to_ptr.vmem [resolvable:$true] %s148
          %151 = dma.hbm_to_vmem [thread:$0]  %s1, 16, %s149, [#allocation6]
        $region16: #{_lambda_.5} parent=11 // pred_fallthru
          _
        // Predicated region
        $region17: #{_lambda_.5} parent=11 // pred_check
          %p152 = pneg %p98
        $region18: #{_lambda_.5} parent=11 // pred_check_branch
          %154 = sbr.rel (%p152) target = $region20
        $region19: #{_lambda_.5} parent=11 // pred_region
          %s156 = ssub.s32 16, 16
          %157 = vsyncadd [#allocation6], %s156
          %s159 = sshll.u32 [#allocation7], 4
          %s160 = int_to_ptr.vmem [resolvable:$true] %s159
          %162 = dma.hbm_to_vmem [thread:$0]  %s2, 16, %s160, [#allocation6]
        $region20: #{_lambda_.5} parent=11 // pred_fallthru
          _
      $region12: #{_lambda_.5} parent=5 // pred_fallthru
        _
      %p163 = scmp.lt.s32.totalorder %s16, 8
      // Predicated region
      $region21: #{_lambda_.5} parent=5 // pred_check
        %p164 = pneg %p163
      $region22: #{_lambda_.5} parent=5 // pred_check_branch
        %166 = sbr.rel (%p164) target = $region24
      $region23: #{_lambda_.5} parent=5 // pred_region
        // Predicated region
        $region25: #{_lambda_.5} parent=23 // pred_check
          %p167 = pneg %p50
        $region26: #{_lambda_.5} parent=23 // pred_check_branch
          %169 = sbr.rel (%p167) target = $region28
        $region27: #{_lambda_.5} parent=23 // pred_region
          %s170 = sand.u32 %s40, 1
          %s171 = scalar_lea.sflag [#allocation3], %s170
          %s172 = sand.u32 %s40, 1
          %s173 = smul.addr %s172, 32
          %s174 = scalar_lea.vmem [#allocation2], %s173
          %s175 = smul.u32 4, %s24
          %s177 = ssub.s32 512, 512
          %178 = vsyncadd %s171, %s177
          %s179 = smul.addr %s175, 2
          %s180 = smul.addr %s23, 32
          %s181 = sadd.s32 %s179, %s180
          %s182 = smul.addr %s181, 64
          %s183 = scalar_lea.hbm %s0, %s182
          %s184 = sshll.u32 %s174, 4
          %s185 = int_to_ptr.vmem [resolvable:$true] %s184
          %190 = dma.hbm_to_vmem [thread:$0]  %s183, 512, %s185, %s171, 64, 64, 4
        $region28: #{_lambda_.5} parent=23 // pred_fallthru
          _
      $region24: #{_lambda_.5} parent=5 // pred_fallthru
        _
      %p191 = scmp.le.s32.totalorder 1, %s16
      %p192 = scmp.lt.s32.totalorder %s16, 9
      %p193 = pnand %p191, %p192
      %p194 = pneg %p193
      // Predicated region
      $region29: #{_lambda_.5} parent=5 // pred_check
        _
      $region30: #{_lambda_.5} parent=5 // pred_check_branch
        %196 = sbr.rel (%p193) target = $region32
      $region31: #{_lambda_.5} parent=5 // pred_region
        %s197 = ssub.s32 %s16, 1
        %s198 = sand.u32 %s43, 1
        %s199 = scalar_lea.sflag [#allocation3], %s198
        %s200 = sand.u32 %s43, 1
        %s201 = smul.addr %s200, 32
        %s202 = scalar_lea.vmem [#allocation2], %s201
        // Predicated region
        $region33: #{_lambda_.5} parent=31 // pred_check
          %p203 = pneg %p56
        $region34: #{_lambda_.5} parent=31 // pred_check_branch
          %205 = sbr.rel (%p203) target = $region36
        $region35: #{_lambda_.5} parent=31 // pred_region
          %206 = dma.done %s199, 512
        $region36: #{_lambda_.5} parent=31 // pred_fallthru
          _
        // Predicated region
        $region37: #{_lambda_.5} parent=31 // pred_check
          %p207 = pneg %p77
        $region38: #{_lambda_.5} parent=31 // pred_check_branch
          %209 = sbr.rel (%p207) target = $region40
        $region39: #{_lambda_.5} parent=31 // pred_region
          %210 = dma.done [#allocation6], 16
        $region40: #{_lambda_.5} parent=31 // pred_fallthru
          _
        // Predicated region
        $region41: #{_lambda_.5} parent=31 // pred_check
          %p211 = pneg %p98
        $region42: #{_lambda_.5} parent=31 // pred_check_branch
          %213 = sbr.rel (%p211) target = $region44
        $region43: #{_lambda_.5} parent=31 // pred_region
          %214 = dma.done [#allocation6], 16
        $region44: #{_lambda_.5} parent=31 // pred_fallthru
          _
        %s215 = sand.u32 %s43, 1
        %s216 = scalar_lea.sflag [#allocation3], %s215
        %s217 = sand.u32 %s43, 1
        %s218 = smul.addr %s217, 32
        %s219 = scalar_lea.vmem [#allocation2], %s218
        %p220 = pneg %p56
        %p221 = pneg %p53
        %p222 = pneg %p77
        %p223 = pneg %p74
        %p224 = pneg %p98
        %p225 = pneg %p95
        %p226 = pneg %p126
        %p227 = pneg %p123
        %s228 = sand.u32 %s113, 1
        %s229 = scalar_lea.sflag [#allocation4], %s228
        %s230 = sand.u32 %s113, 1
        %s231 = smul.addr %s230, 32
        %s232 = scalar_lea.vmem [#allocation8], %s231
        %s233 = smul.u32 4, %s26
        %s234 = smul.u32 4, %s26
        %v235 = vld [vmem:[#allocation5] sm:$0x1]
        %v236 = vld [vmem:[#allocation7] sm:$0x1]
        %v237 = vld [vmem:[%s202] sm:$0xf]
        %v238 = vld [vmem:[%s202 + $0x4] sm:$0xf]
        %v239 = vld [vmem:[%s202 + $0x8] sm:$0xf]
        %v240 = vld [vmem:[%s202 + $0xc] sm:$0xf]
        %v241 = vld [vmem:[%s202 + $0x10] sm:$0xf]
        %v242 = vld [vmem:[%s202 + $0x14] sm:$0xf]
        %v243 = vld [vmem:[%s202 + $0x18] sm:$0xf]
        %v244 = vld [vmem:[%s202 + $0x1c] sm:$0xf]
        %v245 = vunpack.c.l.bf16 %v237
        %v246 = vunpack.c.l.bf16 %v238
        %v247 = vunpack.c.l.bf16 %v239
        %v248 = vunpack.c.l.bf16 %v240
        %v249 = vunpack.c.l.bf16 %v241
        %v250 = vunpack.c.l.bf16 %v242
        %v251 = vunpack.c.l.bf16 %v243
        %v252 = vunpack.c.l.bf16 %v244
        %v254 = vlaneseq
        %v255 = vshrl.u32 %v254, 7
        %v256 = vsub.s32 0, %v255
        %v257 = vrot.slane %v235, %v256
        %v259 = vmul.f32 %v245, %v257
        %v260 = vmul.f32 %v246, %v257
        %v261 = vmul.f32 %v247, %v257
        %v262 = vmul.f32 %v248, %v257
        %v263 = vmul.f32 %v249, %v257
        %v264 = vmul.f32 %v250, %v257
        %v265 = vmul.f32 %v251, %v257
        %v266 = vmul.f32 %v252, %v257
        %v268 = vlaneseq
        %v269 = vshrl.u32 %v268, 7
        %v270 = vsub.s32 0, %v269
        %v271 = vrot.slane %v236, %v270
        %v273 = vadd.f32 %v259, %v271
        %v274 = vadd.f32 %v260, %v271
        %v275 = vadd.f32 %v261, %v271
        %v276 = vadd.f32 %v262, %v271
        %v277 = vadd.f32 %v263, %v271
        %v278 = vadd.f32 %v264, %v271
        %v279 = vadd.f32 %v265, %v271
        %v280 = vadd.f32 %v266, %v271
        %v281 = vmax.f32 %v273, 0.0
        %v282 = vmax.f32 %v274, 0.0
        %v283 = vmax.f32 %v275, 0.0
        %v284 = vmax.f32 %v276, 0.0
        %v285 = vmax.f32 %v277, 0.0
        %v286 = vmax.f32 %v278, 0.0
        %v287 = vmax.f32 %v279, 0.0
        %v288 = vmax.f32 %v280, 0.0
        %v289 = vpack.c.bf16 %v282, %v281
        %v290 = vpack.c.bf16 %v284, %v283
        %v291 = vpack.c.bf16 %v286, %v285
        %v292 = vpack.c.bf16 %v288, %v287
        %v297 = vunpack.c.l.b16 %v289
        %v298 = vunpack.c.h.b16 %v289
        %v299 = vunpack.c.l.b16 %v290
        %v300 = vunpack.c.h.b16 %v290
        %v301 = vunpack.c.l.b16 %v291
        %v302 = vunpack.c.h.b16 %v291
        %v303 = vunpack.c.l.b16 %v292
        %v304 = vunpack.c.h.b16 %v292
        %v305 = vpack.c.b16 %v297, %v297
        %v306 = vpack.c.b16 %v298, %v298
        %v307 = vpack.c.b16 %v299, %v299
        %v308 = vpack.c.b16 %v300, %v300
        %v309 = vpack.c.b16 %v301, %v301
        %v310 = vpack.c.b16 %v302, %v302
        %v311 = vpack.c.b16 %v303, %v303
        %v312 = vpack.c.b16 %v304, %v304
        %321 = vst [vmem:[%s232] sm:$0xf] %v305
        %322 = vst [vmem:[%s232 + $0x4] sm:$0xf] %v306
        %323 = vst [vmem:[%s232 + $0x8] sm:$0xf] %v307
        %324 = vst [vmem:[%s232 + $0xc] sm:$0xf] %v308
        %325 = vst [vmem:[%s232 + $0x10] sm:$0xf] %v309
        %326 = vst [vmem:[%s232 + $0x14] sm:$0xf] %v310
        %327 = vst [vmem:[%s232 + $0x18] sm:$0xf] %v311
        %328 = vst [vmem:[%s232 + $0x1c] sm:$0xf] %v312
        %s329 = sand.u32 %s113, 1
        %s330 = scalar_lea.sflag [#allocation4], %s329
        %s331 = sand.u32 %s113, 1
        %s332 = smul.addr %s331, 32
        %s333 = scalar_lea.vmem [#allocation8], %s332
        // Predicated region
        $region45: #{_lambda_.5} parent=31 // pred_check
          %p334 = pneg %p123
        $region46: #{_lambda_.5} parent=31 // pred_check_branch
          %336 = sbr.rel (%p334) target = $region48
        $region47: #{_lambda_.5} parent=31 // pred_region
          %s337 = smul.u32 4, %s26
          %s339 = ssub.s32 512, 512
          %340 = vsyncadd %s330, %s339
          %s341 = smul.addr %s337, 2
          %s342 = smul.addr %s25, 32
          %s343 = sadd.s32 %s341, %s342
          %s344 = smul.addr %s343, 64
          %s345 = scalar_lea.hbm %s3, %s344
          %s346 = sshll.u32 %s333, 4
          %s347 = int_to_ptr.vmem [resolvable:$true] %s346
          %352 = dma.vmem_to_hbm [thread:$0]  %s347, 512, %s345, %s330, 64, 64, 4
        $region48: #{_lambda_.5} parent=31 // pred_fallthru
          _
      $region32: #{_lambda_.5} parent=5 // pred_fallthru
        _
      %p353 = scmp.le.s32.totalorder 2, %s16
      // Predicated region
      $region49: #{_lambda_.5} parent=5 // pred_check
        %p354 = pneg %p353
      $region50: #{_lambda_.5} parent=5 // pred_check_branch
        %356 = sbr.rel (%p354) target = $region52
      $region51: #{_lambda_.5} parent=5 // pred_region
        %s357 = ssub.s32 %s16, 2
        // Predicated region
        $region53: #{_lambda_.5} parent=51 // pred_check
          %p358 = pneg %p129
        $region54: #{_lambda_.5} parent=51 // pred_check_branch
          %360 = sbr.rel (%p358) target = $region56
        $region55: #{_lambda_.5} parent=51 // pred_region
          %s361 = sand.u32 %s114, 1
          %s362 = scalar_lea.sflag [#allocation4], %s361
          %s363 = sand.u32 %s114, 1
          %s364 = smul.addr %s363, 32
          %s365 = scalar_lea.vmem [#allocation8], %s364
          %366 = dma.done %s362, 512
        $region56: #{_lambda_.5} parent=51 // pred_fallthru
          _
      $region52: #{_lambda_.5} parent=5 // pred_fallthru
        _
    $region6: #{_lambda_.5} parent=1 // loop_footer
      %s20 = sadd.s32 1, %s16
    $region7: #{_lambda_.5} parent=1 // loop_footer_branch
      %15 = sbr.rel target = $region3
    $region8: #{_lambda_.5} parent=1 // loop_exit
      _
    %367 = vsyncpa [#allocation3], 1
    %s368 = scalar_lea.sflag [#allocation3], 1
    %369 = vsyncpa %s368, 1
    %370 = vsyncpa [#allocation6], 1
    %371 = vsyncpa [#allocation4], 1
    %s372 = scalar_lea.sflag [#allocation4], 1
    %373 = vsyncpa %s372, 1

// kernel: _lambda_.4
$region0: #{_lambda_.4}
  #allocation0 [shape = 'u32[]', space=smem, size = 0x4, offset = 0x4, fixed_abs, tag = 'smem constant byte address 0x4 - core index']
  #allocation1 [shape = 'u32[144,128]{1,0:T(1,128)}', space=vmem, size = 0x12000, scoped, tag = 'internal scratch']
  %s0 = inlined_call_operand.hbm [shape: bf16[2,16,16,128], index: 0, kind: input, shape index: {}, may-alias: {0,1,2}]
  %s1 = inlined_call_operand.hbm [shape: bf16[2,16,16,128], index: 1, kind: input, shape index: {}, may-alias: {0,1,2}]
  %s2 = inlined_call_operand.hbm [shape: bf16[2,16,16,128], index: 2, kind: input, shape index: {}, may-alias: {0,1,2}]
  %s3 = inlined_call_operand.hbm [shape: bf16[3,384,128], index: 3, kind: input, shape index: {}]
  %s4 = inlined_call_operand.hbm [shape: f32[1,128], index: 4, kind: input, shape index: {}]
  %s5 = inlined_call_operand.hbm [shape: f32[1,128], index: 5, kind: input, shape index: {}]
  %s6 = inlined_call_operand.hbm [shape: bf16[2,16,16,128], index: 6, kind: output, shape index: {0}]
  %s7 = inlined_call_operand.hbm [shape: f32[2,4,8,128], index: 7, kind: output, shape index: {1}]
  %8 = xla_tuple %s6, %s7
  %s9 = sld [smem:[#allocation0]]
  $region89: #{_lambda_.4} parent=0
    _
  %s11 = ssub.s32 1, %s9
  %s12 = scalar_select 0, %s11, %s9
  $region1: #{_lambda_.4} parent=0
    #allocation2 [shape = 'u8[32768]{0}', space=vmem, size = 0x8000, scoped, tag = 'input window, operand 0']
    #allocation3 [shape = 's32[2]{0}', space=sflag, size = 0x8, scoped, tag = 'scoped memory for _lambda_.4']
    #allocation4 [shape = 's32[2]{0}', space=sflag, size = 0x8, scoped, tag = 'scoped memory for _lambda_.4']
    #allocation5 [shape = 'u8[16384]{0}', space=vmem, size = 0x4000, scoped, tag = 'input window, operand 1']
    #allocation6 [shape = 's32[2]{0}', space=sflag, size = 0x8, scoped, tag = 'scoped memory for _lambda_.4']
    #allocation7 [shape = 'u8[16384]{0}', space=vmem, size = 0x4000, scoped, tag = 'input window, operand 2']
    #allocation8 [shape = 'u8[294912]{0}', space=vmem, size = 0x48000, scoped, tag = 'input window, operand 3, single buffered']
    #allocation9 [shape = 's32[1]{0}', space=sflag, size = 0x4, scoped, tag = 'scoped memory for _lambda_.4']
    #allocation10 [shape = 'u8[512]{0}', space=vmem, size = 0x400, scoped, tag = 'input window, operand 4, single buffered']
    #allocation11 [shape = 'u8[512]{0}', space=vmem, size = 0x400, scoped, tag = 'input window, operand 5, single buffered']
    #allocation12 [shape = 's32[1]{0}', space=sflag, size = 0x4, scoped, tag = 'scoped memory for _lambda_.4']
    #allocation13 [shape = 'u8[32768]{0}', space=vmem, size = 0x8000, scoped, tag = 'output window, operand 0']
    #allocation14 [shape = 'u8[8192]{0}', space=vmem, size = 0x2000, scoped, tag = 'output window, operand 1']
    #allocation15 [shape = 's32[2]{0}', space=sflag, size = 0x8, scoped, tag = 'scoped memory for _lambda_.4']
    %13 = vsyncpa [#allocation3], 0
    %s14 = scalar_lea.sflag [#allocation3], 1
    %15 = vsyncpa %s14, 0
    %16 = vsyncpa [#allocation6], 0
    %s17 = scalar_lea.sflag [#allocation6], 1
    %18 = vsyncpa %s17, 0
    %19 = vsyncpa [#allocation9], 0
    %20 = vsyncpa [#allocation12], 0
    %21 = vsyncpa [#allocation4], 0
    %s22 = scalar_lea.sflag [#allocation4], 1
    %23 = vsyncpa %s22, 0
    %24 = vsyncpa [#allocation15], 0
    %s25 = scalar_lea.sflag [#allocation15], 1
    %26 = vsyncpa %s25, 0
    loop: start=0, step=1, limit=10
    $region2: #{_lambda_.4} parent=1 // loop_pre_header
      _
    $region3: #{_lambda_.4} parent=1 // loop_header
      %s28 = sphi 0, %s32
      %p29 = scmp.ge.s32.totalorder %s28, 10
      %s35 = sphi 0, %s47
      %s36 = sphi 0, %s43
      %s37 = sphi 0, %s35
      %s38 = sphi 0, %s36
      %s39 = sphi 0, %s37
      %s40 = sphi 0, %s38
      %s52 = sphi 0, %s54
      %s55 = sphi 0, %s52
      %s56 = sphi 0, %s55
      %s72 = sphi 0, %s56
      %s88 = sphi 0, %s90
      %s91 = sphi 0, %s88
      %s92 = sphi 0, %s91
      %s108 = sphi 0, %s92
      %s124 = sphi 0, %s126
      %s127 = sphi 0, %s124
      %s128 = sphi 0, %s127
      %s144 = sphi 0, %s128
      %s148 = sphi 0, %s148
      %s150 = sphi 0, %s148
      %s151 = sphi 0, %s150
      %s165 = sphi 0, %s151
      %s169 = sphi 0, %s169
      %s171 = sphi 0, %s169
      %s172 = sphi 0, %s171
      %s186 = sphi 0, %s172
      %s190 = sphi 0, %s190
      %s192 = sphi 0, %s190
      %s193 = sphi 0, %s192
      %s207 = sphi 0, %s193
      %s215 = sphi 0, %s217
      %s218 = sphi 0, %s215
      %s219 = sphi 0, %s218
      %s235 = sphi 0, %s219
      %s243 = sphi 0, %s245
      %s246 = sphi 0, %s243
      %s247 = sphi 0, %s246
      %s263 = sphi 0, %s247
    $region4: #{_lambda_.4} parent=1 // loop_header_branch
      %31 = sbr.rel (%p29) target = $region8
    $region5: #{_lambda_.4} parent=1 // loop_body
      %s33 = ssub.s32 %s28, 1
      %s34 = ssub.s32 %s28, 2
      %s41 = sadd.s32 1, %s36
      %p42 = scmp.ge.s32.totalorder %s41, 4
      %s43 = scalar_select %p42, 0, %s41
      %s44 = sadd.s32 1, %s35
      %s45 = scalar_select %p42, %s44, %s35
      %p46 = scmp.ge.s32.totalorder %s45, 2
      %s47 = scalar_select %p46, 0, %s45
      %s48 = ssub.s32 %s35, %s47
      %s49 = ssub.s32 %s36, %s43
      %s50 = sor.u32 %s48, %s49
      %p51 = scmp.eq.s32.totalorder %s50, 0
      %s53 = sadd.s32 %s52, 1
      %s54 = scalar_select %p51, %s52, %s53
      %p57 = pneg %p51
      %p58 = scmp.eq.s32.totalorder %s28, 7
      %p59 = por %p57, %p58
      %p60 = scmp.ne.s32.totalorder %s52, %s55
      %p61 = scmp.eq.s32.totalorder %s28, 0
      %p62 = por %p60, %p61
      %p63 = scmp.ne.s32.totalorder %s52, %s55
      %p64 = scmp.eq.s32.totalorder %s33, 7
      %p65 = por %p63, %p64
      %p66 = scmp.ne.s32.totalorder %s55, %s56
      %p67 = scmp.eq.s32.totalorder %s33, 0
      %p68 = por %p66, %p67
      %p69 = scmp.ne.s32.totalorder %s55, %s56
      %p70 = scmp.eq.s32.totalorder %s34, 7
      %p71 = por %p69, %p70
      %p73 = scmp.ne.s32.totalorder %s56, %s72
      %p74 = scmp.eq.s32.totalorder %s34, 0
      %p75 = por %p73, %p74
      %s76 = smul.u32 %s36, 2
      %s77 = ssub.s32 %s76, 1
      %p78 = scmp.gt.s32.totalorder %s77, 0
      %s79 = scalar_select %p78, %s77, 0
      %s80 = smul.u32 %s43, 2
      %s81 = ssub.s32 %s80, 1
      %p82 = scmp.gt.s32.totalorder %s81, 0
      %s83 = scalar_select %p82, %s81, 0
      %s84 = ssub.s32 %s35, %s47
      %s85 = ssub.s32 %s79, %s83
      %s86 = sor.u32 %s84, %s85
      %p87 = scmp.eq.s32.totalorder %s86, 0
      %s89 = sadd.s32 %s88, 1
      %s90 = scalar_select %p87, %s88, %s89
      %p93 = pneg %p87
      %p94 = scmp.eq.s32.totalorder %s28, 7
      %p95 = por %p93, %p94
      %p96 = scmp.ne.s32.totalorder %s88, %s91
      %p97 = scmp.eq.s32.totalorder %s28, 0
      %p98 = por %p96, %p97
      %p99 = scmp.ne.s32.totalorder %s88, %s91
      %p100 = scmp.eq.s32.totalorder %s33, 7
      %p101 = por %p99, %p100
      %p102 = scmp.ne.s32.totalorder %s91, %s92
      %p103 = scmp.eq.s32.totalorder %s33, 0
      %p104 = por %p102, %p103
      %p105 = scmp.ne.s32.totalorder %s91, %s92
      %p106 = scmp.eq.s32.totalorder %s34, 7
      %p107 = por %p105, %p106
      %p109 = scmp.ne.s32.totalorder %s92, %s108
      %p110 = scmp.eq.s32.totalorder %s34, 0
      %p111 = por %p109, %p110
      %s112 = sadd.s32 %s36, 1
      %s113 = smul.u32 %s112, 2
      %p114 = scmp.lt.s32.totalorder %s113, 7
      %s115 = scalar_select %p114, %s113, 7
      %s116 = sadd.s32 %s43, 1
      %s117 = smul.u32 %s116, 2
      %p118 = scmp.lt.s32.totalorder %s117, 7
      %s119 = scalar_select %p118, %s117, 7
      %s120 = ssub.s32 %s35, %s47
      %s121 = ssub.s32 %s115, %s119
      %s122 = sor.u32 %s120, %s121
      %p123 = scmp.eq.s32.totalorder %s122, 0
      %s125 = sadd.s32 %s124, 1
      %s126 = scalar_select %p123, %s124, %s125
      %p129 = pneg %p123
      %p130 = scmp.eq.s32.totalorder %s28, 7
      %p131 = por %p129, %p130
      %p132 = scmp.ne.s32.totalorder %s124, %s127
      %p133 = scmp.eq.s32.totalorder %s28, 0
      %p134 = por %p132, %p133
      %p135 = scmp.ne.s32.totalorder %s124, %s127
      %p136 = scmp.eq.s32.totalorder %s33, 7
      %p137 = por %p135, %p136
      %p138 = scmp.ne.s32.totalorder %s127, %s128
      %p139 = scmp.eq.s32.totalorder %s33, 0
      %p140 = por %p138, %p139
      %p141 = scmp.ne.s32.totalorder %s127, %s128
      %p142 = scmp.eq.s32.totalorder %s34, 7
      %p143 = por %p141, %p142
      %p145 = scmp.ne.s32.totalorder %s128, %s144
      %p146 = scmp.eq.s32.totalorder %s34, 0
      %p147 = por %p145, %p146
      %s149 = sadd.s32 %s148, 1
      %p152 = scmp.eq.s32.totalorder %s28, 7
      %p153 = scmp.ne.s32.totalorder %s148, %s150
      %p154 = scmp.eq.s32.totalorder %s28, 0
      %p155 = por %p153, %p154
      %p156 = scmp.ne.s32.totalorder %s148, %s150
      %p157 = scmp.eq.s32.totalorder %s33, 7
      %p158 = por %p156, %p157
      %p159 = scmp.ne.s32.totalorder %s150, %s151
      %p160 = scmp.eq.s32.totalorder %s33, 0
      %p161 = por %p159, %p160
      %p162 = scmp.ne.s32.totalorder %s150, %s151
      %p163 = scmp.eq.s32.totalorder %s34, 7
      %p164 = por %p162, %p163
      %p166 = scmp.ne.s32.totalorder %s151, %s165
      %p167 = scmp.eq.s32.totalorder %s34, 0
      %p168 = por %p166, %p167
      %s170 = sadd.s32 %s169, 1
      %p173 = scmp.eq.s32.totalorder %s28, 7
      %p174 = scmp.ne.s32.totalorder %s169, %s171
      %p175 = scmp.eq.s32.totalorder %s28, 0
      %p176 = por %p174, %p175
      %p177 = scmp.ne.s32.totalorder %s169, %s171
      %p178 = scmp.eq.s32.totalorder %s33, 7
      %p179 = por %p177, %p178
      %p180 = scmp.ne.s32.totalorder %s171, %s172
      %p181 = scmp.eq.s32.totalorder %s33, 0
      %p182 = por %p180, %p181
      %p183 = scmp.ne.s32.totalorder %s171, %s172
      %p184 = scmp.eq.s32.totalorder %s34, 7
      %p185 = por %p183, %p184
      %p187 = scmp.ne.s32.totalorder %s172, %s186
      %p188 = scmp.eq.s32.totalorder %s34, 0
      %p189 = por %p187, %p188
      %s191 = sadd.s32 %s190, 1
      %p194 = scmp.eq.s32.totalorder %s28, 7
      %p195 = scmp.ne.s32.totalorder %s190, %s192
      %p196 = scmp.eq.s32.totalorder %s28, 0
      %p197 = por %p195, %p196
      %p198 = scmp.ne.s32.totalorder %s190, %s192
      %p199 = scmp.eq.s32.totalorder %s33, 7
      %p200 = por %p198, %p199
      %p201 = scmp.ne.s32.totalorder %s192, %s193
      %p202 = scmp.eq.s32.totalorder %s33, 0
      %p203 = por %p201, %p202
      %p204 = scmp.ne.s32.totalorder %s192, %s193
      %p205 = scmp.eq.s32.totalorder %s34, 7
      %p206 = por %p204, %p205
      %p208 = scmp.ne.s32.totalorder %s193, %s207
      %p209 = scmp.eq.s32.totalorder %s34, 0
      %p210 = por %p208, %p209
      %s211 = ssub.s32 %s35, %s47
      %s212 = ssub.s32 %s36, %s43
      %s213 = sor.u32 %s211, %s212
      %p214 = scmp.eq.s32.totalorder %s213, 0
      %s216 = sadd.s32 %s215, 1
      %s217 = scalar_select %p214, %s215, %s216
      %p220 = pneg %p214
      %p221 = scmp.eq.s32.totalorder %s28, 7
      %p222 = por %p220, %p221
      %p223 = scmp.ne.s32.totalorder %s215, %s218
      %p224 = scmp.eq.s32.totalorder %s28, 0
      %p225 = por %p223, %p224
      %p226 = scmp.ne.s32.totalorder %s215, %s218
      %p227 = scmp.eq.s32.totalorder %s33, 7
      %p228 = por %p226, %p227
      %p229 = scmp.ne.s32.totalorder %s218, %s219
      %p230 = scmp.eq.s32.totalorder %s33, 0
      %p231 = por %p229, %p230
      %p232 = scmp.ne.s32.totalorder %s218, %s219
      %p233 = scmp.eq.s32.totalorder %s34, 7
      %p234 = por %p232, %p233
      %p236 = scmp.ne.s32.totalorder %s219, %s235
      %p237 = scmp.eq.s32.totalorder %s34, 0
      %p238 = por %p236, %p237
      %s239 = ssub.s32 %s35, %s47
      %s240 = ssub.s32 %s36, %s43
      %s241 = sor.u32 %s239, %s240
      %p242 = scmp.eq.s32.totalorder %s241, 0
      %s244 = sadd.s32 %s243, 1
      %s245 = scalar_select %p242, %s243, %s244
      %p248 = pneg %p242
      %p249 = scmp.eq.s32.totalorder %s28, 7
      %p250 = por %p248, %p249
      %p251 = scmp.ne.s32.totalorder %s243, %s246
      %p252 = scmp.eq.s32.totalorder %s28, 0
      %p253 = por %p251, %p252
      %p254 = scmp.ne.s32.totalorder %s243, %s246
      %p255 = scmp.eq.s32.totalorder %s33, 7
      %p256 = por %p254, %p255
      %p257 = scmp.ne.s32.totalorder %s246, %s247
      %p258 = scmp.eq.s32.totalorder %s33, 0
      %p259 = por %p257, %p258
      %p260 = scmp.ne.s32.totalorder %s246, %s247
      %p261 = scmp.eq.s32.totalorder %s34, 7
      %p262 = por %p260, %p261
      %p264 = scmp.ne.s32.totalorder %s247, %s263
      %p265 = scmp.eq.s32.totalorder %s34, 0
      %p266 = por %p264, %p265
      %p267 = scmp.le.s32.totalorder 1, %s28
      %p268 = scmp.lt.s32.totalorder %s28, 9
      %p269 = pnand %p267, %p268
      %p270 = pneg %p269
      // Predicated region
      $region9: #{_lambda_.4} parent=5 // pred_check
        _
      $region10: #{_lambda_.4} parent=5 // pred_check_branch
        %272 = sbr.rel (%p269) target = $region12
      $region11: #{_lambda_.4} parent=5 // pred_region
        %s273 = ssub.s32 %s28, 1
        // Predicated region
        $region13: #{_lambda_.4} parent=11 // pred_check
          %p274 = pneg %p161
        $region14: #{_lambda_.4} parent=11 // pred_check_branch
          %276 = sbr.rel (%p274) target = $region16
        $region15: #{_lambda_.4} parent=11 // pred_region
          %s278 = ssub.s32 9216, 9216
          %279 = vsyncadd [#allocation9], %s278
          %s280 = sshll.u32 [#allocation8], 4
          %s281 = int_to_ptr.vmem [resolvable:$true] %s280
          %286 = dma.hbm_to_vmem [thread:$0]  %s3, 9216, %s281, [#allocation9], 64, 64, 4
        $region16: #{_lambda_.4} parent=11 // pred_fallthru
          _
        // Predicated region
        $region17: #{_lambda_.4} parent=11 // pred_check
          %p287 = pneg %p182
        $region18: #{_lambda_.4} parent=11 // pred_check_branch
          %289 = sbr.rel (%p287) target = $region20
        $region19: #{_lambda_.4} parent=11 // pred_region
          %s291 = ssub.s32 16, 16
          %292 = vsyncadd [#allocation9], %s291
          %s294 = sshll.u32 [#allocation10], 4
          %s295 = int_to_ptr.vmem [resolvable:$true] %s294
          %297 = dma.hbm_to_vmem [thread:$0]  %s4, 16, %s295, [#allocation9]
        $region20: #{_lambda_.4} parent=11 // pred_fallthru
          _
        // Predicated region
        $region21: #{_lambda_.4} parent=11 // pred_check
          %p298 = pneg %p203
        $region22: #{_lambda_.4} parent=11 // pred_check_branch
          %300 = sbr.rel (%p298) target = $region24
        $region23: #{_lambda_.4} parent=11 // pred_region
          %s302 = ssub.s32 16, 16
          %303 = vsyncadd [#allocation12], %s302
          %s305 = sshll.u32 [#allocation11], 4
          %s306 = int_to_ptr.vmem [resolvable:$true] %s305
          %308 = dma.hbm_to_vmem [thread:$0]  %s5, 16, %s306, [#allocation12]
        $region24: #{_lambda_.4} parent=11 // pred_fallthru
          _
      $region12: #{_lambda_.4} parent=5 // pred_fallthru
        _
      %p309 = scmp.lt.s32.totalorder %s28, 8
      // Predicated region
      $region25: #{_lambda_.4} parent=5 // pred_check
        %p310 = pneg %p309
      $region26: #{_lambda_.4} parent=5 // pred_check_branch
        %312 = sbr.rel (%p310) target = $region28
      $region27: #{_lambda_.4} parent=5 // pred_region
        // Predicated region
        $region29: #{_lambda_.4} parent=27 // pred_check
          %p313 = pneg %p62
        $region30: #{_lambda_.4} parent=27 // pred_check_branch
          %315 = sbr.rel (%p313) target = $region32
        $region31: #{_lambda_.4} parent=27 // pred_region
          %s316 = sand.u32 %s52, 1
          %s317 = scalar_lea.sflag [#allocation3], %s316
          %s318 = sand.u32 %s52, 1
          %s319 = smul.addr %s318, 32
          %s320 = scalar_lea.vmem [#allocation2], %s319
          %s321 = smul.u32 4, %s36
          %s323 = ssub.s32 512, 512
          %324 = vsyncadd %s317, %s323
          %s325 = smul.addr %s321, 2
          %s326 = smul.addr %s35, 32
          %s327 = sadd.s32 %s325, %s326
          %s328 = smul.addr %s327, 64
          %s329 = scalar_lea.hbm %s0, %s328
          %s330 = sshll.u32 %s320, 4
          %s331 = int_to_ptr.vmem [resolvable:$true] %s330
          %336 = dma.hbm_to_vmem [thread:$0]  %s329, 512, %s331, %s317, 64, 64, 4
        $region32: #{_lambda_.4} parent=27 // pred_fallthru
          _
        // Predicated region
        $region33: #{_lambda_.4} parent=27 // pred_check
          %p337 = pneg %p98
        $region34: #{_lambda_.4} parent=27 // pred_check_branch
          %339 = sbr.rel (%p337) target = $region36
        $region35: #{_lambda_.4} parent=27 // pred_region
          %s340 = sand.u32 %s28, 1
          %s341 = scalar_lea.sflag [#allocation6], %s340
          %s342 = sand.u32 %s88, 1
          %s343 = smul.addr %s342, 16
          %s344 = scalar_lea.vmem [#allocation5], %s343
          %s345 = smul.u32 %s36, 2
          %s346 = ssub.s32 %s345, 1
          %p347 = scmp.gt.s32.totalorder %s346, 0
          %s348 = scalar_select %p347, %s346, 0
          %s349 = smul.u32 2, %s348
          %s351 = ssub.s32 256, 256
          %352 = vsyncadd %s341, %s351
          %s353 = smul.addr %s349, 2
          %s354 = smul.addr %s35, 32
          %s355 = sadd.s32 %s353, %s354
          %s356 = smul.addr %s355, 64
          %s357 = scalar_lea.hbm %s1, %s356
          %s358 = sshll.u32 %s344, 4
          %s359 = int_to_ptr.vmem [resolvable:$true] %s358
          %364 = dma.hbm_to_vmem [thread:$0]  %s357, 256, %s359, %s341, 64, 64, 4
        $region36: #{_lambda_.4} parent=27 // pred_fallthru
          _
        // Predicated region
        $region37: #{_lambda_.4} parent=27 // pred_check
          %p365 = pneg %p134
        $region38: #{_lambda_.4} parent=27 // pred_check_branch
          %367 = sbr.rel (%p365) target = $region40
        $region39: #{_lambda_.4} parent=27 // pred_region
          %s368 = sand.u32 %s28, 1
          %s369 = scalar_lea.sflag [#allocation6], %s368
          %s370 = sand.u32 %s124, 1
          %s371 = smul.addr %s370, 16
          %s372 = scalar_lea.vmem [#allocation7], %s371
          %s373 = sadd.s32 %s36, 1
          %s374 = smul.u32 %s373, 2
          %p375 = scmp.lt.s32.totalorder %s374, 7
          %s376 = scalar_select %p375, %s374, 7
          %s377 = smul.u32 2, %s376
          %s379 = ssub.s32 256, 256
          %380 = vsyncadd %s369, %s379
          %s381 = smul.addr %s377, 2
          %s382 = smul.addr %s35, 32
          %s383 = sadd.s32 %s381, %s382
          %s384 = smul.addr %s383, 64
          %s385 = scalar_lea.hbm %s2, %s384
          %s386 = sshll.u32 %s372, 4
          %s387 = int_to_ptr.vmem [resolvable:$true] %s386
          %392 = dma.hbm_to_vmem [thread:$0]  %s385, 256, %s387, %s369, 64, 64, 4
        $region40: #{_lambda_.4} parent=27 // pred_fallthru
          _
      $region28: #{_lambda_.4} parent=5 // pred_fallthru
        _
      %p393 = scmp.le.s32.totalorder 1, %s28
      %p394 = scmp.lt.s32.totalorder %s28, 9
      %p395 = pnand %p393, %p394
      %p396 = pneg %p395
      // Predicated region
      $region41: #{_lambda_.4} parent=5 // pred_check
        _
      $region42: #{_lambda_.4} parent=5 // pred_check_branch
        %398 = sbr.rel (%p395) target = $region44
      $region43: #{_lambda_.4} parent=5 // pred_region
        %s399 = ssub.s32 %s28, 1
        %s400 = sand.u32 %s55, 1
        %s401 = scalar_lea.sflag [#allocation3], %s400
        %s402 = sand.u32 %s55, 1
        %s403 = smul.addr %s402, 32
        %s404 = scalar_lea.vmem [#allocation2], %s403
        // Predicated region
        $region45: #{_lambda_.4} parent=43 // pred_check
          %p405 = pneg %p68
        $region46: #{_lambda_.4} parent=43 // pred_check_branch
          %407 = sbr.rel (%p405) target = $region48
        $region47: #{_lambda_.4} parent=43 // pred_region
          %408 = dma.done %s401, 512
        $region48: #{_lambda_.4} parent=43 // pred_fallthru
          _
        %s409 = sand.u32 %s33, 1
        %s410 = scalar_lea.sflag [#allocation6], %s409
        %s411 = sand.u32 %s91, 1
        %s412 = smul.addr %s411, 16
        %s413 = scalar_lea.vmem [#allocation5], %s412
        // Predicated region
        $region49: #{_lambda_.4} parent=43 // pred_check
          %p414 = pneg %p104
        $region50: #{_lambda_.4} parent=43 // pred_check_branch
          %416 = sbr.rel (%p414) target = $region52
        $region51: #{_lambda_.4} parent=43 // pred_region
          %417 = dma.done %s410, 256
        $region52: #{_lambda_.4} parent=43 // pred_fallthru
          _
        %s418 = sand.u32 %s33, 1
        %s419 = scalar_lea.sflag [#allocation6], %s418
        %s420 = sand.u32 %s127, 1
        %s421 = smul.addr %s420, 16
        %s422 = scalar_lea.vmem [#allocation7], %s421
        // Predicated region
        $region53: #{_lambda_.4} parent=43 // pred_check
          %p423 = pneg %p140
        $region54: #{_lambda_.4} parent=43 // pred_check_branch
          %425 = sbr.rel (%p423) target = $region56
        $region55: #{_lambda_.4} parent=43 // pred_region
          %426 = dma.done %s419, 256
        $region56: #{_lambda_.4} parent=43 // pred_fallthru
          _
        // Predicated region
        $region57: #{_lambda_.4} parent=43 // pred_check
          %p427 = pneg %p161
        $region58: #{_lambda_.4} parent=43 // pred_check_branch
          %429 = sbr.rel (%p427) target = $region60
        $region59: #{_lambda_.4} parent=43 // pred_region
          %430 = dma.done [#allocation9], 9216
        $region60: #{_lambda_.4} parent=43 // pred_fallthru
          _
        // Predicated region
        $region61: #{_lambda_.4} parent=43 // pred_check
          %p431 = pneg %p182
        $region62: #{_lambda_.4} parent=43 // pred_check_branch
          %433 = sbr.rel (%p431) target = $region64
        $region63: #{_lambda_.4} parent=43 // pred_region
          %434 = dma.done [#allocation9], 16
        $region64: #{_lambda_.4} parent=43 // pred_fallthru
          _
        // Predicated region
        $region65: #{_lambda_.4} parent=43 // pred_check
          %p435 = pneg %p203
        $region66: #{_lambda_.4} parent=43 // pred_check_branch
          %437 = sbr.rel (%p435) target = $region68
        $region67: #{_lambda_.4} parent=43 // pred_region
          %438 = dma.done [#allocation12], 16
        $region68: #{_lambda_.4} parent=43 // pred_fallthru
          _
        %s439 = sand.u32 %s55, 1
        %s440 = scalar_lea.sflag [#allocation3], %s439
        %s441 = sand.u32 %s55, 1
        %s442 = smul.addr %s441, 32
        %s443 = scalar_lea.vmem [#allocation2], %s442
        %p444 = pneg %p68
        %p445 = pneg %p65
        %s446 = sand.u32 %s33, 1
        %s447 = scalar_lea.sflag [#allocation6], %s446
        %s448 = sand.u32 %s91, 1
        %s449 = smul.addr %s448, 16
        %s450 = scalar_lea.vmem [#allocation5], %s449
        %p451 = pneg %p104
        %p452 = pneg %p101
        %s453 = sand.u32 %s33, 1
        %s454 = scalar_lea.sflag [#allocation6], %s453
        %s455 = sand.u32 %s127, 1
        %s456 = smul.addr %s455, 16
        %s457 = scalar_lea.vmem [#allocation7], %s456
        %p458 = pneg %p140
        %p459 = pneg %p137
        %p460 = pneg %p161
        %p461 = pneg %p158
        %p462 = pneg %p182
        %p463 = pneg %p179
        %p464 = pneg %p203
        %p465 = pneg %p200
        %p466 = pneg %p231
        %p467 = pneg %p228
        %s468 = sand.u32 %s218, 1
        %s469 = scalar_lea.sflag [#allocation4], %s468
        %s470 = sand.u32 %s218, 1
        %s471 = smul.addr %s470, 32
        %s472 = scalar_lea.vmem [#allocation13], %s471
        %p473 = pneg %p259
        %p474 = pneg %p256
        %s475 = sand.u32 %s246, 1
        %s476 = scalar_lea.sflag [#allocation15], %s475
        %s477 = sand.u32 %s246, 1
        %s478 = smul.addr %s477, 8
        %s479 = scalar_lea.vmem [#allocation14], %s478
        %s480 = smul.u32 4, %s38
        %s481 = smul.u32 %s38, 2
        %s482 = ssub.s32 %s481, 1
        %p483 = scmp.gt.s32.totalorder %s482, 0
        %s484 = scalar_select %p483, %s482, 0
        %s485 = smul.u32 2, %s484
        %s486 = sadd.s32 %s38, 1
        %s487 = smul.u32 %s486, 2
        %p488 = scmp.lt.s32.totalorder %s487, 7
        %s489 = scalar_select %p488, %s487, 7
        %s490 = smul.u32 2, %s489
        %s491 = smul.u32 4, %s38
        %v493 = vld [vmem:[#allocation10] sm:$0x1]
        %v494 = vld [vmem:[#allocation11] sm:$0x1]
        %v495 = vld [vmem:[%s404] sm:$0xf]
        %v496 = vld [vmem:[%s404 + $0x4] sm:$0xf]
        %v497 = vld [vmem:[%s404 + $0x8] sm:$0xf]
        %v498 = vld [vmem:[%s404 + $0xc] sm:$0xf]
        %v499 = vld [vmem:[%s404 + $0x10] sm:$0xf]
        %v500 = vld [vmem:[%s404 + $0x14] sm:$0xf]
        %v501 = vld [vmem:[%s404 + $0x18] sm:$0xf]
        %v502 = vld [vmem:[%s404 + $0x1c] sm:$0xf]
        %v503 = vunpack.c.l.bf16 %v495
        %v504 = vunpack.c.l.bf16 %v496
        %v505 = vunpack.c.l.bf16 %v497
        %v506 = vunpack.c.l.bf16 %v498
        %v507 = vunpack.c.l.bf16 %v499
        %v508 = vunpack.c.l.bf16 %v500
        %v509 = vunpack.c.l.bf16 %v501
        %v510 = vunpack.c.l.bf16 %v502
        %v512 = vlaneseq
        %v513 = vshrl.u32 %v512, 7
        %v514 = vsub.s32 0, %v513
        %v515 = vrot.slane %v493, %v514
        %v517 = vmul.f32 %v503, %v515
        %v518 = vmul.f32 %v504, %v515
        %v519 = vmul.f32 %v505, %v515
        %v520 = vmul.f32 %v506, %v515
        %v521 = vmul.f32 %v507, %v515
        %v522 = vmul.f32 %v508, %v515
        %v523 = vmul.f32 %v509, %v515
        %v524 = vmul.f32 %v510, %v515
        %v526 = vlaneseq
        %v527 = vshrl.u32 %v526, 7
        %v528 = vsub.s32 0, %v527
        %v529 = vrot.slane %v494, %v528
        %v531 = vadd.f32 %v517, %v529
        %v532 = vadd.f32 %v518, %v529
        %v533 = vadd.f32 %v519, %v529
        %v534 = vadd.f32 %v520, %v529
        %v535 = vadd.f32 %v521, %v529
        %v536 = vadd.f32 %v522, %v529
        %v537 = vadd.f32 %v523, %v529
        %v538 = vadd.f32 %v524, %v529
        %v539 = vmax.f32 %v531, 0.0
        %v540 = vmax.f32 %v532, 0.0
        %v541 = vmax.f32 %v533, 0.0
        %v542 = vmax.f32 %v534, 0.0
        %v543 = vmax.f32 %v535, 0.0
        %v544 = vmax.f32 %v536, 0.0
        %v545 = vmax.f32 %v537, 0.0
        %v546 = vmax.f32 %v538, 0.0
        %v547 = vpack.c.bf16 %v540, %v539
        %v548 = vpack.c.bf16 %v542, %v541
        %v549 = vpack.c.bf16 %v544, %v543
        %v550 = vpack.c.bf16 %v546, %v545
        %v552 = vshrl.u32 %v547, 16
        %v554 = vrot.slane %v552, 7
        %v555 = vshll.u32 %v547, 16
        %v557 = vor.u32 %v554, %v555
        %v559 = vshrl.u32 %v548, 16
        %v561 = vrot.slane %v559, 7
        %v562 = vshll.u32 %v548, 16
        %v564 = vor.u32 %v561, %v562
        %v566 = vshrl.u32 %v549, 16
        %v568 = vrot.slane %v566, 7
        %v569 = vshll.u32 %v549, 16
        %v571 = vor.u32 %v568, %v569
        %v573 = vshrl.u32 %v550, 16
        %v575 = vrot.slane %v573, 7
        %v576 = vshll.u32 %v550, 16
        %v578 = vor.u32 %v575, %v576
        %vm587 = vcmask 1040384
        %vm588 = vsmask.f32 256
        %vm589 = vmand %vm587, %vm588
        %v590 = vsel %vm589, 0, %v557
        %v591 = vsel %vm589, 0, %v564
        %v592 = vsel %vm589, 0, %v571
        %v593 = vsel %vm589, 0, %v578
        %v594 = vsel %vm589, %v554, 0
        %v595 = vsel %vm589, %v561, 0
        %v596 = vsel %vm589, %v568, 0
        %v597 = vsel %vm589, %v575, 0
        %s598 = scalar_lea.vmem %s413, 8 [#allocation5]
        %v599 = vld [vmem:[%s598] sm:$0xf]
        %v600 = vld [vmem:[%s598 + $0x4] sm:$0xf]
        %v601 = vunpack.c.l.bf16 %v599
        %v602 = vunpack.c.l.bf16 %v600
        %v603 = vmul.f32 %v601, %v515
        %v604 = vmul.f32 %v602, %v515
        %v605 = vadd.f32 %v603, %v529
        %v606 = vadd.f32 %v604, %v529
        %v607 = vmax.f32 %v605, 0.0
        %v608 = vmax.f32 %v606, 0.0
        %v609 = vpack.c.bf16 %v608, %v607
        %v611 = vshrl.u32 %v609, 16
        %v613 = vrot.slane %v611, 7
        %v614 = vshll.u32 %v609, 16
        %v616 = vor.u32 %v613, %v614
        %v619 = vsel %vm589, 0, %v616
        %v620 = vsel %vm589, %v613, 0
        %v621 = vld [vmem:[%s422] sm:$0xf]
        %v622 = vld [vmem:[%s422 + $0x4] sm:$0xf]
        %v623 = vunpack.c.l.bf16 %v621
        %v624 = vunpack.c.l.bf16 %v622
        %v625 = vmul.f32 %v623, %v515
        %v626 = vmul.f32 %v624, %v515
        %v627 = vadd.f32 %v625, %v529
        %v628 = vadd.f32 %v626, %v529
        %v629 = vmax.f32 %v627, 0.0
        %v630 = vmax.f32 %v628, 0.0
        %v631 = vpack.c.bf16 %v630, %v629
        %v633 = vshrl.u32 %v631, 16
        %v635 = vrot.slane %v633, 7
        %v636 = vshll.u32 %v631, 16
        %v638 = vor.u32 %v635, %v636
        %v641 = vsel %vm589, 0, %v638
        %v642 = vsel %vm589, %v635, 0
        %p643 = scmp.gt.s32.totalorder %s38, 0
        %s644 = scalar_select %p643, 1, 0
        %v645 = vstv %s644
        %vm646 = vcmp.eq.s32.totalorder %v645, 1
        %v647 = vsel %vm646, %v619, 0
        %v648 = vsel %vm646, %v620, 0
        %p649 = scmp.lt.s32.totalorder %s38, 3
        %s650 = scalar_select %p649, 1, 0
        %v651 = vstv %s650
        %vm652 = vcmp.eq.s32.totalorder %v651, 1
        %v653 = vsel %vm652, %v641, 0
        %v654 = vsel %vm652, %v642, 0
        %vm655 = vsmask.f32 7424
        %v657 = vshrl.u32 %v647, 16
        %v659 = vshll.u32 %v647, 16
        %v661 = vrot.slane %v659, 1
        %v662 = vor.u32 %v657, %v661
        %v664 = vshll.u32 %v648, 16
        %v666 = vrot.slane %v664, 1
        %v667 = vsel %vm655, %v662, %v666
        %v669 = vshrl.u32 %v590, 16
        %v671 = vshll.u32 %v590, 16
        %v673 = vrot.slane %v671, 1
        %v674 = vor.u32 %v669, %v673
        %v676 = vshll.u32 %v594, 16
        %v678 = vrot.slane %v676, 1
        %v679 = vsel %vm655, %v674, %v678
        %v681 = vshrl.u32 %v591, 16
        %v683 = vshll.u32 %v591, 16
        %v685 = vrot.slane %v683, 1
        %v686 = vor.u32 %v681, %v685
        %v688 = vshll.u32 %v595, 16
        %v690 = vrot.slane %v688, 1
        %v691 = vsel %vm655, %v686, %v690
        %v693 = vshrl.u32 %v592, 16
        %v695 = vshll.u32 %v592, 16
        %v697 = vrot.slane %v695, 1
        %v698 = vor.u32 %v693, %v697
        %v700 = vshll.u32 %v596, 16
        %v702 = vrot.slane %v700, 1
        %v703 = vsel %vm655, %v698, %v702
        %vm716 = vcmask 1046528
        %v717 = vrot.slane %v647, 1
        %v718 = vrot.slane %v648, 1
        %v719 = vsel %vm716, %v717, %v718
        %v720 = vrot.slane %v590, 1
        %v721 = vrot.slane %v594, 1
        %v722 = vsel %vm716, %v720, %v721
        %v723 = vrot.slane %v591, 1
        %v724 = vrot.slane %v595, 1
        %v725 = vsel %vm716, %v723, %v724
        %v726 = vrot.slane %v592, 1
        %v727 = vrot.slane %v596, 1
        %v728 = vsel %vm716, %v726, %v727
        %v733 = vld [vmem:[#allocation8] sm:$0xf]
        %v734 = vld [vmem:[#allocation8 + $0x4] sm:$0xf]
        %v735 = vld [vmem:[#allocation8 + $0x8] sm:$0xf]
        %v736 = vld [vmem:[#allocation8 + $0xc] sm:$0xf]
        %v737 = vld [vmem:[#allocation8 + $0x10] sm:$0xf]
        %v738 = vld [vmem:[#allocation8 + $0x14] sm:$0xf]
        %v739 = vld [vmem:[#allocation8 + $0x18] sm:$0xf]
        %v740 = vld [vmem:[#allocation8 + $0x1c] sm:$0xf]
        %v741 = vld [vmem:[#allocation8 + $0x20] sm:$0xf]
        %v742 = vld [vmem:[#allocation8 + $0x24] sm:$0xf]
        %v743 = vld [vmem:[#allocation8 + $0x28] sm:$0xf]
        %v744 = vld [vmem:[#allocation8 + $0x2c] sm:$0xf]
        %v745 = vld [vmem:[#allocation8 + $0x30] sm:$0xf]
        %v746 = vld [vmem:[#allocation8 + $0x34] sm:$0xf]
        %v747 = vld [vmem:[#allocation8 + $0x38] sm:$0xf]
        %v748 = vld [vmem:[#allocation8 + $0x3c] sm:$0xf]
        %v749 = vld [vmem:[#allocation8 + $0x40] sm:$0xf]
        %v750 = vld [vmem:[#allocation8 + $0x44] sm:$0xf]
        %v751 = vld [vmem:[#allocation8 + $0x48] sm:$0xf]
        %v752 = vld [vmem:[#allocation8 + $0x4c] sm:$0xf]
        %v753 = vld [vmem:[#allocation8 + $0x50] sm:$0xf]
        %v754 = vld [vmem:[#allocation8 + $0x54] sm:$0xf]
        %v755 = vld [vmem:[#allocation8 + $0x58] sm:$0xf]
        %v756 = vld [vmem:[#allocation8 + $0x5c] sm:$0xf]
        %v757 = vld [vmem:[#allocation8 + $0x60] sm:$0xf]
        %v758 = vld [vmem:[#allocation8 + $0x64] sm:$0xf]
        %v759 = vld [vmem:[#allocation8 + $0x68] sm:$0xf]
        %v760 = vld [vmem:[#allocation8 + $0x6c] sm:$0xf]
        %v761 = vld [vmem:[#allocation8 + $0x70] sm:$0xf]
        %v762 = vld [vmem:[#allocation8 + $0x74] sm:$0xf]
        %v763 = vld [vmem:[#allocation8 + $0x78] sm:$0xf]
        %v764 = vld [vmem:[#allocation8 + $0x7c] sm:$0xf]
        %v765 = vld [vmem:[#allocation8 + $0x80] sm:$0xf]
        %v766 = vld [vmem:[#allocation8 + $0x84] sm:$0xf]
        %v767 = vld [vmem:[#allocation8 + $0x88] sm:$0xf]
        %v768 = vld [vmem:[#allocation8 + $0x8c] sm:$0xf]
        %v769 = vld [vmem:[#allocation8 + $0x90] sm:$0xf]
        %v770 = vld [vmem:[#allocation8 + $0x94] sm:$0xf]
        %v771 = vld [vmem:[#allocation8 + $0x98] sm:$0xf]
        %v772 = vld [vmem:[#allocation8 + $0x9c] sm:$0xf]
        %v773 = vld [vmem:[#allocation8 + $0xa0] sm:$0xf]
        %v774 = vld [vmem:[#allocation8 + $0xa4] sm:$0xf]
        %v775 = vld [vmem:[#allocation8 + $0xa8] sm:$0xf]
        %v776 = vld [vmem:[#allocation8 + $0xac] sm:$0xf]
        %v777 = vld [vmem:[#allocation8 + $0xb0] sm:$0xf]
        %v778 = vld [vmem:[#allocation8 + $0xb4] sm:$0xf]
        %v779 = vld [vmem:[#allocation8 + $0xb8] sm:$0xf]
        %v780 = vld [vmem:[#allocation8 + $0xbc] sm:$0xf]
        %v782 = vshrl.u32 %v593, 16
        %v784 = vshll.u32 %v593, 16
        %v786 = vrot.slane %v784, 1
        %v787 = vor.u32 %v782, %v786
        %v789 = vshll.u32 %v597, 16
        %v791 = vrot.slane %v789, 1
        %v792 = vsel %vm655, %v787, %v791
        %v796 = vrot.slane %v593, 1
        %v797 = vrot.slane %v597, 1
        %v798 = vsel %vm716, %v796, %v797
        %s800 = scalar_lea.vmem [#allocation8], 192
        %v801 = vld [vmem:[%s800] sm:$0xf]
        %v802 = vld [vmem:[%s800 + $0x4] sm:$0xf]
        %v803 = vld [vmem:[%s800 + $0x8] sm:$0xf]
        %v804 = vld [vmem:[%s800 + $0xc] sm:$0xf]
        %v805 = vld [vmem:[%s800 + $0x10] sm:$0xf]
        %v806 = vld [vmem:[%s800 + $0x14] sm:$0xf]
        %v807 = vld [vmem:[%s800 + $0x18] sm:$0xf]
        %v808 = vld [vmem:[%s800 + $0x1c] sm:$0xf]
        %v809 = vld [vmem:[%s800 + $0x20] sm:$0xf]
        %v810 = vld [vmem:[%s800 + $0x24] sm:$0xf]
        %v811 = vld [vmem:[%s800 + $0x28] sm:$0xf]
        %v812 = vld [vmem:[%s800 + $0x2c] sm:$0xf]
        %v813 = vld [vmem:[%s800 + $0x30] sm:$0xf]
        %v814 = vld [vmem:[%s800 + $0x34] sm:$0xf]
        %v815 = vld [vmem:[%s800 + $0x38] sm:$0xf]
        %v816 = vld [vmem:[%s800 + $0x3c] sm:$0xf]
        %v817 = vld [vmem:[%s800 + $0x40] sm:$0xf]
        %v818 = vld [vmem:[%s800 + $0x44] sm:$0xf]
        %v819 = vld [vmem:[%s800 + $0x48] sm:$0xf]
        %v820 = vld [vmem:[%s800 + $0x4c] sm:$0xf]
        %v821 = vld [vmem:[%s800 + $0x50] sm:$0xf]
        %v822 = vld [vmem:[%s800 + $0x54] sm:$0xf]
        %v823 = vld [vmem:[%s800 + $0x58] sm:$0xf]
        %v824 = vld [vmem:[%s800 + $0x5c] sm:$0xf]
        %v825 = vld [vmem:[%s800 + $0x60] sm:$0xf]
        %v826 = vld [vmem:[%s800 + $0x64] sm:$0xf]
        %v827 = vld [vmem:[%s800 + $0x68] sm:$0xf]
        %v828 = vld [vmem:[%s800 + $0x6c] sm:$0xf]
        %v829 = vld [vmem:[%s800 + $0x70] sm:$0xf]
        %v830 = vld [vmem:[%s800 + $0x74] sm:$0xf]
        %v831 = vld [vmem:[%s800 + $0x78] sm:$0xf]
        %v832 = vld [vmem:[%s800 + $0x7c] sm:$0xf]
        %v833 = vld [vmem:[%s800 + $0x80] sm:$0xf]
        %v834 = vld [vmem:[%s800 + $0x84] sm:$0xf]
        %v835 = vld [vmem:[%s800 + $0x88] sm:$0xf]
        %v836 = vld [vmem:[%s800 + $0x8c] sm:$0xf]
        %v837 = vld [vmem:[%s800 + $0x90] sm:$0xf]
        %v838 = vld [vmem:[%s800 + $0x94] sm:$0xf]
        %v839 = vld [vmem:[%s800 + $0x98] sm:$0xf]
        %v840 = vld [vmem:[%s800 + $0x9c] sm:$0xf]
        %v841 = vld [vmem:[%s800 + $0xa0] sm:$0xf]
        %v842 = vld [vmem:[%s800 + $0xa4] sm:$0xf]
        %v843 = vld [vmem:[%s800 + $0xa8] sm:$0xf]
        %v844 = vld [vmem:[%s800 + $0xac] sm:$0xf]
        %v845 = vld [vmem:[%s800 + $0xb0] sm:$0xf]
        %v846 = vld [vmem:[%s800 + $0xb4] sm:$0xf]
        %v847 = vld [vmem:[%s800 + $0xb8] sm:$0xf]
        %v848 = vld [vmem:[%s800 + $0xbc] sm:$0xf]
        %v897 = vunpack.c.l.b16 %v801
        %v898 = vunpack.c.l.b16 %v802
        %v899 = vunpack.c.l.b16 %v803
        %v900 = vunpack.c.l.b16 %v804
        %v901 = vunpack.c.l.b16 %v805
        %v902 = vunpack.c.l.b16 %v806
        %v903 = vunpack.c.l.b16 %v807
        %v904 = vunpack.c.l.b16 %v808
        %v905 = vunpack.c.l.b16 %v809
        %v906 = vunpack.c.l.b16 %v810
        %v907 = vunpack.c.l.b16 %v811
        %v908 = vunpack.c.l.b16 %v812
        %v909 = vunpack.c.l.b16 %v813
        %v910 = vunpack.c.l.b16 %v814
        %v911 = vunpack.c.l.b16 %v815
        %v912 = vunpack.c.l.b16 %v816
        %v913 = vunpack.c.l.b16 %v817
        %v914 = vunpack.c.l.b16 %v818
        %v915 = vunpack.c.l.b16 %v819
        %v916 = vunpack.c.l.b16 %v820
        %v917 = vunpack.c.l.b16 %v821
        %v918 = vunpack.c.l.b16 %v822
        %v919 = vunpack.c.l.b16 %v823
        %v920 = vunpack.c.l.b16 %v824
        %v921 = vunpack.c.l.b16 %v825
        %v922 = vunpack.c.l.b16 %v826
        %v923 = vunpack.c.l.b16 %v827
        %v924 = vunpack.c.l.b16 %v828
        %v925 = vunpack.c.l.b16 %v829
        %v926 = vunpack.c.l.b16 %v830
        %v927 = vunpack.c.l.b16 %v831
        %v928 = vunpack.c.l.b16 %v832
        %v929 = vunpack.c.l.b16 %v833
        %v930 = vunpack.c.l.b16 %v834
        %v931 = vunpack.c.l.b16 %v835
        %v932 = vunpack.c.l.b16 %v836
        %v933 = vunpack.c.l.b16 %v837
        %v934 = vunpack.c.l.b16 %v838
        %v935 = vunpack.c.l.b16 %v839
        %v936 = vunpack.c.l.b16 %v840
        %v937 = vunpack.c.l.b16 %v841
        %v938 = vunpack.c.l.b16 %v842
        %v939 = vunpack.c.l.b16 %v843
        %v940 = vunpack.c.l.b16 %v844
        %v941 = vunpack.c.l.b16 %v845
        %v942 = vunpack.c.l.b16 %v846
        %v943 = vunpack.c.l.b16 %v847
        %v944 = vunpack.c.l.b16 %v848
        %v945 = vpack.c.b16 %v898, %v897
        %v946 = vpack.c.b16 %v900, %v899
        %v947 = vpack.c.b16 %v902, %v901
        %v948 = vpack.c.b16 %v904, %v903
        %v949 = vpack.c.b16 %v906, %v905
        %v950 = vpack.c.b16 %v908, %v907
        %v951 = vpack.c.b16 %v910, %v909
        %v952 = vpack.c.b16 %v912, %v911
        %v953 = vpack.c.b16 %v914, %v913
        %v954 = vpack.c.b16 %v916, %v915
        %v955 = vpack.c.b16 %v918, %v917
        %v956 = vpack.c.b16 %v920, %v919
        %v957 = vpack.c.b16 %v922, %v921
        %v958 = vpack.c.b16 %v924, %v923
        %v959 = vpack.c.b16 %v926, %v925
        %v960 = vpack.c.b16 %v928, %v927
        %v961 = vpack.c.b16 %v930, %v929
        %v962 = vpack.c.b16 %v932, %v931
        %v963 = vpack.c.b16 %v934, %v933
        %v964 = vpack.c.b16 %v936, %v935
        %v965 = vpack.c.b16 %v938, %v937
        %v966 = vpack.c.b16 %v940, %v939
        %v967 = vpack.c.b16 %v942, %v941
        %v968 = vpack.c.b16 %v944, %v943
        %993 = vmatprep.subr.bf16.mxu0 0
        %994 = vmatpush1.bf16.msra.mxu0 %v945
        %995 = vmatprep.subr.bf16.mxu0 0
        %996 = vmatpush1.bf16.msra.mxu0 %v946
        %997 = vmatprep.subr.bf16.mxu0 0
        %998 = vmatpush1.bf16.msra.mxu0 %v947
        %999 = vmatprep.subr.bf16.mxu0 0
        %1000 = vmatpush1.bf16.msra.mxu0 %v948
        %1001 = vmatprep.subr.bf16.mxu0 0
        %1002 = vmatpush1.bf16.msra.mxu0 %v949
        %1003 = vmatprep.subr.bf16.mxu0 0
        %1004 = vmatpush1.bf16.msra.mxu0 %v950
        %1005 = vmatprep.subr.bf16.mxu0 0
        %1006 = vmatpush1.bf16.msra.mxu0 %v951
        %1007 = vmatprep.subr.bf16.mxu0 0
        %1008 = vmatpush1.bf16.msra.mxu0 %v952
        %1009 = vmatprep.subr.bf16.mxu0 0
        %1010 = vmatpush1.bf16.msra.mxu0 %v953
        %1011 = vmatprep.subr.bf16.mxu0 0
        %1012 = vmatpush1.bf16.msra.mxu0 %v954
        %1013 = vmatprep.subr.bf16.mxu0 0
        %1014 = vmatpush1.bf16.msra.mxu0 %v955
        %1015 = vmatprep.subr.bf16.mxu0 0
        %1016 = vmatpush1.bf16.msra.mxu0 %v956
        %1017 = vmatprep.subr.bf16.mxu0 0
        %1018 = vmatpush1.bf16.msra.mxu0 %v957
        %1019 = vmatprep.subr.bf16.mxu0 0
        %1020 = vmatpush1.bf16.msra.mxu0 %v958
        %1021 = vmatprep.subr.bf16.mxu0 0
        %1022 = vmatpush1.bf16.msra.mxu0 %v959
        %1023 = vmatprep.subr.bf16.mxu0 0
        %1024 = vmatpush1.bf16.msra.mxu0 %v960
        %1025 = vmatprep.mubr.bf16.mxu0 %v679
        %1026 = vmatmul.mubr.bf16.gmra.mrb[0].mxu0 %v590
        %v1027 = vpop.f32.mrb[0].mxu0
        %v1028 = vadd.f32 0.0, %v1027
        %v1029 = vpop.f32.mrb[0].mxu0
        %v1030 = vpop.f32.mrb[0].mxu0
        %v1031 = vadd.f32 0.0, %v1030
        %v1032 = vpop.f32.mrb[0].mxu0
        %1033 = vmatprep.mubr.bf16.mxu0 %v691
        %1034 = vmatmul.mubr.bf16.gmra.mrb[0].mxu0 %v591
        %v1035 = vpop.f32.mrb[0].mxu0
        %v1036 = vadd.f32 0.0, %v1035
        %v1037 = vpop.f32.mrb[0].mxu0
        %v1038 = vpop.f32.mrb[0].mxu0
        %v1039 = vadd.f32 0.0, %v1038
        %v1040 = vpop.f32.mrb[0].mxu0
        %1041 = vmatprep.mubr.bf16.mxu0 %v703
        %1042 = vmatmul.mubr.bf16.gmra.mrb[0].mxu0 %v592
        %v1043 = vpop.f32.mrb[0].mxu0
        %v1044 = vadd.f32 0.0, %v1043
        %v1045 = vpop.f32.mrb[0].mxu0
        %v1046 = vpop.f32.mrb[0].mxu0
        %v1047 = vadd.f32 0.0, %v1046
        %v1048 = vpop.f32.mrb[0].mxu0
        %1049 = vmatprep.mubr.bf16.mxu0 %v792
        %1050 = vmatmul.mubr.bf16.gmra.mrb[0].mxu0 %v593
        %v1051 = vpop.f32.mrb[0].mxu0
        %v1052 = vadd.f32 0.0, %v1051
        %v1053 = vpop.f32.mrb[0].mxu0
        %v1054 = vpop.f32.mrb[0].mxu0
        %v1055 = vadd.f32 0.0, %v1054
        %v1056 = vpop.f32.mrb[0].mxu0
        %1057 = vdwg.mxu0
        %1058 = vmatprep.subr.bf16.mxu0 0
        %1059 = vmatpush1.bf16.msra.mxu0 %v961
        %1060 = vmatprep.subr.bf16.mxu0 0
        %1061 = vmatpush1.bf16.msra.mxu0 %v962
        %1062 = vmatprep.subr.bf16.mxu0 0
        %1063 = vmatpush1.bf16.msra.mxu0 %v963
        %1064 = vmatprep.subr.bf16.mxu0 0
        %1065 = vmatpush1.bf16.msra.mxu0 %v964
        %1066 = vmatprep.subr.bf16.mxu0 0
        %1067 = vmatpush1.bf16.msra.mxu0 %v965
        %1068 = vmatprep.subr.bf16.mxu0 0
        %1069 = vmatpush1.bf16.msra.mxu0 %v966
        %1070 = vmatprep.subr.bf16.mxu0 0
        %1071 = vmatpush1.bf16.msra.mxu0 %v967
        %1072 = vmatprep.subr.bf16.mxu0 0
        %1073 = vmatpush1.bf16.msra.mxu0 %v968
        %1074 = vmatprep.subr.bf16.mxu0 0
        %1075 = vmatpush1.bf16.msra.mxu0 0
        %1076 = vmatprep.subr.bf16.mxu0 0
        %1077 = vmatpush1.bf16.msra.mxu0 0
        %1078 = vmatprep.subr.bf16.mxu0 0
        %1079 = vmatpush1.bf16.msra.mxu0 0
        %1080 = vmatprep.subr.bf16.mxu0 0
        %1081 = vmatpush1.bf16.msra.mxu0 0
        %1082 = vmatprep.subr.bf16.mxu0 0
        %1083 = vmatpush1.bf16.msra.mxu0 0
        %1084 = vmatprep.subr.bf16.mxu0 0
        %1085 = vmatpush1.bf16.msra.mxu0 0
        %1086 = vmatprep.subr.bf16.mxu0 0
        %1087 = vmatpush1.bf16.msra.mxu0 0
        %1088 = vmatprep.subr.bf16.mxu0 0
        %1089 = vmatpush1.bf16.msra.mxu0 0
        %1090 = vmatprep.mubr.bf16.mxu0 0
        %1091 = vmatmul.mubr.bf16.gmra.mrb[0].mxu0 %v722
        %v1092 = vpop.f32.mrb[0].mxu0
        %v1093 = vadd.f32 %v1028, %v1092
        %v1094 = vpop.f32.mrb[0].mxu0
        %v1095 = vpop.f32.mrb[0].mxu0
        %v1096 = vadd.f32 %v1031, %v1095
        %v1097 = vpop.f32.mrb[0].mxu0
        %1098 = vmatprep.mubr.bf16.mxu0 0
        %1099 = vmatmul.mubr.bf16.gmra.mrb[0].mxu0 %v725
        %v1100 = vpop.f32.mrb[0].mxu0
        %v1101 = vadd.f32 %v1036, %v1100
        %v1102 = vpop.f32.mrb[0].mxu0
        %v1103 = vpop.f32.mrb[0].mxu0
        %v1104 = vadd.f32 %v1039, %v1103
        %v1105 = vpop.f32.mrb[0].mxu0
        %1106 = vmatprep.mubr.bf16.mxu0 0
        %1107 = vmatmul.mubr.bf16.gmra.mrb[0].mxu0 %v728
        %v1108 = vpop.f32.mrb[0].mxu0
        %v1109 = vadd.f32 %v1044, %v1108
        %v1110 = vpop.f32.mrb[0].mxu0
        %v1111 = vpop.f32.mrb[0].mxu0
        %v1112 = vadd.f32 %v1047, %v1111
        %v1113 = vpop.f32.mrb[0].mxu0
        %1114 = vmatprep.mubr.bf16.mxu0 0
        %1115 = vmatmul.mubr.bf16.gmra.mrb[0].mxu0 %v798
        %v1116 = vpop.f32.mrb[0].mxu0
        %v1117 = vadd.f32 %v1052, %v1116
        %v1118 = vpop.f32.mrb[0].mxu0
        %v1119 = vpop.f32.mrb[0].mxu0
        %v1120 = vadd.f32 %v1055, %v1119
        %v1121 = vpop.f32.mrb[0].mxu0
        %1122 = vdwg.mxu0
        %v1171 = vunpack.c.l.b16 %v733
        %v1172 = vunpack.c.l.b16 %v734
        %v1173 = vunpack.c.l.b16 %v735
        %v1174 = vunpack.c.l.b16 %v736
        %v1175 = vunpack.c.l.b16 %v737
        %v1176 = vunpack.c.l.b16 %v738
        %v1177 = vunpack.c.l.b16 %v739
        %v1178 = vunpack.c.l.b16 %v740
        %v1179 = vunpack.c.l.b16 %v741
        %v1180 = vunpack.c.l.b16 %v742
        %v1181 = vunpack.c.l.b16 %v743
        %v1182 = vunpack.c.l.b16 %v744
        %v1183 = vunpack.c.l.b16 %v745
        %v1184 = vunpack.c.l.b16 %v746
        %v1185 = vunpack.c.l.b16 %v747
        %v1186 = vunpack.c.l.b16 %v748
        %v1187 = vunpack.c.l.b16 %v749
        %v1188 = vunpack.c.l.b16 %v750
        %v1189 = vunpack.c.l.b16 %v751
        %v1190 = vunpack.c.l.b16 %v752
        %v1191 = vunpack.c.l.b16 %v753
        %v1192 = vunpack.c.l.b16 %v754
        %v1193 = vunpack.c.l.b16 %v755
        %v1194 = vunpack.c.l.b16 %v756
        %v1195 = vunpack.c.l.b16 %v757
        %v1196 = vunpack.c.l.b16 %v758
        %v1197 = vunpack.c.l.b16 %v759
        %v1198 = vunpack.c.l.b16 %v760
        %v1199 = vunpack.c.l.b16 %v761
        %v1200 = vunpack.c.l.b16 %v762
        %v1201 = vunpack.c.l.b16 %v763
        %v1202 = vunpack.c.l.b16 %v764
        %v1203 = vunpack.c.l.b16 %v765
        %v1204 = vunpack.c.l.b16 %v766
        %v1205 = vunpack.c.l.b16 %v767
        %v1206 = vunpack.c.l.b16 %v768
        %v1207 = vunpack.c.l.b16 %v769
        %v1208 = vunpack.c.l.b16 %v770
        %v1209 = vunpack.c.l.b16 %v771
        %v1210 = vunpack.c.l.b16 %v772
        %v1211 = vunpack.c.l.b16 %v773
        %v1212 = vunpack.c.l.b16 %v774
        %v1213 = vunpack.c.l.b16 %v775
        %v1214 = vunpack.c.l.b16 %v776
        %v1215 = vunpack.c.l.b16 %v777
        %v1216 = vunpack.c.l.b16 %v778
        %v1217 = vunpack.c.l.b16 %v779
        %v1218 = vunpack.c.l.b16 %v780
        %v1219 = vpack.c.b16 %v1172, %v1171
        %v1220 = vpack.c.b16 %v1174, %v1173
        %v1221 = vpack.c.b16 %v1176, %v1175
        %v1222 = vpack.c.b16 %v1178, %v1177
        %v1223 = vpack.c.b16 %v1180, %v1179
        %v1224 = vpack.c.b16 %v1182, %v1181
        %v1225 = vpack.c.b16 %v1184, %v1183
        %v1226 = vpack.c.b16 %v1186, %v1185
        %v1227 = vpack.c.b16 %v1188, %v1187
        %v1228 = vpack.c.b16 %v1190, %v1189
        %v1229 = vpack.c.b16 %v1192, %v1191
        %v1230 = vpack.c.b16 %v1194, %v1193
        %v1231 = vpack.c.b16 %v1196, %v1195
        %v1232 = vpack.c.b16 %v1198, %v1197
        %v1233 = vpack.c.b16 %v1200, %v1199
        %v1234 = vpack.c.b16 %v1202, %v1201
        %v1235 = vpack.c.b16 %v1204, %v1203
        %v1236 = vpack.c.b16 %v1206, %v1205
        %v1237 = vpack.c.b16 %v1208, %v1207
        %v1238 = vpack.c.b16 %v1210, %v1209
        %v1239 = vpack.c.b16 %v1212, %v1211
        %v1240 = vpack.c.b16 %v1214, %v1213
        %v1241 = vpack.c.b16 %v1216, %v1215
        %v1242 = vpack.c.b16 %v1218, %v1217
        %1267 = vmatprep.subr.bf16.mxu0 0
        %1268 = vmatpush1.bf16.msra.mxu0 %v1219
        %1269 = vmatprep.subr.bf16.mxu0 0
        %1270 = vmatpush1.bf16.msra.mxu0 %v1220
        %1271 = vmatprep.subr.bf16.mxu0 0
        %1272 = vmatpush1.bf16.msra.mxu0 %v1221
        %1273 = vmatprep.subr.bf16.mxu0 0
        %1274 = vmatpush1.bf16.msra.mxu0 %v1222
        %1275 = vmatprep.subr.bf16.mxu0 0
        %1276 = vmatpush1.bf16.msra.mxu0 %v1223
        %1277 = vmatprep.subr.bf16.mxu0 0
        %1278 = vmatpush1.bf16.msra.mxu0 %v1224
        %1279 = vmatprep.subr.bf16.mxu0 0
        %1280 = vmatpush1.bf16.msra.mxu0 %v1225
        %1281 = vmatprep.subr.bf16.mxu0 0
        %1282 = vmatpush1.bf16.msra.mxu0 %v1226
        %1283 = vmatprep.subr.bf16.mxu0 0
        %1284 = vmatpush1.bf16.msra.mxu0 %v1227
        %1285 = vmatprep.subr.bf16.mxu0 0
        %1286 = vmatpush1.bf16.msra.mxu0 %v1228
        %1287 = vmatprep.subr.bf16.mxu0 0
        %1288 = vmatpush1.bf16.msra.mxu0 %v1229
        %1289 = vmatprep.subr.bf16.mxu0 0
        %1290 = vmatpush1.bf16.msra.mxu0 %v1230
        %1291 = vmatprep.subr.bf16.mxu0 0
        %1292 = vmatpush1.bf16.msra.mxu0 %v1231
        %1293 = vmatprep.subr.bf16.mxu0 0
        %1294 = vmatpush1.bf16.msra.mxu0 %v1232
        %1295 = vmatprep.subr.bf16.mxu0 0
        %1296 = vmatpush1.bf16.msra.mxu0 %v1233
        %1297 = vmatprep.subr.bf16.mxu0 0
        %1298 = vmatpush1.bf16.msra.mxu0 %v1234
        %1299 = vmatprep.mubr.bf16.mxu0 %v667
        %1300 = vmatmul.mubr.bf16.gmra.mrb[0].mxu0 %v647
        %v1301 = vpop.f32.mrb[0].mxu0
        %v1302 = vadd.f32 %v1093, %v1301
        %v1303 = vpop.f32.mrb[0].mxu0
        %v1304 = vpop.f32.mrb[0].mxu0
        %v1305 = vadd.f32 %v1096, %v1304
        %v1306 = vpop.f32.mrb[0].mxu0
        %1307 = vmatprep.mubr.bf16.mxu0 %v679
        %1308 = vmatmul.mubr.bf16.gmra.mrb[0].mxu0 %v590
        %v1309 = vpop.f32.mrb[0].mxu0
        %v1310 = vadd.f32 %v1101, %v1309
        %v1311 = vpop.f32.mrb[0].mxu0
        %v1312 = vpop.f32.mrb[0].mxu0
        %v1313 = vadd.f32 %v1104, %v1312
        %v1314 = vpop.f32.mrb[0].mxu0
        %1315 = vmatprep.mubr.bf16.mxu0 %v691
        %1316 = vmatmul.mubr.bf16.gmra.mrb[0].mxu0 %v591
        %v1317 = vpop.f32.mrb[0].mxu0
        %v1318 = vadd.f32 %v1109, %v1317
        %v1319 = vpop.f32.mrb[0].mxu0
        %v1320 = vpop.f32.mrb[0].mxu0
        %v1321 = vadd.f32 %v1112, %v1320
        %v1322 = vpop.f32.mrb[0].mxu0
        %1323 = vmatprep.mubr.bf16.mxu0 %v703
        %1324 = vmatmul.mubr.bf16.gmra.mrb[0].mxu0 %v592
        %v1325 = vpop.f32.mrb[0].mxu0
        %v1326 = vadd.f32 %v1117, %v1325
        %v1327 = vpop.f32.mrb[0].mxu0
        %v1328 = vpop.f32.mrb[0].mxu0
        %v1329 = vadd.f32 %v1120, %v1328
        %v1330 = vpop.f32.mrb[0].mxu0
        %1331 = vdwg.mxu0
        %1332 = vmatprep.subr.bf16.mxu0 0
        %1333 = vmatpush1.bf16.msra.mxu0 %v1235
        %1334 = vmatprep.subr.bf16.mxu0 0
        %1335 = vmatpush1.bf16.msra.mxu0 %v1236
        %1336 = vmatprep.subr.bf16.mxu0 0
        %1337 = vmatpush1.bf16.msra.mxu0 %v1237
        %1338 = vmatprep.subr.bf16.mxu0 0
        %1339 = vmatpush1.bf16.msra.mxu0 %v1238
        %1340 = vmatprep.subr.bf16.mxu0 0
        %1341 = vmatpush1.bf16.msra.mxu0 %v1239
        %1342 = vmatprep.subr.bf16.mxu0 0
        %1343 = vmatpush1.bf16.msra.mxu0 %v1240
        %1344 = vmatprep.subr.bf16.mxu0 0
        %1345 = vmatpush1.bf16.msra.mxu0 %v1241
        %1346 = vmatprep.subr.bf16.mxu0 0
        %1347 = vmatpush1.bf16.msra.mxu0 %v1242
        %1348 = vmatprep.subr.bf16.mxu0 0
        %1349 = vmatpush1.bf16.msra.mxu0 0
        %1350 = vmatprep.subr.bf16.mxu0 0
        %1351 = vmatpush1.bf16.msra.mxu0 0
        %1352 = vmatprep.subr.bf16.mxu0 0
        %1353 = vmatpush1.bf16.msra.mxu0 0
        %1354 = vmatprep.subr.bf16.mxu0 0
        %1355 = vmatpush1.bf16.msra.mxu0 0
        %1356 = vmatprep.subr.bf16.mxu0 0
        %1357 = vmatpush1.bf16.msra.mxu0 0
        %1358 = vmatprep.subr.bf16.mxu0 0
        %1359 = vmatpush1.bf16.msra.mxu0 0
        %1360 = vmatprep.subr.bf16.mxu0 0
        %1361 = vmatpush1.bf16.msra.mxu0 0
        %1362 = vmatprep.subr.bf16.mxu0 0
        %1363 = vmatpush1.bf16.msra.mxu0 0
        %1364 = vmatprep.mubr.bf16.mxu0 0
        %1365 = vmatmul.mubr.bf16.gmra.mrb[0].mxu0 %v719
        %v1366 = vpop.f32.mrb[0].mxu0
        %v1367 = vadd.f32 %v1302, %v1366
        %v1368 = vpop.f32.mrb[0].mxu0
        %v1369 = vpop.f32.mrb[0].mxu0
        %v1370 = vadd.f32 %v1305, %v1369
        %v1371 = vpop.f32.mrb[0].mxu0
        %1372 = vmatprep.mubr.bf16.mxu0 0
        %1373 = vmatmul.mubr.bf16.gmra.mrb[0].mxu0 %v722
        %v1374 = vpop.f32.mrb[0].mxu0
        %v1375 = vadd.f32 %v1310, %v1374
        %v1376 = vpop.f32.mrb[0].mxu0
        %v1377 = vpop.f32.mrb[0].mxu0
        %v1378 = vadd.f32 %v1313, %v1377
        %v1379 = vpop.f32.mrb[0].mxu0
        %1380 = vmatprep.mubr.bf16.mxu0 0
        %1381 = vmatmul.mubr.bf16.gmra.mrb[0].mxu0 %v725
        %v1382 = vpop.f32.mrb[0].mxu0
        %v1383 = vadd.f32 %v1318, %v1382
        %v1384 = vpop.f32.mrb[0].mxu0
        %v1385 = vpop.f32.mrb[0].mxu0
        %v1386 = vadd.f32 %v1321, %v1385
        %v1387 = vpop.f32.mrb[0].mxu0
        %1388 = vmatprep.mubr.bf16.mxu0 0
        %1389 = vmatmul.mubr.bf16.gmra.mrb[0].mxu0 %v728
        %v1390 = vpop.f32.mrb[0].mxu0
        %v1391 = vadd.f32 %v1326, %v1390
        %v1392 = vpop.f32.mrb[0].mxu0
        %v1393 = vpop.f32.mrb[0].mxu0
        %v1394 = vadd.f32 %v1329, %v1393
        %v1395 = vpop.f32.mrb[0].mxu0
        %1396 = vdwg.mxu0
        %v1398 = vshrl.u32 %v653, 16
        %v1400 = vshll.u32 %v653, 16
        %v1402 = vrot.slane %v1400, 1
        %v1403 = vor.u32 %v1398, %v1402
        %v1405 = vshll.u32 %v654, 16
        %v1407 = vrot.slane %v1405, 1
        %v1408 = vsel %vm655, %v1403, %v1407
        %v1412 = vrot.slane %v653, 1
        %v1413 = vrot.slane %v654, 1
        %v1414 = vsel %vm716, %v1412, %v1413
        %s1416 = scalar_lea.vmem [#allocation8], 384
        %v1417 = vld [vmem:[%s1416] sm:$0xf]
        %v1418 = vld [vmem:[%s1416 + $0x4] sm:$0xf]
        %v1419 = vld [vmem:[%s1416 + $0x8] sm:$0xf]
        %v1420 = vld [vmem:[%s1416 + $0xc] sm:$0xf]
        %v1421 = vld [vmem:[%s1416 + $0x10] sm:$0xf]
        %v1422 = vld [vmem:[%s1416 + $0x14] sm:$0xf]
        %v1423 = vld [vmem:[%s1416 + $0x18] sm:$0xf]
        %v1424 = vld [vmem:[%s1416 + $0x1c] sm:$0xf]
        %v1425 = vld [vmem:[%s1416 + $0x20] sm:$0xf]
        %v1426 = vld [vmem:[%s1416 + $0x24] sm:$0xf]
        %v1427 = vld [vmem:[%s1416 + $0x28] sm:$0xf]
        %v1428 = vld [vmem:[%s1416 + $0x2c] sm:$0xf]
        %v1429 = vld [vmem:[%s1416 + $0x30] sm:$0xf]
        %v1430 = vld [vmem:[%s1416 + $0x34] sm:$0xf]
        %v1431 = vld [vmem:[%s1416 + $0x38] sm:$0xf]
        %v1432 = vld [vmem:[%s1416 + $0x3c] sm:$0xf]
        %v1433 = vld [vmem:[%s1416 + $0x40] sm:$0xf]
        %v1434 = vld [vmem:[%s1416 + $0x44] sm:$0xf]
        %v1435 = vld [vmem:[%s1416 + $0x48] sm:$0xf]
        %v1436 = vld [vmem:[%s1416 + $0x4c] sm:$0xf]
        %v1437 = vld [vmem:[%s1416 + $0x50] sm:$0xf]
        %v1438 = vld [vmem:[%s1416 + $0x54] sm:$0xf]
        %v1439 = vld [vmem:[%s1416 + $0x58] sm:$0xf]
        %v1440 = vld [vmem:[%s1416 + $0x5c] sm:$0xf]
        %v1441 = vld [vmem:[%s1416 + $0x60] sm:$0xf]
        %v1442 = vld [vmem:[%s1416 + $0x64] sm:$0xf]
        %v1443 = vld [vmem:[%s1416 + $0x68] sm:$0xf]
        %v1444 = vld [vmem:[%s1416 + $0x6c] sm:$0xf]
        %v1445 = vld [vmem:[%s1416 + $0x70] sm:$0xf]
        %v1446 = vld [vmem:[%s1416 + $0x74] sm:$0xf]
        %v1447 = vld [vmem:[%s1416 + $0x78] sm:$0xf]
        %v1448 = vld [vmem:[%s1416 + $0x7c] sm:$0xf]
        %v1449 = vld [vmem:[%s1416 + $0x80] sm:$0xf]
        %v1450 = vld [vmem:[%s1416 + $0x84] sm:$0xf]
        %v1451 = vld [vmem:[%s1416 + $0x88] sm:$0xf]
        %v1452 = vld [vmem:[%s1416 + $0x8c] sm:$0xf]
        %v1453 = vld [vmem:[%s1416 + $0x90] sm:$0xf]
        %v1454 = vld [vmem:[%s1416 + $0x94] sm:$0xf]
        %v1455 = vld [vmem:[%s1416 + $0x98] sm:$0xf]
        %v1456 = vld [vmem:[%s1416 + $0x9c] sm:$0xf]
        %v1457 = vld [vmem:[%s1416 + $0xa0] sm:$0xf]
        %v1458 = vld [vmem:[%s1416 + $0xa4] sm:$0xf]
        %v1459 = vld [vmem:[%s1416 + $0xa8] sm:$0xf]
        %v1460 = vld [vmem:[%s1416 + $0xac] sm:$0xf]
        %v1461 = vld [vmem:[%s1416 + $0xb0] sm:$0xf]
        %v1462 = vld [vmem:[%s1416 + $0xb4] sm:$0xf]
        %v1463 = vld [vmem:[%s1416 + $0xb8] sm:$0xf]
        %v1464 = vld [vmem:[%s1416 + $0xbc] sm:$0xf]
        %v1513 = vunpack.c.l.b16 %v1417
        %v1514 = vunpack.c.l.b16 %v1418
        %v1515 = vunpack.c.l.b16 %v1419
        %v1516 = vunpack.c.l.b16 %v1420
        %v1517 = vunpack.c.l.b16 %v1421
        %v1518 = vunpack.c.l.b16 %v1422
        %v1519 = vunpack.c.l.b16 %v1423
        %v1520 = vunpack.c.l.b16 %v1424
        %v1521 = vunpack.c.l.b16 %v1425
        %v1522 = vunpack.c.l.b16 %v1426
        %v1523 = vunpack.c.l.b16 %v1427
        %v1524 = vunpack.c.l.b16 %v1428
        %v1525 = vunpack.c.l.b16 %v1429
        %v1526 = vunpack.c.l.b16 %v1430
        %v1527 = vunpack.c.l.b16 %v1431
        %v1528 = vunpack.c.l.b16 %v1432
        %v1529 = vunpack.c.l.b16 %v1433
        %v1530 = vunpack.c.l.b16 %v1434
        %v1531 = vunpack.c.l.b16 %v1435
        %v1532 = vunpack.c.l.b16 %v1436
        %v1533 = vunpack.c.l.b16 %v1437
        %v1534 = vunpack.c.l.b16 %v1438
        %v1535 = vunpack.c.l.b16 %v1439
        %v1536 = vunpack.c.l.b16 %v1440
        %v1537 = vunpack.c.l.b16 %v1441
        %v1538 = vunpack.c.l.b16 %v1442
        %v1539 = vunpack.c.l.b16 %v1443
        %v1540 = vunpack.c.l.b16 %v1444
        %v1541 = vunpack.c.l.b16 %v1445
        %v1542 = vunpack.c.l.b16 %v1446
        %v1543 = vunpack.c.l.b16 %v1447
        %v1544 = vunpack.c.l.b16 %v1448
        %v1545 = vunpack.c.l.b16 %v1449
        %v1546 = vunpack.c.l.b16 %v1450
        %v1547 = vunpack.c.l.b16 %v1451
        %v1548 = vunpack.c.l.b16 %v1452
        %v1549 = vunpack.c.l.b16 %v1453
        %v1550 = vunpack.c.l.b16 %v1454
        %v1551 = vunpack.c.l.b16 %v1455
        %v1552 = vunpack.c.l.b16 %v1456
        %v1553 = vunpack.c.l.b16 %v1457
        %v1554 = vunpack.c.l.b16 %v1458
        %v1555 = vunpack.c.l.b16 %v1459
        %v1556 = vunpack.c.l.b16 %v1460
        %v1557 = vunpack.c.l.b16 %v1461
        %v1558 = vunpack.c.l.b16 %v1462
        %v1559 = vunpack.c.l.b16 %v1463
        %v1560 = vunpack.c.l.b16 %v1464
        %v1561 = vpack.c.b16 %v1514, %v1513
        %v1562 = vpack.c.b16 %v1516, %v1515
        %v1563 = vpack.c.b16 %v1518, %v1517
        %v1564 = vpack.c.b16 %v1520, %v1519
        %v1565 = vpack.c.b16 %v1522, %v1521
        %v1566 = vpack.c.b16 %v1524, %v1523
        %v1567 = vpack.c.b16 %v1526, %v1525
        %v1568 = vpack.c.b16 %v1528, %v1527
        %v1569 = vpack.c.b16 %v1530, %v1529
        %v1570 = vpack.c.b16 %v1532, %v1531
        %v1571 = vpack.c.b16 %v1534, %v1533
        %v1572 = vpack.c.b16 %v1536, %v1535
        %v1573 = vpack.c.b16 %v1538, %v1537
        %v1574 = vpack.c.b16 %v1540, %v1539
        %v1575 = vpack.c.b16 %v1542, %v1541
        %v1576 = vpack.c.b16 %v1544, %v1543
        %v1577 = vpack.c.b16 %v1546, %v1545
        %v1578 = vpack.c.b16 %v1548, %v1547
        %v1579 = vpack.c.b16 %v1550, %v1549
        %v1580 = vpack.c.b16 %v1552, %v1551
        %v1581 = vpack.c.b16 %v1554, %v1553
        %v1582 = vpack.c.b16 %v1556, %v1555
        %v1583 = vpack.c.b16 %v1558, %v1557
        %v1584 = vpack.c.b16 %v1560, %v1559
        %1609 = vmatprep.subr.bf16.mxu0 0
        %1610 = vmatpush1.bf16.msra.mxu0 %v1561
        %1611 = vmatprep.subr.bf16.mxu0 0
        %1612 = vmatpush1.bf16.msra.mxu0 %v1562
        %1613 = vmatprep.subr.bf16.mxu0 0
        %1614 = vmatpush1.bf16.msra.mxu0 %v1563
        %1615 = vmatprep.subr.bf16.mxu0 0
        %1616 = vmatpush1.bf16.msra.mxu0 %v1564
        %1617 = vmatprep.subr.bf16.mxu0 0
        %1618 = vmatpush1.bf16.msra.mxu0 %v1565
        %1619 = vmatprep.subr.bf16.mxu0 0
        %1620 = vmatpush1.bf16.msra.mxu0 %v1566
        %1621 = vmatprep.subr.bf16.mxu0 0
        %1622 = vmatpush1.bf16.msra.mxu0 %v1567
        %1623 = vmatprep.subr.bf16.mxu0 0
        %1624 = vmatpush1.bf16.msra.mxu0 %v1568
        %1625 = vmatprep.subr.bf16.mxu0 0
        %1626 = vmatpush1.bf16.msra.mxu0 %v1569
        %1627 = vmatprep.subr.bf16.mxu0 0
        %1628 = vmatpush1.bf16.msra.mxu0 %v1570
        %1629 = vmatprep.subr.bf16.mxu0 0
        %1630 = vmatpush1.bf16.msra.mxu0 %v1571
        %1631 = vmatprep.subr.bf16.mxu0 0
        %1632 = vmatpush1.bf16.msra.mxu0 %v1572
        %1633 = vmatprep.subr.bf16.mxu0 0
        %1634 = vmatpush1.bf16.msra.mxu0 %v1573
        %1635 = vmatprep.subr.bf16.mxu0 0
        %1636 = vmatpush1.bf16.msra.mxu0 %v1574
        %1637 = vmatprep.subr.bf16.mxu0 0
        %1638 = vmatpush1.bf16.msra.mxu0 %v1575
        %1639 = vmatprep.subr.bf16.mxu0 0
        %1640 = vmatpush1.bf16.msra.mxu0 %v1576
        %1641 = vmatprep.mubr.bf16.mxu0 %v691
        %1642 = vmatmul.mubr.bf16.gmra.mrb[0].mxu0 %v591
        %v1643 = vpop.f32.mrb[0].mxu0
        %v1644 = vadd.f32 0.0, %v1643
        %v1645 = vpop.f32.mrb[0].mxu0
        %v1646 = vpop.f32.mrb[0].mxu0
        %v1647 = vadd.f32 0.0, %v1646
        %v1648 = vpop.f32.mrb[0].mxu0
        %1649 = vmatprep.mubr.bf16.mxu0 %v703
        %1650 = vmatmul.mubr.bf16.gmra.mrb[0].mxu0 %v592
        %v1651 = vpop.f32.mrb[0].mxu0
        %v1652 = vadd.f32 0.0, %v1651
        %v1653 = vpop.f32.mrb[0].mxu0
        %v1654 = vpop.f32.mrb[0].mxu0
        %v1655 = vadd.f32 0.0, %v1654
        %v1656 = vpop.f32.mrb[0].mxu0
        %1657 = vmatprep.mubr.bf16.mxu0 %v792
        %1658 = vmatmul.mubr.bf16.gmra.mrb[0].mxu0 %v593
        %v1659 = vpop.f32.mrb[0].mxu0
        %v1660 = vadd.f32 0.0, %v1659
        %v1661 = vpop.f32.mrb[0].mxu0
        %v1662 = vpop.f32.mrb[0].mxu0
        %v1663 = vadd.f32 0.0, %v1662
        %v1664 = vpop.f32.mrb[0].mxu0
        %1665 = vmatprep.mubr.bf16.mxu0 %v1408
        %1666 = vmatmul.mubr.bf16.gmra.mrb[0].mxu0 %v653
        %v1667 = vpop.f32.mrb[0].mxu0
        %v1668 = vadd.f32 0.0, %v1667
        %v1669 = vpop.f32.mrb[0].mxu0
        %v1670 = vpop.f32.mrb[0].mxu0
        %v1671 = vadd.f32 0.0, %v1670
        %v1672 = vpop.f32.mrb[0].mxu0
        %1673 = vdwg.mxu0
        %1674 = vmatprep.subr.bf16.mxu0 0
        %1675 = vmatpush1.bf16.msra.mxu0 %v1577
        %1676 = vmatprep.subr.bf16.mxu0 0
        %1677 = vmatpush1.bf16.msra.mxu0 %v1578
        %1678 = vmatprep.subr.bf16.mxu0 0
        %1679 = vmatpush1.bf16.msra.mxu0 %v1579
        %1680 = vmatprep.subr.bf16.mxu0 0
        %1681 = vmatpush1.bf16.msra.mxu0 %v1580
        %1682 = vmatprep.subr.bf16.mxu0 0
        %1683 = vmatpush1.bf16.msra.mxu0 %v1581
        %1684 = vmatprep.subr.bf16.mxu0 0
        %1685 = vmatpush1.bf16.msra.mxu0 %v1582
        %1686 = vmatprep.subr.bf16.mxu0 0
        %1687 = vmatpush1.bf16.msra.mxu0 %v1583
        %1688 = vmatprep.subr.bf16.mxu0 0
        %1689 = vmatpush1.bf16.msra.mxu0 %v1584
        %1690 = vmatprep.subr.bf16.mxu0 0
        %1691 = vmatpush1.bf16.msra.mxu0 0
        %1692 = vmatprep.subr.bf16.mxu0 0
        %1693 = vmatpush1.bf16.msra.mxu0 0
        %1694 = vmatprep.subr.bf16.mxu0 0
        %1695 = vmatpush1.bf16.msra.mxu0 0
        %1696 = vmatprep.subr.bf16.mxu0 0
        %1697 = vmatpush1.bf16.msra.mxu0 0
        %1698 = vmatprep.subr.bf16.mxu0 0
        %1699 = vmatpush1.bf16.msra.mxu0 0
        %1700 = vmatprep.subr.bf16.mxu0 0
        %1701 = vmatpush1.bf16.msra.mxu0 0
        %1702 = vmatprep.subr.bf16.mxu0 0
        %1703 = vmatpush1.bf16.msra.mxu0 0
        %1704 = vmatprep.subr.bf16.mxu0 0
        %1705 = vmatpush1.bf16.msra.mxu0 0
        %1706 = vmatprep.mubr.bf16.mxu0 0
        %1707 = vmatmul.mubr.bf16.gmra.mrb[0].mxu0 %v725
        %v1708 = vpop.f32.mrb[0].mxu0
        %v1709 = vadd.f32 %v1644, %v1708
        %v1710 = vpop.f32.mrb[0].mxu0
        %v1711 = vpop.f32.mrb[0].mxu0
        %v1712 = vadd.f32 %v1647, %v1711
        %v1713 = vpop.f32.mrb[0].mxu0
        %1714 = vmatprep.mubr.bf16.mxu0 0
        %1715 = vmatmul.mubr.bf16.gmra.mrb[0].mxu0 %v728
        %v1716 = vpop.f32.mrb[0].mxu0
        %v1717 = vadd.f32 %v1652, %v1716
        %v1718 = vpop.f32.mrb[0].mxu0
        %v1719 = vpop.f32.mrb[0].mxu0
        %v1720 = vadd.f32 %v1655, %v1719
        %v1721 = vpop.f32.mrb[0].mxu0
        %1722 = vmatprep.mubr.bf16.mxu0 0
        %1723 = vmatmul.mubr.bf16.gmra.mrb[0].mxu0 %v798
        %v1724 = vpop.f32.mrb[0].mxu0
        %v1725 = vadd.f32 %v1660, %v1724
        %v1726 = vpop.f32.mrb[0].mxu0
        %v1727 = vpop.f32.mrb[0].mxu0
        %v1728 = vadd.f32 %v1663, %v1727
        %v1729 = vpop.f32.mrb[0].mxu0
        %1730 = vmatprep.mubr.bf16.mxu0 0
        %1731 = vmatmul.mubr.bf16.gmra.mrb[0].mxu0 %v1414
        %v1732 = vpop.f32.mrb[0].mxu0
        %v1733 = vadd.f32 %v1668, %v1732
        %v1734 = vpop.f32.mrb[0].mxu0
        %v1735 = vpop.f32.mrb[0].mxu0
        %v1736 = vadd.f32 %v1671, %v1735
        %v1737 = vpop.f32.mrb[0].mxu0
        %1738 = vdwg.mxu0
        %v1739 = vadd.f32 %v1367, %v1709
        %v1740 = vadd.f32 %v1370, %v1712
        %v1741 = vadd.f32 %v1375, %v1717
        %v1742 = vadd.f32 %v1378, %v1720
        %v1743 = vadd.f32 %v1383, %v1725
        %v1744 = vadd.f32 %v1386, %v1728
        %v1745 = vadd.f32 %v1391, %v1733
        %v1746 = vadd.f32 %v1394, %v1736
        %v1747 = vpack.c.bf16 %v1740, %v1739
        %v1748 = vpack.c.bf16 %v1742, %v1741
        %v1749 = vpack.c.bf16 %v1744, %v1743
        %v1750 = vpack.c.bf16 %v1746, %v1745
        %v1755 = vunpack.c.l.b16 %v1747
        %v1756 = vunpack.c.h.b16 %v1747
        %v1757 = vunpack.c.l.b16 %v1748
        %v1758 = vunpack.c.h.b16 %v1748
        %v1759 = vunpack.c.l.b16 %v1749
        %v1760 = vunpack.c.h.b16 %v1749
        %v1761 = vunpack.c.l.b16 %v1750
        %v1762 = vunpack.c.h.b16 %v1750
        %v1763 = vpack.c.b16 %v1755, %v1755
        %v1764 = vpack.c.b16 %v1756, %v1756
        %v1765 = vpack.c.b16 %v1757, %v1757
        %v1766 = vpack.c.b16 %v1758, %v1758
        %v1767 = vpack.c.b16 %v1759, %v1759
        %v1768 = vpack.c.b16 %v1760, %v1760
        %v1769 = vpack.c.b16 %v1761, %v1761
        %v1770 = vpack.c.b16 %v1762, %v1762
        %1779 = vst [vmem:[%s472] sm:$0xf] %v1763
        %1780 = vst [vmem:[%s472 + $0x4] sm:$0xf] %v1764
        %1781 = vst [vmem:[%s472 + $0x8] sm:$0xf] %v1765
        %1782 = vst [vmem:[%s472 + $0xc] sm:$0xf] %v1766
        %1783 = vst [vmem:[%s472 + $0x10] sm:$0xf] %v1767
        %1784 = vst [vmem:[%s472 + $0x14] sm:$0xf] %v1768
        %1785 = vst [vmem:[%s472 + $0x18] sm:$0xf] %v1769
        %1786 = vst [vmem:[%s472 + $0x1c] sm:$0xf] %v1770
        %v1787 = vadd.f32 %v1739, %v1740
        %v1788 = vadd.f32 %v1787, %v1741
        %v1789 = vadd.f32 %v1788, %v1742
        %v1790 = vadd.f32 %v1789, %v1743
        %v1791 = vadd.f32 %v1790, %v1744
        %v1792 = vadd.f32 %v1791, %v1745
        %v1793 = vadd.f32 %v1792, %v1746
        %v1794 = vrot.slane %v1793, 4
        %v1795 = vadd.f32 %v1793, %v1794
        %v1796 = vrot.slane %v1795, 2
        %v1797 = vadd.f32 %v1795, %v1796
        %v1798 = vrot.slane %v1797, 1
        %v1799 = vadd.f32 %v1797, %v1798
        %v1800 = vmul.f32 %v1739, %v1739
        %v1801 = vmul.f32 %v1740, %v1740
        %v1802 = vmul.f32 %v1741, %v1741
        %v1803 = vmul.f32 %v1742, %v1742
        %v1804 = vmul.f32 %v1743, %v1743
        %v1805 = vmul.f32 %v1744, %v1744
        %v1806 = vmul.f32 %v1745, %v1745
        %v1807 = vmul.f32 %v1746, %v1746
        %v1808 = vadd.f32 %v1800, %v1801
        %v1809 = vadd.f32 %v1808, %v1802
        %v1810 = vadd.f32 %v1809, %v1803
        %v1811 = vadd.f32 %v1810, %v1804
        %v1812 = vadd.f32 %v1811, %v1805
        %v1813 = vadd.f32 %v1812, %v1806
        %v1814 = vadd.f32 %v1813, %v1807
        %v1815 = vrot.slane %v1814, 4
        %v1816 = vadd.f32 %v1814, %v1815
        %v1817 = vrot.slane %v1816, 2
        %v1818 = vadd.f32 %v1816, %v1817
        %v1819 = vrot.slane %v1818, 1
        %v1820 = vadd.f32 %v1818, %v1819
        %vm1821 = vcmask 1040384
        %v1822 = vsel %vm1821, %v1799, %v1820
        %vm1823 = vcmask 1041408
        %v1824 = vsel %vm1823, %v1822, 0.0
        %1825 = vst [vmem:[%s479] sm:$0xff] %v1824
        %s1826 = sand.u32 %s218, 1
        %s1827 = scalar_lea.sflag [#allocation4], %s1826
        %s1828 = sand.u32 %s218, 1
        %s1829 = smul.addr %s1828, 32
        %s1830 = scalar_lea.vmem [#allocation13], %s1829
        %s1831 = sand.u32 %s246, 1
        %s1832 = scalar_lea.sflag [#allocation15], %s1831
        %s1833 = sand.u32 %s246, 1
        %s1834 = smul.addr %s1833, 8
        %s1835 = scalar_lea.vmem [#allocation14], %s1834
        // Predicated region
        $region69: #{_lambda_.4} parent=43 // pred_check
          %p1836 = pneg %p228
        $region70: #{_lambda_.4} parent=43 // pred_check_branch
          %1838 = sbr.rel (%p1836) target = $region72
        $region71: #{_lambda_.4} parent=43 // pred_region
          %s1839 = smul.u32 4, %s38
          %s1841 = ssub.s32 512, 512
          %1842 = vsyncadd %s1827, %s1841
          %s1843 = smul.addr %s1839, 2
          %s1844 = smul.addr %s37, 32
          %s1845 = sadd.s32 %s1843, %s1844
          %s1846 = smul.addr %s1845, 64
          %s1847 = scalar_lea.hbm %s6, %s1846
          %s1848 = sshll.u32 %s1830, 4
          %s1849 = int_to_ptr.vmem [resolvable:$true] %s1848
          %1854 = dma.vmem_to_hbm [thread:$0]  %s1849, 512, %s1847, %s1827, 64, 64, 4
        $region72: #{_lambda_.4} parent=43 // pred_fallthru
          _
        // Predicated region
        $region73: #{_lambda_.4} parent=43 // pred_check
          %p1855 = pneg %p256
        $region74: #{_lambda_.4} parent=43 // pred_check_branch
          %1857 = sbr.rel (%p1855) target = $region76
        $region75: #{_lambda_.4} parent=43 // pred_region
          %s1859 = ssub.s32 128, 128
          %1860 = vsyncadd %s1832, %s1859
          %s1861 = smul.addr %s37, 4
          %s1862 = sadd.s32 %s38, %s1861
          %s1863 = smul.addr %s1862, 128
          %s1864 = scalar_lea.hbm %s7, %s1863
          %s1866 = sshll.u32 %s1835, 4
          %s1867 = int_to_ptr.vmem [resolvable:$true] %s1866
          %1869 = dma.vmem_to_hbm [thread:$0]  %s1867, 128, %s1864, %s1832
        $region76: #{_lambda_.4} parent=43 // pred_fallthru
          _
      $region44: #{_lambda_.4} parent=5 // pred_fallthru
        _
      %p1870 = scmp.le.s32.totalorder 2, %s28
      // Predicated region
      $region77: #{_lambda_.4} parent=5 // pred_check
        %p1871 = pneg %p1870
      $region78: #{_lambda_.4} parent=5 // pred_check_branch
        %1873 = sbr.rel (%p1871) target = $region80
      $region79: #{_lambda_.4} parent=5 // pred_region
        %s1874 = ssub.s32 %s28, 2
        // Predicated region
        $region81: #{_lambda_.4} parent=79 // pred_check
          %p1875 = pneg %p234
        $region82: #{_lambda_.4} parent=79 // pred_check_branch
          %1877 = sbr.rel (%p1875) target = $region84
        $region83: #{_lambda_.4} parent=79 // pred_region
          %s1878 = sand.u32 %s219, 1
          %s1879 = scalar_lea.sflag [#allocation4], %s1878
          %s1880 = sand.u32 %s219, 1
          %s1881 = smul.addr %s1880, 32
          %s1882 = scalar_lea.vmem [#allocation13], %s1881
          %1883 = dma.done %s1879, 512
        $region84: #{_lambda_.4} parent=79 // pred_fallthru
          _
        // Predicated region
        $region85: #{_lambda_.4} parent=79 // pred_check
          %p1884 = pneg %p262
        $region86: #{_lambda_.4} parent=79 // pred_check_branch
          %1886 = sbr.rel (%p1884) target = $region88
        $region87: #{_lambda_.4} parent=79 // pred_region
          %s1887 = sand.u32 %s247, 1
          %s1888 = scalar_lea.sflag [#allocation15], %s1887
          %s1889 = sand.u32 %s247, 1
          %s1890 = smul.addr %s1889, 8
          %s1891 = scalar_lea.vmem [#allocation14], %s1890
          %1892 = dma.done %s1888, 128
        $region88: #{_lambda_.4} parent=79 // pred_fallthru
          _
      $region80: #{_lambda_.4} parent=5 // pred_fallthru
        _
    $region6: #{_lambda_.4} parent=1 // loop_footer
      %s32 = sadd.s32 1, %s28
    $region7: #{_lambda_.4} parent=1 // loop_footer_branch
      %27 = sbr.rel target = $region3
    $region8: #{_lambda_.4} parent=1 // loop_exit
      _
    %1893 = vsyncpa [#allocation3], 1
    %s1894 = scalar_lea.sflag [#allocation3], 1
    %1895 = vsyncpa %s1894, 1
    %1896 = vsyncpa [#allocation6], 1
    %s1897 = scalar_lea.sflag [#allocation6], 1
    %1898 = vsyncpa %s1897, 1
    %1899 = vsyncpa [#allocation9], 1
    %1900 = vsyncpa [#allocation12], 1
    %1901 = vsyncpa [#allocation4], 1
    %s1902 = scalar_lea.sflag [#allocation4], 1
    %1903 = vsyncpa %s1902, 1
    %1904 = vsyncpa [#allocation15], 1
    %s1905 = scalar_lea.sflag [#allocation15], 1
    %1906 = vsyncpa %s1905, 1

</llo_original>
